<compile_context>
chip_gen: v7x
topology: tpu7x:2x2x1
jax: 0.10.0
libtpu: 0.0.40
codegen_flags: <defaults>
</compile_context>

<pallas_src>
import functools

import jax
import jax.numpy as jnp
import numpy as np
from jax.experimental import pallas as pl
from jax.experimental.pallas import tpu as pltpu


# Combo table in the module's output order:
#   q source:  p=0, c=1, f=2 ; kv source: p=0, c=1, f=2, p_dil=3, f_dil=4
_COMBOS = ((0, 0), (1, 1), (2, 2), (1, 0), (1, 2), (0, 1), (2, 1), (1, 3), (1, 4))
# Execution order chosen so consecutive grid steps reuse the same Q or K/V block.
_EXEC_ORDER = (0, 3, 1, 5, 6, 2, 4, 7, 8)


# ----------------------------------------------------------------------------
# Fused Pallas kernel: NB spatial sub-blocks of attention + W01 + LN/MLP/LN
# ----------------------------------------------------------------------------
def _fused_kernel(qsel_ref, kvsel_ref,                 # scalar prefetch (index_maps only)
                  q_ref, kv_ref, xr_ref,
                  w01_ref, gamma_ref, beta_ref,
                  w1_ref, b1_ref, w2_ref, b2_ref,
                  o_ref, wv_scr,
                  *, heads, eps, q_chunk, nb_per_step):
    del qsel_ref, kvsel_ref
    NB, C, TB = q_ref.shape       # q block: (NB, C, tb) bf16, channel-major
    D = C // heads
    n_chunks = TB // q_chunk

    w01 = w01_ref[...]            # (H, C, D) f32   (W_01 pre-split per head)
    gamma = gamma_ref[...]        # (C, 1)
    beta = beta_ref[...]          # (C, 1)
    w1 = w1_ref[...]              # (2C, C)
    b1 = b1_ref[...]              # (2C, 1)
    w2 = w2_ref[...]              # (C, 2C)
    b2 = b2_ref[...]              # (C, 1)

    def layernorm(x):             # x: (C, T); normalize over channels (axis 0)
        mu = jnp.mean(x, axis=0, keepdims=True)
        xm = x - mu
        var = jnp.mean(xm * xm, axis=0, keepdims=True)
        return xm * jax.lax.rsqrt(var + eps) * gamma + beta

    # Constant "ones" row of the augmented WV: written once per grid step, makes
    # the projection matmul also return the softmax row sums (lane oriented).
    ones_bf = jnp.ones((1, TB), jnp.bfloat16)
    for h in range(heads):
        wv_scr[h, C:C + 1, :] = ones_bf

    @pl.loop(0, nb_per_step)
    def _(nb):
        q_cs = q_ref[nb]          # (C, TB)  bf16, Q pre-scaled by D^-0.5
        kv_cs = kv_ref[nb]        # (2C, TB) bf16, rows [0:C]=K, [C:2C]=V
        xres = xr_ref[nb]         # (C, TB)  f32

        # WV_h = W01_h @ V_h once per sub-block (cheap K=8 matmul), kept in VMEM.
        for h in range(heads):
            v_h = kv_cs[C + h * D:C + (h + 1) * D, :].astype(jnp.float32)   # (D, TB)
            wv = jnp.dot(w01[h], v_h, preferred_element_type=jnp.float32)   # (C, TB)
            wv_scr[h, :C, :] = wv.astype(jnp.bfloat16)

        out_chunks = []
        for c in range(n_chunks):
            lo = c * q_chunk
            proj = jnp.zeros((C, q_chunk), jnp.float32)
            for h in range(heads):
                q_h = q_cs[h * D:(h + 1) * D, lo:lo + q_chunk]              # (D, Tq)
                k_h = kv_cs[h * D:(h + 1) * D, :]                           # (D, TB)
                # scores: contract head dim D -> (Tq, TB), f32 accumulation on MXU
                s = jax.lax.dot_general(q_h, k_h, (((0,), (0,)), ((), ())),
                                        preferred_element_type=jnp.float32)
                p = jnp.exp(s - jnp.max(s, axis=-1, keepdims=True)).astype(jnp.bfloat16)
                # deep-K projection matmul; last output row = softmax row sums
                wv_aug = wv_scr[h]                                          # (C+1, TB)
                ct = jax.lax.dot_general(wv_aug, p, (((1,), (1,)), ((), ())),
                                         preferred_element_type=jnp.float32)  # (C+1, Tq)
                r = pl.reciprocal(ct[C:C + 1, :], approx=True)              # (1, Tq)
                # per-head normalization BEFORE summing into proj (denominators differ)
                proj = proj + ct[:C, :] * r

            y = proj + xres[:, lo:lo + q_chunk]                             # (C, Tq)
            ln1 = layernorm(y)
            hmid = jnp.maximum(
                jnp.dot(w1, ln1, preferred_element_type=jnp.float32) + b1, 0.0)
            h2 = jnp.dot(w2, hmid, preferred_element_type=jnp.float32) + b2
            out_chunks.append(layernorm(h2 + y))

        o_ref[nb] = (out_chunks[0] if n_chunks == 1
                     else jnp.concatenate(out_chunks, axis=-1))


# ----------------------------------------------------------------------------
# Forward wrapper (QKV projection straight into the kernel layout + 1 pallas_call)
# ----------------------------------------------------------------------------
def self_cross_attention_forward(params, xp, xc, xf, xp_dil, xf_dil,
                                 height, width, *, heads, size=16, block_batch=8):
    B, L, C = xp.shape
    D = C // heads
    tb = size * size
    nb_blocks = height * width
    assert L == nb_blocks * tb
    N = B * nb_blocks
    scale = float(D) ** -0.5
    # TODO(synk): if size ever changes so tb % 128 != 0, chunk queries differently.
    q_chunk = 128 if tb % 128 == 0 else tb

    # Spatial sub-blocks per grid step: largest divisor of N that is <= block_batch.
    nb_per_step = 1
    for cand in range(min(block_batch, N), 0, -1):
        if N % cand == 0:
            nb_per_step = cand
            break
    NG = N // nb_per_step

    # to_qvk weight, output features laid out as (d, k, h) per the module rearrange.
    # Fold the D^-0.5 softmax scale into the Q slice so the kernel never scales scores.
    w4 = params["w_qvk"].reshape(D, 3, heads, C)
    w4 = w4.at[:, 0].multiply(scale)

    def project(x, w):
        # One einsum straight into the kernel-friendly channel-stacked layout
        # (k, N, H*D, tb) — head-major / dim-minor rows, tokens on lanes.
        x4 = x.reshape(B, nb_blocks, tb, C)
        out = jnp.einsum("bntc,dkhc->kbnhdt", x4, w)
        return out.reshape(out.shape[0], N, heads * D, tb).astype(jnp.bfloat16)

    def resid_cm(x):
        # residual in channel-major (C, tb) per block
        return jnp.transpose(x.reshape(B, nb_blocks, tb, C), (0, 1, 3, 2)).reshape(N, C, tb)

    qp, kp, vp = project(xp, w4)
    qc, kc, vc = project(xc, w4)
    qf, kf, vf = project(xf, w4)
    kpd, vpd = project(xp_dil, w4[:, 1:])    # dilated inputs only need K/V (unscaled)
    kfd, vfd = project(xf_dil, w4[:, 1:])

    q_stack = jnp.stack([qp, qc, qf])                                   # (3, N, C, tb)
    kv_stack = jnp.stack([jnp.concatenate([kp, vp], axis=1),            # (5, N, 2C, tb)
                          jnp.concatenate([kc, vc], axis=1),
                          jnp.concatenate([kf, vf], axis=1),
                          jnp.concatenate([kpd, vpd], axis=1),
                          jnp.concatenate([kfd, vfd], axis=1)])
    r_stack = jnp.stack([resid_cm(xp), resid_cm(xc), resid_cm(xf)])     # (3, N, C, tb)

    # scalar-prefetched combo tables (in execution order)
    q_sel = jnp.array([_COMBOS[c][0] for c in _EXEC_ORDER], dtype=jnp.int32)
    kv_sel = jnp.array([_COMBOS[c][1] for c in _EXEC_ORDER], dtype=jnp.int32)

    # Weights in channel-major orientation (out = W @ x_cm -> no in-kernel transposes).
    w01s = jnp.transpose(params["w_01"].reshape(C, heads, D), (1, 0, 2))  # (H, C, D)
    gamma = params["gamma"].reshape(C, 1)
    beta = params["beta"].reshape(C, 1)
    w1 = params["w1"]                       # (2C, C)
    b1 = params["b1"].reshape(2 * C, 1)
    w2 = params["w2"]                       # (C, 2C)
    b2 = params["b2"].reshape(C, 1)

    kernel = functools.partial(_fused_kernel, heads=heads, eps=1e-5,
                               q_chunk=q_chunk, nb_per_step=nb_per_step)

    grid_spec = pltpu.PrefetchScalarGridSpec(
        num_scalar_prefetch=2,
        grid=(NG, 9),      # block-group outer, combo inner (maximizes K/V DMA reuse)
        in_specs=[
            pl.BlockSpec((None, nb_per_step, C, tb),
                         lambda gi, ci, qs, ks: (qs[ci], gi, 0, 0)),        # Q stack
            pl.BlockSpec((None, nb_per_step, 2 * C, tb),
                         lambda gi, ci, qs, ks: (ks[ci], gi, 0, 0)),        # merged K/V
            pl.BlockSpec((None, nb_per_step, C, tb),
                         lambda gi, ci, qs, ks: (qs[ci], gi, 0, 0)),        # residual
            pl.BlockSpec((heads, C, D), lambda gi, ci, qs, ks: (0, 0, 0)),  # W_01 split
            pl.BlockSpec((C, 1),        lambda gi, ci, qs, ks: (0, 0)),     # gamma
            pl.BlockSpec((C, 1),        lambda gi, ci, qs, ks: (0, 0)),     # beta
            pl.BlockSpec((2 * C, C),    lambda gi, ci, qs, ks: (0, 0)),     # W1
            pl.BlockSpec((2 * C, 1),    lambda gi, ci, qs, ks: (0, 0)),     # b1
            pl.BlockSpec((C, 2 * C),    lambda gi, ci, qs, ks: (0, 0)),     # W2
            pl.BlockSpec((C, 1),        lambda gi, ci, qs, ks: (0, 0)),     # b2
        ],
        out_specs=pl.BlockSpec((None, nb_per_step, C, tb),
                               lambda gi, ci, qs, ks: (ci, gi, 0, 0)),
        scratch_shapes=[pltpu.VMEM((heads, C + 1, tb), jnp.bfloat16)],      # WV_aug
    )

    out = pl.pallas_call(
        kernel,
        grid_spec=grid_spec,
        out_shape=jax.ShapeDtypeStruct((9, N, C, tb), jnp.float32),
        compiler_params=pltpu.CompilerParams(
            dimension_semantics=("parallel", "arbitrary")),
    )(q_sel, kv_sel, q_stack, kv_stack, r_stack,
      w01s, gamma, beta, w1, b1, w2, b2)

    # lane-dense (C, tb) kernel output -> module layout (B, nb, tb, C), original order
    out = jnp.transpose(out.reshape(9, B, nb_blocks, C, tb), (0, 1, 2, 4, 3))
    pos = {combo: i for i, combo in enumerate(_EXEC_ORDER)}
    return tuple(out[pos[j]] for j in range(9))


# ----------------------------------------------------------------------------
# Pure-JAX reference (mirrors the PyTorch forward) for correctness checking
# ----------------------------------------------------------------------------
def reference_forward(params, xp, xc, xf, xp_dil, xf_dil, height, width, *, heads, size=16):
    B, L, C = xp.shape
    dim_head = C // heads
    tb = size * size
    nb = height * width
    scale = dim_head ** -0.5
    eps = 1e-5

    def project_qkv(x):
        qkv = jnp.einsum("blc,oc->blo", x, params["w_qvk"])
        qkv = qkv.reshape(B, nb, tb, dim_head, 3, heads)
        qkv = jnp.transpose(qkv, (4, 0, 5, 1, 2, 3))  # (3, B, H, nb, tb, d)
        return qkv[0], qkv[1], qkv[2]

    def resid(x):
        return x.reshape(B, nb, tb, C)

    def ln(x):
        mu = jnp.mean(x, axis=-1, keepdims=True)
        var = jnp.mean((x - mu) ** 2, axis=-1, keepdims=True)
        return (x - mu) * jax.lax.rsqrt(var + eps) * params["gamma"] + params["beta"]

    def attn(q, k, v, xres):
        s = jnp.einsum("bhnid,bhnjd->bhnij", q, k) * scale
        p = jax.nn.softmax(s, axis=-1)
        o = jnp.einsum("bhnij,bhnjd->bhnid", p, v)           # (B, H, nb, tb, d)
        o = jnp.transpose(o, (0, 2, 3, 1, 4)).reshape(B, nb, tb, C)
        y = jnp.einsum("bntc,oc->bnto", o, params["w_01"]) + xres
        h = jax.nn.relu(jnp.einsum("bntc,oc->bnto", ln(y), params["w1"]) + params["b1"])
        h2 = jnp.einsum("bntc,oc->bnto", h, params["w2"]) + params["b2"]
        return ln(h2 + y)

    qp, kp, vp = project_qkv(xp)
    qc, kc, vc = project_qkv(xc)
    qf, kf, vf = project_qkv(xf)
    _, kpd, vpd = project_qkv(xp_dil)
    _, kfd, vfd = project_qkv(xf_dil)
    rp, rc, rf = resid(xp), resid(xc), resid(xf)

    return (
        attn(qp, kp, vp, rp), attn(qc, kc, vc, rc), attn(qf, kf, vf, rf),
        attn(qc, kp, vp, rc), attn(qc, kf, vf, rc), attn(qp, kc, vc, rp),
        attn(qf, kc, vc, rf), attn(qc, kpd, vpd, rc), attn(qc, kfd, vfd, rc),
    )


# ----------------------------------------------------------------------------
# Deterministic parameter init + smoke test
# ----------------------------------------------------------------------------
def init_params(key, dim):
    ks = jax.random.split(key, 8)
    n = lambda k, s: (0.05 * jax.random.normal(k, s)).astype(jnp.float32)
    return {
        "w_qvk": n(ks[0], (3 * dim, dim)),        # nn.Linear(dim, 3*dim, bias=False).weight
        "w_01": n(ks[1], (dim, dim)),             # nn.Linear(dim, dim, bias=False).weight
        "gamma": (1.0 + 0.05 * jax.random.normal(ks[2], (dim,))).astype(jnp.float32),
        "beta": n(ks[3], (dim,)),                 # LayerNorm affine
        "w1": n(ks[4], (2 * dim, dim)),           # linear1[0].weight
        "b1": n(ks[5], (2 * dim,)),               # linear1[0].bias
        "w2": n(ks[6], (dim, 2 * dim)),           # linear1[2].weight
        "b2": n(ks[7], (dim,)),                   # linear1[2].bias
    }


if __name__ == "__main__":
    # Small, module-consistent shapes: size=16 fixed by the module -> tb=256 tokens/block
    B, dim, heads = 2, 32, 4
    h_blocks, w_blocks, size = 1, 2, 16
    L = h_blocks * w_blocks * size * size  # 512

    key = jax.random.PRNGKey(0)
    kparam, kx = jax.random.split(key)
    params = init_params(kparam, dim)

    kxs = jax.random.split(kx, 5)
    mk = lambda k: jax.random.normal(k, (B, L, dim), dtype=jnp.float32)
    xp, xc, xf, xp_dil, xf_dil = (mk(k) for k in kxs)

    fwd = jax.jit(functools.partial(self_cross_attention_forward, heads=heads, size=size),
                  static_argnums=(6, 7))
    outs = fwd(params, xp, xc, xf, xp_dil, xf_dil, h_blocks, w_blocks)
    outs = jax.block_until_ready(outs)

    refs = reference_forward(params, xp, xc, xf, xp_dil, xf_dil,
                             h_blocks, w_blocks, heads=heads, size=size)
    refs = jax.block_until_ready(refs)

    # bf16 MXU operands + approx reciprocal in the kernel -> compare with a
    # correspondingly relaxed tolerance vs the all-f32 reference.
    for o, r in zip(outs, refs):
        assert o.shape == (B, h_blocks * w_blocks, size * size, dim)
        np.testing.assert_allclose(np.asarray(o), np.asarray(r), rtol=2e-2, atol=2e-2)

    print("KERNEL_OK")
</pallas_src>

<mosaic_0001>
module attributes {stable_mosaic.version = 11 : i64} {
  func.func @_fused_kernel(%arg0: i32, %arg1: i32, %arg2: memref<9xi32, #tpu.memory_space<smem>>, %arg3: memref<9xi32, #tpu.memory_space<smem>>, %arg4: memref<1x4x32x256xbf16, #tpu.memory_space<vmem>>, %arg5: memref<1x4x64x256xbf16, #tpu.memory_space<vmem>>, %arg6: memref<1x4x32x256xf32, #tpu.memory_space<vmem>>, %arg7: memref<4x32x8xf32, #tpu.memory_space<vmem>>, %arg8: memref<32x1xf32, #tpu.memory_space<vmem>>, %arg9: memref<32x1xf32, #tpu.memory_space<vmem>>, %arg10: memref<64x32xf32, #tpu.memory_space<vmem>>, %arg11: memref<64x1xf32, #tpu.memory_space<vmem>>, %arg12: memref<32x64xf32, #tpu.memory_space<vmem>>, %arg13: memref<32x1xf32, #tpu.memory_space<vmem>>, %arg14: memref<1x4x32x256xf32, #tpu.memory_space<vmem>>, %arg15: memref<4x33x256xbf16, #tpu.memory_space<vmem>>) attributes {dimension_semantics = [#tpu.dimension_semantics<parallel>, #tpu.dimension_semantics<arbitrary>], iteration_bounds = array<i64: 1, 9>, scalar_prefetch = 2 : i64, scratch_operands = 1 : i64, tpu.core_type = #tpu.core_type<tc>, window_params = [{transform_indices = @transform_0, window_bounds = array<i64: 1, 4, 32, 256>}, {transform_indices = @transform_1, window_bounds = array<i64: 1, 4, 64, 256>}, {transform_indices = @transform_2, window_bounds = array<i64: 1, 4, 32, 256>}, {pipeline_mode = #tpu.pipeline_mode<synchronous>, transform_indices = @transform_3, window_bounds = array<i64: 4, 32, 8>}, {pipeline_mode = #tpu.pipeline_mode<synchronous>, transform_indices = @transform_4, window_bounds = array<i64: 32, 1>}, {pipeline_mode = #tpu.pipeline_mode<synchronous>, transform_indices = @transform_5, window_bounds = array<i64: 32, 1>}, {pipeline_mode = #tpu.pipeline_mode<synchronous>, transform_indices = @transform_6, window_bounds = array<i64: 64, 32>}, {pipeline_mode = #tpu.pipeline_mode<synchronous>, transform_indices = @transform_7, window_bounds = array<i64: 64, 1>}, {pipeline_mode = #tpu.pipeline_mode<synchronous>, transform_indices = @transform_8, window_bounds = array<i64: 32, 64>}, {pipeline_mode = #tpu.pipeline_mode<synchronous>, transform_indices = @transform_9, window_bounds = array<i64: 32, 1>}, {transform_indices = @transform_10, window_bounds = array<i64: 1, 4, 32, 256>}]} {
    %c0 = arith.constant 0 : index
    %c0_0 = arith.constant 0 : index
    %c0_1 = arith.constant 0 : index
    %0 = vector.load %arg7[%c0, %c0_0, %c0_1] : memref<4x32x8xf32, #tpu.memory_space<vmem>>, vector<4x32x8xf32>
    %c0_2 = arith.constant 0 : index
    %c0_3 = arith.constant 0 : index
    %1 = vector.load %arg8[%c0_2, %c0_3] : memref<32x1xf32, #tpu.memory_space<vmem>>, vector<32x1xf32>
    %c0_4 = arith.constant 0 : index
    %c0_5 = arith.constant 0 : index
    %2 = vector.load %arg9[%c0_4, %c0_5] : memref<32x1xf32, #tpu.memory_space<vmem>>, vector<32x1xf32>
    %c0_6 = arith.constant 0 : index
    %c0_7 = arith.constant 0 : index
    %3 = vector.load %arg10[%c0_6, %c0_7] : memref<64x32xf32, #tpu.memory_space<vmem>>, vector<64x32xf32>
    %c0_8 = arith.constant 0 : index
    %c0_9 = arith.constant 0 : index
    %4 = vector.load %arg11[%c0_8, %c0_9] : memref<64x1xf32, #tpu.memory_space<vmem>>, vector<64x1xf32>
    %c0_10 = arith.constant 0 : index
    %c0_11 = arith.constant 0 : index
    %5 = vector.load %arg12[%c0_10, %c0_11] : memref<32x64xf32, #tpu.memory_space<vmem>>, vector<32x64xf32>
    %c0_12 = arith.constant 0 : index
    %c0_13 = arith.constant 0 : index
    %6 = vector.load %arg13[%c0_12, %c0_13] : memref<32x1xf32, #tpu.memory_space<vmem>>, vector<32x1xf32>
    %cst = arith.constant 1.000000e+00 : bf16
    %7 = vector.broadcast %cst : bf16 to vector<1x256xbf16>
    %c0_14 = arith.constant 0 : index
    %c32 = arith.constant 32 : index
    %c0_15 = arith.constant 0 : index
    %8 = vector.load %arg15[%c0_14, %c32, %c0_15] : memref<4x33x256xbf16, #tpu.memory_space<vmem>>, vector<1x1x256xbf16>
    %9 = vector.shape_cast %8 : vector<1x1x256xbf16> to vector<1x256xbf16>
    %10 = vector.shape_cast %7 : vector<1x256xbf16> to vector<1x1x256xbf16>
    tpu.vector_store %arg15[%c0_14, %c32, %c0_15], %10 {strides = array<i32>} : memref<4x33x256xbf16, #tpu.memory_space<vmem>>, vector<1x1x256xbf16>,
    %c1 = arith.constant 1 : index
    %c32_16 = arith.constant 32 : index
    %c0_17 = arith.constant 0 : index
    %11 = vector.load %arg15[%c1, %c32_16, %c0_17] : memref<4x33x256xbf16, #tpu.memory_space<vmem>>, vector<1x1x256xbf16>
    %12 = vector.shape_cast %11 : vector<1x1x256xbf16> to vector<1x256xbf16>
    %13 = vector.shape_cast %7 : vector<1x256xbf16> to vector<1x1x256xbf16>
    tpu.vector_store %arg15[%c1, %c32_16, %c0_17], %13 {strides = array<i32>} : memref<4x33x256xbf16, #tpu.memory_space<vmem>>, vector<1x1x256xbf16>,
    %c2 = arith.constant 2 : index
    %c32_18 = arith.constant 32 : index
    %c0_19 = arith.constant 0 : index
    %14 = vector.load %arg15[%c2, %c32_18, %c0_19] : memref<4x33x256xbf16, #tpu.memory_space<vmem>>, vector<1x1x256xbf16>
    %15 = vector.shape_cast %14 : vector<1x1x256xbf16> to vector<1x256xbf16>
    %16 = vector.shape_cast %7 : vector<1x256xbf16> to vector<1x1x256xbf16>
    tpu.vector_store %arg15[%c2, %c32_18, %c0_19], %16 {strides = array<i32>} : memref<4x33x256xbf16, #tpu.memory_space<vmem>>, vector<1x1x256xbf16>,
    %c3 = arith.constant 3 : index
    %c32_20 = arith.constant 32 : index
    %c0_21 = arith.constant 0 : index
    %17 = vector.load %arg15[%c3, %c32_20, %c0_21] : memref<4x33x256xbf16, #tpu.memory_space<vmem>>, vector<1x1x256xbf16>
    %18 = vector.shape_cast %17 : vector<1x1x256xbf16> to vector<1x256xbf16>
    %19 = vector.shape_cast %7 : vector<1x256xbf16> to vector<1x1x256xbf16>
    tpu.vector_store %arg15[%c3, %c32_20, %c0_21], %19 {strides = array<i32>} : memref<4x33x256xbf16, #tpu.memory_space<vmem>>, vector<1x1x256xbf16>,
    %c0_i32 = arith.constant 0 : i32
    %c4_i32 = arith.constant 4 : i32
    %20 = arith.addi %c0_i32, %c4_i32 : i32
    %c1_i32 = arith.constant 1 : i32
    scf.for %arg16 = %c0_i32 to %20 step %c1_i32  : i32 {
      %c1_i32_23 = arith.constant 1 : i32
      %21 = arith.muli %arg16, %c1_i32_23 : i32
      %c0_i32_24 = arith.constant 0 : i32
      %22 = arith.addi %c0_i32_24, %21 : i32
      %c0_25 = arith.constant 0 : index
      %23 = arith.index_cast %22 : i32 to index
      %c0_26 = arith.constant 0 : index
      %c0_27 = arith.constant 0 : index
      %24 = vector.load %arg4[%c0_25, %23, %c0_26, %c0_27] : memref<1x4x32x256xbf16, #tpu.memory_space<vmem>>, vector<1x1x32x256xbf16>
      %25 = vector.shape_cast %24 : vector<1x1x32x256xbf16> to vector<32x256xbf16>
      %c0_28 = arith.constant 0 : index
      %26 = arith.index_cast %22 : i32 to index
      %c0_29 = arith.constant 0 : index
      %c0_30 = arith.constant 0 : index
      %27 = vector.load %arg5[%c0_28, %26, %c0_29, %c0_30] : memref<1x4x64x256xbf16, #tpu.memory_space<vmem>>, vector<1x1x64x256xbf16>
      %28 = vector.shape_cast %27 : vector<1x1x64x256xbf16> to vector<64x256xbf16>
      %c0_31 = arith.constant 0 : index
      %29 = arith.index_cast %22 : i32 to index
      %c0_32 = arith.constant 0 : index
      %c0_33 = arith.constant 0 : index
      %30 = vector.load %arg6[%c0_31, %29, %c0_32, %c0_33] : memref<1x4x32x256xf32, #tpu.memory_space<vmem>>, vector<1x1x32x256xf32>
      %31 = vector.shape_cast %30 : vector<1x1x32x256xf32> to vector<32x256xf32>
      %32 = vector.extract_strided_slice %28 {offsets = [32, 0], sizes = [8, 256], strides = [1, 1]} : vector<64x256xbf16> to vector<8x256xbf16>
      %33 = arith.extf %32 : vector<8x256xbf16> to vector<8x256xf32>
      %34 = vector.extract_strided_slice %0 {offsets = [0, 0, 0], sizes = [1, 32, 8], strides = [1, 1, 1]} : vector<4x32x8xf32> to vector<1x32x8xf32>
      %35 = vector.shape_cast %34 : vector<1x32x8xf32> to vector<32x8xf32>
      %cst_34 = arith.constant dense<0.000000e+00> : vector<32x256xf32>
      %36 = tpu.matmul %35, %33, %cst_34 {dimension_numbers = #tpu.dot_dimension_numbers<[1], [0], [0], [1], [0, 0, 1, 1], [], []>} : vector<32x8xf32>, vector<8x256xf32>, vector<32x256xf32> -> vector<32x256xf32>
      %37 = arith.truncf %36 : vector<32x256xf32> to vector<32x256xbf16>
      %c0_35 = arith.constant 0 : index
      %c0_36 = arith.constant 0 : index
      %c0_37 = arith.constant 0 : index
      %38 = vector.load %arg15[%c0_35, %c0_36, %c0_37] : memref<4x33x256xbf16, #tpu.memory_space<vmem>>, vector<1x32x256xbf16>
      %39 = vector.shape_cast %38 : vector<1x32x256xbf16> to vector<32x256xbf16>
      %40 = vector.shape_cast %37 : vector<32x256xbf16> to vector<1x32x256xbf16>
      tpu.vector_store %arg15[%c0_35, %c0_36, %c0_37], %40 {strides = array<i32>} : memref<4x33x256xbf16, #tpu.memory_space<vmem>>, vector<1x32x256xbf16>,
      %41 = vector.extract_strided_slice %28 {offsets = [40, 0], sizes = [8, 256], strides = [1, 1]} : vector<64x256xbf16> to vector<8x256xbf16>
      %42 = arith.extf %41 : vector<8x256xbf16> to vector<8x256xf32>
      %43 = vector.extract_strided_slice %0 {offsets = [1, 0, 0], sizes = [1, 32, 8], strides = [1, 1, 1]} : vector<4x32x8xf32> to vector<1x32x8xf32>
      %44 = vector.shape_cast %43 : vector<1x32x8xf32> to vector<32x8xf32>
      %cst_38 = arith.constant dense<0.000000e+00> : vector<32x256xf32>
      %45 = tpu.matmul %44, %42, %cst_38 {dimension_numbers = #tpu.dot_dimension_numbers<[1], [0], [0], [1], [0, 0, 1, 1], [], []>} : vector<32x8xf32>, vector<8x256xf32>, vector<32x256xf32> -> vector<32x256xf32>
      %46 = arith.truncf %45 : vector<32x256xf32> to vector<32x256xbf16>
      %c1_39 = arith.constant 1 : index
      %c0_40 = arith.constant 0 : index
      %c0_41 = arith.constant 0 : index
      %47 = vector.load %arg15[%c1_39, %c0_40, %c0_41] : memref<4x33x256xbf16, #tpu.memory_space<vmem>>, vector<1x32x256xbf16>
      %48 = vector.shape_cast %47 : vector<1x32x256xbf16> to vector<32x256xbf16>
      %49 = vector.shape_cast %46 : vector<32x256xbf16> to vector<1x32x256xbf16>
      tpu.vector_store %arg15[%c1_39, %c0_40, %c0_41], %49 {strides = array<i32>} : memref<4x33x256xbf16, #tpu.memory_space<vmem>>, vector<1x32x256xbf16>,
      %50 = vector.extract_strided_slice %28 {offsets = [48, 0], sizes = [8, 256], strides = [1, 1]} : vector<64x256xbf16> to vector<8x256xbf16>
      %51 = arith.extf %50 : vector<8x256xbf16> to vector<8x256xf32>
      %52 = vector.extract_strided_slice %0 {offsets = [2, 0, 0], sizes = [1, 32, 8], strides = [1, 1, 1]} : vector<4x32x8xf32> to vector<1x32x8xf32>
      %53 = vector.shape_cast %52 : vector<1x32x8xf32> to vector<32x8xf32>
      %cst_42 = arith.constant dense<0.000000e+00> : vector<32x256xf32>
      %54 = tpu.matmul %53, %51, %cst_42 {dimension_numbers = #tpu.dot_dimension_numbers<[1], [0], [0], [1], [0, 0, 1, 1], [], []>} : vector<32x8xf32>, vector<8x256xf32>, vector<32x256xf32> -> vector<32x256xf32>
      %55 = arith.truncf %54 : vector<32x256xf32> to vector<32x256xbf16>
      %c2_43 = arith.constant 2 : index
      %c0_44 = arith.constant 0 : index
      %c0_45 = arith.constant 0 : index
      %56 = vector.load %arg15[%c2_43, %c0_44, %c0_45] : memref<4x33x256xbf16, #tpu.memory_space<vmem>>, vector<1x32x256xbf16>
      %57 = vector.shape_cast %56 : vector<1x32x256xbf16> to vector<32x256xbf16>
      %58 = vector.shape_cast %55 : vector<32x256xbf16> to vector<1x32x256xbf16>
      tpu.vector_store %arg15[%c2_43, %c0_44, %c0_45], %58 {strides = array<i32>} : memref<4x33x256xbf16, #tpu.memory_space<vmem>>, vector<1x32x256xbf16>,
      %59 = vector.extract_strided_slice %28 {offsets = [56, 0], sizes = [8, 256], strides = [1, 1]} : vector<64x256xbf16> to vector<8x256xbf16>
      %60 = arith.extf %59 : vector<8x256xbf16> to vector<8x256xf32>
      %61 = vector.extract_strided_slice %0 {offsets = [3, 0, 0], sizes = [1, 32, 8], strides = [1, 1, 1]} : vector<4x32x8xf32> to vector<1x32x8xf32>
      %62 = vector.shape_cast %61 : vector<1x32x8xf32> to vector<32x8xf32>
      %cst_46 = arith.constant dense<0.000000e+00> : vector<32x256xf32>
      %63 = tpu.matmul %62, %60, %cst_46 {dimension_numbers = #tpu.dot_dimension_numbers<[1], [0], [0], [1], [0, 0, 1, 1], [], []>} : vector<32x8xf32>, vector<8x256xf32>, vector<32x256xf32> -> vector<32x256xf32>
      %64 = arith.truncf %63 : vector<32x256xf32> to vector<32x256xbf16>
      %c3_47 = arith.constant 3 : index
      %c0_48 = arith.constant 0 : index
      %c0_49 = arith.constant 0 : index
      %65 = vector.load %arg15[%c3_47, %c0_48, %c0_49] : memref<4x33x256xbf16, #tpu.memory_space<vmem>>, vector<1x32x256xbf16>
      %66 = vector.shape_cast %65 : vector<1x32x256xbf16> to vector<32x256xbf16>
      %67 = vector.shape_cast %64 : vector<32x256xbf16> to vector<1x32x256xbf16>
      tpu.vector_store %arg15[%c3_47, %c0_48, %c0_49], %67 {strides = array<i32>} : memref<4x33x256xbf16, #tpu.memory_space<vmem>>, vector<1x32x256xbf16>,
      %cst_50 = arith.constant 0.000000e+00 : f32
      %68 = vector.broadcast %cst_50 : f32 to vector<32x128xf32>
      %69 = vector.extract_strided_slice %25 {offsets = [0, 0], sizes = [8, 128], strides = [1, 1]} : vector<32x256xbf16> to vector<8x128xbf16>
      %70 = vector.extract_strided_slice %28 {offsets = [0, 0], sizes = [8, 256], strides = [1, 1]} : vector<64x256xbf16> to vector<8x256xbf16>
      %cst_51 = arith.constant dense<0.000000e+00> : vector<128x256xf32>
      %71 = tpu.matmul %69, %70, %cst_51 {dimension_numbers = #tpu.dot_dimension_numbers<[0], [0], [1], [1], [0, 1, 1, 1], [], []>} : vector<8x128xbf16>, vector<8x256xbf16>, vector<128x256xf32> -> vector<128x256xf32>
      %cst_52 = arith.constant dense<0xFF800000> : vector<128xf32>
      %72 = vector.multi_reduction <maximumf>, %71, %cst_52 [1] : vector<128x256xf32> to vector<128xf32>
      %73 = vector.shape_cast %72 : vector<128xf32> to vector<128x1xf32>
      %74 = vector.broadcast %73 : vector<128x1xf32> to vector<128x256xf32>
      %75 = arith.subf %71, %74 : vector<128x256xf32>
      %76 = math.exp %75 : vector<128x256xf32>
      %77 = arith.truncf %76 : vector<128x256xf32> to vector<128x256xbf16>
      %c0_53 = arith.constant 0 : index
      %c0_54 = arith.constant 0 : index
      %c0_55 = arith.constant 0 : index
      %78 = vector.load %arg15[%c0_53, %c0_54, %c0_55] : memref<4x33x256xbf16, #tpu.memory_space<vmem>>, vector<1x33x256xbf16>
      %79 = vector.shape_cast %78 : vector<1x33x256xbf16> to vector<33x256xbf16>
      %cst_56 = arith.constant dense<0.000000e+00> : vector<33x128xf32>
      %80 = tpu.matmul %79, %77, %cst_56 {dimension_numbers = #tpu.dot_dimension_numbers<[1], [1], [0], [0], [0, 0, 1, 0], [], []>} : vector<33x256xbf16>, vector<128x256xbf16>, vector<33x128xf32> -> vector<33x128xf32>
      %81 = vector.extract_strided_slice %80 {offsets = [32, 0], sizes = [1, 128], strides = [1, 1]} : vector<33x128xf32> to vector<1x128xf32>
      %82 = tpu.reciprocal %81 {approx = true} : vector<1x128xf32> -> vector<1x128xf32>
      %83 = vector.extract_strided_slice %80 {offsets = [0, 0], sizes = [32, 128], strides = [1, 1]} : vector<33x128xf32> to vector<32x128xf32>
      %84 = vector.broadcast %82 : vector<1x128xf32> to vector<32x128xf32>
      %85 = arith.mulf %83, %84 : vector<32x128xf32>
      %86 = arith.addf %68, %85 : vector<32x128xf32>
      %87 = vector.extract_strided_slice %25 {offsets = [8, 0], sizes = [8, 128], strides = [1, 1]} : vector<32x256xbf16> to vector<8x128xbf16>
      %88 = vector.extract_strided_slice %28 {offsets = [8, 0], sizes = [8, 256], strides = [1, 1]} : vector<64x256xbf16> to vector<8x256xbf16>
      %cst_57 = arith.constant dense<0.000000e+00> : vector<128x256xf32>
      %89 = tpu.matmul %87, %88, %cst_57 {dimension_numbers = #tpu.dot_dimension_numbers<[0], [0], [1], [1], [0, 1, 1, 1], [], []>} : vector<8x128xbf16>, vector<8x256xbf16>, vector<128x256xf32> -> vector<128x256xf32>
      %cst_58 = arith.constant dense<0xFF800000> : vector<128xf32>
      %90 = vector.multi_reduction <maximumf>, %89, %cst_58 [1] : vector<128x256xf32> to vector<128xf32>
      %91 = vector.shape_cast %90 : vector<128xf32> to vector<128x1xf32>
      %92 = vector.broadcast %91 : vector<128x1xf32> to vector<128x256xf32>
      %93 = arith.subf %89, %92 : vector<128x256xf32>
      %94 = math.exp %93 : vector<128x256xf32>
      %95 = arith.truncf %94 : vector<128x256xf32> to vector<128x256xbf16>
      %c1_59 = arith.constant 1 : index
      %c0_60 = arith.constant 0 : index
      %c0_61 = arith.constant 0 : index
      %96 = vector.load %arg15[%c1_59, %c0_60, %c0_61] : memref<4x33x256xbf16, #tpu.memory_space<vmem>>, vector<1x33x256xbf16>
      %97 = vector.shape_cast %96 : vector<1x33x256xbf16> to vector<33x256xbf16>
      %cst_62 = arith.constant dense<0.000000e+00> : vector<33x128xf32>
      %98 = tpu.matmul %97, %95, %cst_62 {dimension_numbers = #tpu.dot_dimension_numbers<[1], [1], [0], [0], [0, 0, 1, 0], [], []>} : vector<33x256xbf16>, vector<128x256xbf16>, vector<33x128xf32> -> vector<33x128xf32>
      %99 = vector.extract_strided_slice %98 {offsets = [32, 0], sizes = [1, 128], strides = [1, 1]} : vector<33x128xf32> to vector<1x128xf32>
      %100 = tpu.reciprocal %99 {approx = true} : vector<1x128xf32> -> vector<1x128xf32>
      %101 = vector.extract_strided_slice %98 {offsets = [0, 0], sizes = [32, 128], strides = [1, 1]} : vector<33x128xf32> to vector<32x128xf32>
      %102 = vector.broadcast %100 : vector<1x128xf32> to vector<32x128xf32>
      %103 = arith.mulf %101, %102 : vector<32x128xf32>
      %104 = arith.addf %86, %103 : vector<32x128xf32>
      %105 = vector.extract_strided_slice %25 {offsets = [16, 0], sizes = [8, 128], strides = [1, 1]} : vector<32x256xbf16> to vector<8x128xbf16>
      %106 = vector.extract_strided_slice %28 {offsets = [16, 0], sizes = [8, 256], strides = [1, 1]} : vector<64x256xbf16> to vector<8x256xbf16>
      %cst_63 = arith.constant dense<0.000000e+00> : vector<128x256xf32>
      %107 = tpu.matmul %105, %106, %cst_63 {dimension_numbers = #tpu.dot_dimension_numbers<[0], [0], [1], [1], [0, 1, 1, 1], [], []>} : vector<8x128xbf16>, vector<8x256xbf16>, vector<128x256xf32> -> vector<128x256xf32>
      %cst_64 = arith.constant dense<0xFF800000> : vector<128xf32>
      %108 = vector.multi_reduction <maximumf>, %107, %cst_64 [1] : vector<128x256xf32> to vector<128xf32>
      %109 = vector.shape_cast %108 : vector<128xf32> to vector<128x1xf32>
      %110 = vector.broadcast %109 : vector<128x1xf32> to vector<128x256xf32>
      %111 = arith.subf %107, %110 : vector<128x256xf32>
      %112 = math.exp %111 : vector<128x256xf32>
      %113 = arith.truncf %112 : vector<128x256xf32> to vector<128x256xbf16>
      %c2_65 = arith.constant 2 : index
      %c0_66 = arith.constant 0 : index
      %c0_67 = arith.constant 0 : index
      %114 = vector.load %arg15[%c2_65, %c0_66, %c0_67] : memref<4x33x256xbf16, #tpu.memory_space<vmem>>, vector<1x33x256xbf16>
      %115 = vector.shape_cast %114 : vector<1x33x256xbf16> to vector<33x256xbf16>
      %cst_68 = arith.constant dense<0.000000e+00> : vector<33x128xf32>
      %116 = tpu.matmul %115, %113, %cst_68 {dimension_numbers = #tpu.dot_dimension_numbers<[1], [1], [0], [0], [0, 0, 1, 0], [], []>} : vector<33x256xbf16>, vector<128x256xbf16>, vector<33x128xf32> -> vector<33x128xf32>
      %117 = vector.extract_strided_slice %116 {offsets = [32, 0], sizes = [1, 128], strides = [1, 1]} : vector<33x128xf32> to vector<1x128xf32>
      %118 = tpu.reciprocal %117 {approx = true} : vector<1x128xf32> -> vector<1x128xf32>
      %119 = vector.extract_strided_slice %116 {offsets = [0, 0], sizes = [32, 128], strides = [1, 1]} : vector<33x128xf32> to vector<32x128xf32>
      %120 = vector.broadcast %118 : vector<1x128xf32> to vector<32x128xf32>
      %121 = arith.mulf %119, %120 : vector<32x128xf32>
      %122 = arith.addf %104, %121 : vector<32x128xf32>
      %123 = vector.extract_strided_slice %25 {offsets = [24, 0], sizes = [8, 128], strides = [1, 1]} : vector<32x256xbf16> to vector<8x128xbf16>
      %124 = vector.extract_strided_slice %28 {offsets = [24, 0], sizes = [8, 256], strides = [1, 1]} : vector<64x256xbf16> to vector<8x256xbf16>
      %cst_69 = arith.constant dense<0.000000e+00> : vector<128x256xf32>
      %125 = tpu.matmul %123, %124, %cst_69 {dimension_numbers = #tpu.dot_dimension_numbers<[0], [0], [1], [1], [0, 1, 1, 1], [], []>} : vector<8x128xbf16>, vector<8x256xbf16>, vector<128x256xf32> -> vector<128x256xf32>
      %cst_70 = arith.constant dense<0xFF800000> : vector<128xf32>
      %126 = vector.multi_reduction <maximumf>, %125, %cst_70 [1] : vector<128x256xf32> to vector<128xf32>
      %127 = vector.shape_cast %126 : vector<128xf32> to vector<128x1xf32>
      %128 = vector.broadcast %127 : vector<128x1xf32> to vector<128x256xf32>
      %129 = arith.subf %125, %128 : vector<128x256xf32>
      %130 = math.exp %129 : vector<128x256xf32>
      %131 = arith.truncf %130 : vector<128x256xf32> to vector<128x256xbf16>
      %c3_71 = arith.constant 3 : index
      %c0_72 = arith.constant 0 : index
      %c0_73 = arith.constant 0 : index
      %132 = vector.load %arg15[%c3_71, %c0_72, %c0_73] : memref<4x33x256xbf16, #tpu.memory_space<vmem>>, vector<1x33x256xbf16>
      %133 = vector.shape_cast %132 : vector<1x33x256xbf16> to vector<33x256xbf16>
      %cst_74 = arith.constant dense<0.000000e+00> : vector<33x128xf32>
      %134 = tpu.matmul %133, %131, %cst_74 {dimension_numbers = #tpu.dot_dimension_numbers<[1], [1], [0], [0], [0, 0, 1, 0], [], []>} : vector<33x256xbf16>, vector<128x256xbf16>, vector<33x128xf32> -> vector<33x128xf32>
      %135 = vector.extract_strided_slice %134 {offsets = [32, 0], sizes = [1, 128], strides = [1, 1]} : vector<33x128xf32> to vector<1x128xf32>
      %136 = tpu.reciprocal %135 {approx = true} : vector<1x128xf32> -> vector<1x128xf32>
      %137 = vector.extract_strided_slice %134 {offsets = [0, 0], sizes = [32, 128], strides = [1, 1]} : vector<33x128xf32> to vector<32x128xf32>
      %138 = vector.broadcast %136 : vector<1x128xf32> to vector<32x128xf32>
      %139 = arith.mulf %137, %138 : vector<32x128xf32>
      %140 = arith.addf %122, %139 : vector<32x128xf32>
      %141 = vector.extract_strided_slice %31 {offsets = [0, 0], sizes = [32, 128], strides = [1, 1]} : vector<32x256xf32> to vector<32x128xf32>
      %142 = arith.addf %140, %141 : vector<32x128xf32>
      %cst_75 = arith.constant dense<0.000000e+00> : vector<128xf32>
      %143 = vector.multi_reduction <add>, %142, %cst_75 [0] : vector<32x128xf32> to vector<128xf32>
      %144 = vector.shape_cast %143 : vector<128xf32> to vector<1x128xf32>
      %cst_76 = arith.constant 3.200000e+01 : f32
      %145 = vector.broadcast %cst_76 : f32 to vector<1x128xf32>
      %146 = arith.divf %144, %145 : vector<1x128xf32>
      %147 = vector.broadcast %146 : vector<1x128xf32> to vector<32x128xf32>
      %148 = arith.subf %142, %147 : vector<32x128xf32>
      %149 = arith.mulf %148, %148 : vector<32x128xf32>
      %cst_77 = arith.constant dense<0.000000e+00> : vector<128xf32>
      %150 = vector.multi_reduction <add>, %149, %cst_77 [0] : vector<32x128xf32> to vector<128xf32>
      %151 = vector.shape_cast %150 : vector<128xf32> to vector<1x128xf32>
      %cst_78 = arith.constant 3.200000e+01 : f32
      %152 = vector.broadcast %cst_78 : f32 to vector<1x128xf32>
      %153 = arith.divf %151, %152 : vector<1x128xf32>
      %cst_79 = arith.constant 9.99999974E-6 : f32
      %154 = vector.broadcast %cst_79 : f32 to vector<1x128xf32>
      %155 = arith.addf %153, %154 : vector<1x128xf32>
      %156 = math.rsqrt %155 : vector<1x128xf32>
      %157 = vector.broadcast %156 : vector<1x128xf32> to vector<32x128xf32>
      %158 = arith.mulf %148, %157 : vector<32x128xf32>
      %159 = vector.broadcast %1 : vector<32x1xf32> to vector<32x128xf32>
      %160 = arith.mulf %158, %159 : vector<32x128xf32>
      %161 = vector.broadcast %2 : vector<32x1xf32> to vector<32x128xf32>
      %162 = arith.addf %160, %161 : vector<32x128xf32>
      %cst_80 = arith.constant dense<0.000000e+00> : vector<64x128xf32>
      %163 = tpu.matmul %3, %162, %cst_80 {dimension_numbers = #tpu.dot_dimension_numbers<[1], [0], [0], [1], [0, 0, 1, 1], [], []>} : vector<64x32xf32>, vector<32x128xf32>, vector<64x128xf32> -> vector<64x128xf32>
      %164 = vector.broadcast %4 : vector<64x1xf32> to vector<64x128xf32>
      %165 = arith.addf %163, %164 : vector<64x128xf32>
      %cst_81 = arith.constant 0.000000e+00 : f32
      %166 = vector.broadcast %cst_81 : f32 to vector<64x128xf32>
      %167 = arith.maximumf %165, %166 : vector<64x128xf32>
      %cst_82 = arith.constant dense<0.000000e+00> : vector<32x128xf32>
      %168 = tpu.matmul %5, %167, %cst_82 {dimension_numbers = #tpu.dot_dimension_numbers<[1], [0], [0], [1], [0, 0, 1, 1], [], []>} : vector<32x64xf32>, vector<64x128xf32>, vector<32x128xf32> -> vector<32x128xf32>
      %169 = vector.broadcast %6 : vector<32x1xf32> to vector<32x128xf32>
      %170 = arith.addf %168, %169 : vector<32x128xf32>
      %171 = arith.addf %170, %142 : vector<32x128xf32>
      %cst_83 = arith.constant dense<0.000000e+00> : vector<128xf32>
      %172 = vector.multi_reduction <add>, %171, %cst_83 [0] : vector<32x128xf32> to vector<128xf32>
      %173 = vector.shape_cast %172 : vector<128xf32> to vector<1x128xf32>
      %cst_84 = arith.constant 3.200000e+01 : f32
      %174 = vector.broadcast %cst_84 : f32 to vector<1x128xf32>
      %175 = arith.divf %173, %174 : vector<1x128xf32>
      %176 = vector.broadcast %175 : vector<1x128xf32> to vector<32x128xf32>
      %177 = arith.subf %171, %176 : vector<32x128xf32>
      %178 = arith.mulf %177, %177 : vector<32x128xf32>
      %cst_85 = arith.constant dense<0.000000e+00> : vector<128xf32>
      %179 = vector.multi_reduction <add>, %178, %cst_85 [0] : vector<32x128xf32> to vector<128xf32>
      %180 = vector.shape_cast %179 : vector<128xf32> to vector<1x128xf32>
      %cst_86 = arith.constant 3.200000e+01 : f32
      %181 = vector.broadcast %cst_86 : f32 to vector<1x128xf32>
      %182 = arith.divf %180, %181 : vector<1x128xf32>
      %cst_87 = arith.constant 9.99999974E-6 : f32
      %183 = vector.broadcast %cst_87 : f32 to vector<1x128xf32>
      %184 = arith.addf %182, %183 : vector<1x128xf32>
      %185 = math.rsqrt %184 : vector<1x128xf32>
      %186 = vector.broadcast %185 : vector<1x128xf32> to vector<32x128xf32>
      %187 = arith.mulf %177, %186 : vector<32x128xf32>
      %188 = vector.broadcast %1 : vector<32x1xf32> to vector<32x128xf32>
      %189 = arith.mulf %187, %188 : vector<32x128xf32>
      %190 = vector.broadcast %2 : vector<32x1xf32> to vector<32x128xf32>
      %191 = arith.addf %189, %190 : vector<32x128xf32>
      %cst_88 = arith.constant 0.000000e+00 : f32
      %192 = vector.broadcast %cst_88 : f32 to vector<32x128xf32>
      %193 = vector.extract_strided_slice %25 {offsets = [0, 128], sizes = [8, 128], strides = [1, 1]} : vector<32x256xbf16> to vector<8x128xbf16>
      %194 = vector.extract_strided_slice %28 {offsets = [0, 0], sizes = [8, 256], strides = [1, 1]} : vector<64x256xbf16> to vector<8x256xbf16>
      %cst_89 = arith.constant dense<0.000000e+00> : vector<128x256xf32>
      %195 = tpu.matmul %193, %194, %cst_89 {dimension_numbers = #tpu.dot_dimension_numbers<[0], [0], [1], [1], [0, 1, 1, 1], [], []>} : vector<8x128xbf16>, vector<8x256xbf16>, vector<128x256xf32> -> vector<128x256xf32>
      %cst_90 = arith.constant dense<0xFF800000> : vector<128xf32>
      %196 = vector.multi_reduction <maximumf>, %195, %cst_90 [1] : vector<128x256xf32> to vector<128xf32>
      %197 = vector.shape_cast %196 : vector<128xf32> to vector<128x1xf32>
      %198 = vector.broadcast %197 : vector<128x1xf32> to vector<128x256xf32>
      %199 = arith.subf %195, %198 : vector<128x256xf32>
      %200 = math.exp %199 : vector<128x256xf32>
      %201 = arith.truncf %200 : vector<128x256xf32> to vector<128x256xbf16>
      %c0_91 = arith.constant 0 : index
      %c0_92 = arith.constant 0 : index
      %c0_93 = arith.constant 0 : index
      %202 = vector.load %arg15[%c0_91, %c0_92, %c0_93] : memref<4x33x256xbf16, #tpu.memory_space<vmem>>, vector<1x33x256xbf16>
      %203 = vector.shape_cast %202 : vector<1x33x256xbf16> to vector<33x256xbf16>
      %cst_94 = arith.constant dense<0.000000e+00> : vector<33x128xf32>
      %204 = tpu.matmul %203, %201, %cst_94 {dimension_numbers = #tpu.dot_dimension_numbers<[1], [1], [0], [0], [0, 0, 1, 0], [], []>} : vector<33x256xbf16>, vector<128x256xbf16>, vector<33x128xf32> -> vector<33x128xf32>
      %205 = vector.extract_strided_slice %204 {offsets = [32, 0], sizes = [1, 128], strides = [1, 1]} : vector<33x128xf32> to vector<1x128xf32>
      %206 = tpu.reciprocal %205 {approx = true} : vector<1x128xf32> -> vector<1x128xf32>
      %207 = vector.extract_strided_slice %204 {offsets = [0, 0], sizes = [32, 128], strides = [1, 1]} : vector<33x128xf32> to vector<32x128xf32>
      %208 = vector.broadcast %206 : vector<1x128xf32> to vector<32x128xf32>
      %209 = arith.mulf %207, %208 : vector<32x128xf32>
      %210 = arith.addf %192, %209 : vector<32x128xf32>
      %211 = vector.extract_strided_slice %25 {offsets = [8, 128], sizes = [8, 128], strides = [1, 1]} : vector<32x256xbf16> to vector<8x128xbf16>
      %212 = vector.extract_strided_slice %28 {offsets = [8, 0], sizes = [8, 256], strides = [1, 1]} : vector<64x256xbf16> to vector<8x256xbf16>
      %cst_95 = arith.constant dense<0.000000e+00> : vector<128x256xf32>
      %213 = tpu.matmul %211, %212, %cst_95 {dimension_numbers = #tpu.dot_dimension_numbers<[0], [0], [1], [1], [0, 1, 1, 1], [], []>} : vector<8x128xbf16>, vector<8x256xbf16>, vector<128x256xf32> -> vector<128x256xf32>
      %cst_96 = arith.constant dense<0xFF800000> : vector<128xf32>
      %214 = vector.multi_reduction <maximumf>, %213, %cst_96 [1] : vector<128x256xf32> to vector<128xf32>
      %215 = vector.shape_cast %214 : vector<128xf32> to vector<128x1xf32>
      %216 = vector.broadcast %215 : vector<128x1xf32> to vector<128x256xf32>
      %217 = arith.subf %213, %216 : vector<128x256xf32>
      %218 = math.exp %217 : vector<128x256xf32>
      %219 = arith.truncf %218 : vector<128x256xf32> to vector<128x256xbf16>
      %c1_97 = arith.constant 1 : index
      %c0_98 = arith.constant 0 : index
      %c0_99 = arith.constant 0 : index
      %220 = vector.load %arg15[%c1_97, %c0_98, %c0_99] : memref<4x33x256xbf16, #tpu.memory_space<vmem>>, vector<1x33x256xbf16>
      %221 = vector.shape_cast %220 : vector<1x33x256xbf16> to vector<33x256xbf16>
      %cst_100 = arith.constant dense<0.000000e+00> : vector<33x128xf32>
      %222 = tpu.matmul %221, %219, %cst_100 {dimension_numbers = #tpu.dot_dimension_numbers<[1], [1], [0], [0], [0, 0, 1, 0], [], []>} : vector<33x256xbf16>, vector<128x256xbf16>, vector<33x128xf32> -> vector<33x128xf32>
      %223 = vector.extract_strided_slice %222 {offsets = [32, 0], sizes = [1, 128], strides = [1, 1]} : vector<33x128xf32> to vector<1x128xf32>
      %224 = tpu.reciprocal %223 {approx = true} : vector<1x128xf32> -> vector<1x128xf32>
      %225 = vector.extract_strided_slice %222 {offsets = [0, 0], sizes = [32, 128], strides = [1, 1]} : vector<33x128xf32> to vector<32x128xf32>
      %226 = vector.broadcast %224 : vector<1x128xf32> to vector<32x128xf32>
      %227 = arith.mulf %225, %226 : vector<32x128xf32>
      %228 = arith.addf %210, %227 : vector<32x128xf32>
      %229 = vector.extract_strided_slice %25 {offsets = [16, 128], sizes = [8, 128], strides = [1, 1]} : vector<32x256xbf16> to vector<8x128xbf16>
      %230 = vector.extract_strided_slice %28 {offsets = [16, 0], sizes = [8, 256], strides = [1, 1]} : vector<64x256xbf16> to vector<8x256xbf16>
      %cst_101 = arith.constant dense<0.000000e+00> : vector<128x256xf32>
      %231 = tpu.matmul %229, %230, %cst_101 {dimension_numbers = #tpu.dot_dimension_numbers<[0], [0], [1], [1], [0, 1, 1, 1], [], []>} : vector<8x128xbf16>, vector<8x256xbf16>, vector<128x256xf32> -> vector<128x256xf32>
      %cst_102 = arith.constant dense<0xFF800000> : vector<128xf32>
      %232 = vector.multi_reduction <maximumf>, %231, %cst_102 [1] : vector<128x256xf32> to vector<128xf32>
      %233 = vector.shape_cast %232 : vector<128xf32> to vector<128x1xf32>
      %234 = vector.broadcast %233 : vector<128x1xf32> to vector<128x256xf32>
      %235 = arith.subf %231, %234 : vector<128x256xf32>
      %236 = math.exp %235 : vector<128x256xf32>
      %237 = arith.truncf %236 : vector<128x256xf32> to vector<128x256xbf16>
      %c2_103 = arith.constant 2 : index
      %c0_104 = arith.constant 0 : index
      %c0_105 = arith.constant 0 : index
      %238 = vector.load %arg15[%c2_103, %c0_104, %c0_105] : memref<4x33x256xbf16, #tpu.memory_space<vmem>>, vector<1x33x256xbf16>
      %239 = vector.shape_cast %238 : vector<1x33x256xbf16> to vector<33x256xbf16>
      %cst_106 = arith.constant dense<0.000000e+00> : vector<33x128xf32>
      %240 = tpu.matmul %239, %237, %cst_106 {dimension_numbers = #tpu.dot_dimension_numbers<[1], [1], [0], [0], [0, 0, 1, 0], [], []>} : vector<33x256xbf16>, vector<128x256xbf16>, vector<33x128xf32> -> vector<33x128xf32>
      %241 = vector.extract_strided_slice %240 {offsets = [32, 0], sizes = [1, 128], strides = [1, 1]} : vector<33x128xf32> to vector<1x128xf32>
      %242 = tpu.reciprocal %241 {approx = true} : vector<1x128xf32> -> vector<1x128xf32>
      %243 = vector.extract_strided_slice %240 {offsets = [0, 0], sizes = [32, 128], strides = [1, 1]} : vector<33x128xf32> to vector<32x128xf32>
      %244 = vector.broadcast %242 : vector<1x128xf32> to vector<32x128xf32>
      %245 = arith.mulf %243, %244 : vector<32x128xf32>
      %246 = arith.addf %228, %245 : vector<32x128xf32>
      %247 = vector.extract_strided_slice %25 {offsets = [24, 128], sizes = [8, 128], strides = [1, 1]} : vector<32x256xbf16> to vector<8x128xbf16>
      %248 = vector.extract_strided_slice %28 {offsets = [24, 0], sizes = [8, 256], strides = [1, 1]} : vector<64x256xbf16> to vector<8x256xbf16>
      %cst_107 = arith.constant dense<0.000000e+00> : vector<128x256xf32>
      %249 = tpu.matmul %247, %248, %cst_107 {dimension_numbers = #tpu.dot_dimension_numbers<[0], [0], [1], [1], [0, 1, 1, 1], [], []>} : vector<8x128xbf16>, vector<8x256xbf16>, vector<128x256xf32> -> vector<128x256xf32>
      %cst_108 = arith.constant dense<0xFF800000> : vector<128xf32>
      %250 = vector.multi_reduction <maximumf>, %249, %cst_108 [1] : vector<128x256xf32> to vector<128xf32>
      %251 = vector.shape_cast %250 : vector<128xf32> to vector<128x1xf32>
      %252 = vector.broadcast %251 : vector<128x1xf32> to vector<128x256xf32>
      %253 = arith.subf %249, %252 : vector<128x256xf32>
      %254 = math.exp %253 : vector<128x256xf32>
      %255 = arith.truncf %254 : vector<128x256xf32> to vector<128x256xbf16>
      %c3_109 = arith.constant 3 : index
      %c0_110 = arith.constant 0 : index
      %c0_111 = arith.constant 0 : index
      %256 = vector.load %arg15[%c3_109, %c0_110, %c0_111] : memref<4x33x256xbf16, #tpu.memory_space<vmem>>, vector<1x33x256xbf16>
      %257 = vector.shape_cast %256 : vector<1x33x256xbf16> to vector<33x256xbf16>
      %cst_112 = arith.constant dense<0.000000e+00> : vector<33x128xf32>
      %258 = tpu.matmul %257, %255, %cst_112 {dimension_numbers = #tpu.dot_dimension_numbers<[1], [1], [0], [0], [0, 0, 1, 0], [], []>} : vector<33x256xbf16>, vector<128x256xbf16>, vector<33x128xf32> -> vector<33x128xf32>
      %259 = vector.extract_strided_slice %258 {offsets = [32, 0], sizes = [1, 128], strides = [1, 1]} : vector<33x128xf32> to vector<1x128xf32>
      %260 = tpu.reciprocal %259 {approx = true} : vector<1x128xf32> -> vector<1x128xf32>
      %261 = vector.extract_strided_slice %258 {offsets = [0, 0], sizes = [32, 128], strides = [1, 1]} : vector<33x128xf32> to vector<32x128xf32>
      %262 = vector.broadcast %260 : vector<1x128xf32> to vector<32x128xf32>
      %263 = arith.mulf %261, %262 : vector<32x128xf32>
      %264 = arith.addf %246, %263 : vector<32x128xf32>
      %265 = vector.extract_strided_slice %31 {offsets = [0, 128], sizes = [32, 128], strides = [1, 1]} : vector<32x256xf32> to vector<32x128xf32>
      %266 = arith.addf %264, %265 : vector<32x128xf32>
      %cst_113 = arith.constant dense<0.000000e+00> : vector<128xf32>
      %267 = vector.multi_reduction <add>, %266, %cst_113 [0] : vector<32x128xf32> to vector<128xf32>
      %268 = vector.shape_cast %267 : vector<128xf32> to vector<1x128xf32>
      %cst_114 = arith.constant 3.200000e+01 : f32
      %269 = vector.broadcast %cst_114 : f32 to vector<1x128xf32>
      %270 = arith.divf %268, %269 : vector<1x128xf32>
      %271 = vector.broadcast %270 : vector<1x128xf32> to vector<32x128xf32>
      %272 = arith.subf %266, %271 : vector<32x128xf32>
      %273 = arith.mulf %272, %272 : vector<32x128xf32>
      %cst_115 = arith.constant dense<0.000000e+00> : vector<128xf32>
      %274 = vector.multi_reduction <add>, %273, %cst_115 [0] : vector<32x128xf32> to vector<128xf32>
      %275 = vector.shape_cast %274 : vector<128xf32> to vector<1x128xf32>
      %cst_116 = arith.constant 3.200000e+01 : f32
      %276 = vector.broadcast %cst_116 : f32 to vector<1x128xf32>
      %277 = arith.divf %275, %276 : vector<1x128xf32>
      %cst_117 = arith.constant 9.99999974E-6 : f32
      %278 = vector.broadcast %cst_117 : f32 to vector<1x128xf32>
      %279 = arith.addf %277, %278 : vector<1x128xf32>
      %280 = math.rsqrt %279 : vector<1x128xf32>
      %281 = vector.broadcast %280 : vector<1x128xf32> to vector<32x128xf32>
      %282 = arith.mulf %272, %281 : vector<32x128xf32>
      %283 = vector.broadcast %1 : vector<32x1xf32> to vector<32x128xf32>
      %284 = arith.mulf %282, %283 : vector<32x128xf32>
      %285 = vector.broadcast %2 : vector<32x1xf32> to vector<32x128xf32>
      %286 = arith.addf %284, %285 : vector<32x128xf32>
      %cst_118 = arith.constant dense<0.000000e+00> : vector<64x128xf32>
      %287 = tpu.matmul %3, %286, %cst_118 {dimension_numbers = #tpu.dot_dimension_numbers<[1], [0], [0], [1], [0, 0, 1, 1], [], []>} : vector<64x32xf32>, vector<32x128xf32>, vector<64x128xf32> -> vector<64x128xf32>
      %288 = vector.broadcast %4 : vector<64x1xf32> to vector<64x128xf32>
      %289 = arith.addf %287, %288 : vector<64x128xf32>
      %cst_119 = arith.constant 0.000000e+00 : f32
      %290 = vector.broadcast %cst_119 : f32 to vector<64x128xf32>
      %291 = arith.maximumf %289, %290 : vector<64x128xf32>
      %cst_120 = arith.constant dense<0.000000e+00> : vector<32x128xf32>
      %292 = tpu.matmul %5, %291, %cst_120 {dimension_numbers = #tpu.dot_dimension_numbers<[1], [0], [0], [1], [0, 0, 1, 1], [], []>} : vector<32x64xf32>, vector<64x128xf32>, vector<32x128xf32> -> vector<32x128xf32>
      %293 = vector.broadcast %6 : vector<32x1xf32> to vector<32x128xf32>
      %294 = arith.addf %292, %293 : vector<32x128xf32>
      %295 = arith.addf %294, %266 : vector<32x128xf32>
      %cst_121 = arith.constant dense<0.000000e+00> : vector<128xf32>
      %296 = vector.multi_reduction <add>, %295, %cst_121 [0] : vector<32x128xf32> to vector<128xf32>
      %297 = vector.shape_cast %296 : vector<128xf32> to vector<1x128xf32>
      %cst_122 = arith.constant 3.200000e+01 : f32
      %298 = vector.broadcast %cst_122 : f32 to vector<1x128xf32>
      %299 = arith.divf %297, %298 : vector<1x128xf32>
      %300 = vector.broadcast %299 : vector<1x128xf32> to vector<32x128xf32>
      %301 = arith.subf %295, %300 : vector<32x128xf32>
      %302 = arith.mulf %301, %301 : vector<32x128xf32>
      %cst_123 = arith.constant dense<0.000000e+00> : vector<128xf32>
      %303 = vector.multi_reduction <add>, %302, %cst_123 [0] : vector<32x128xf32> to vector<128xf32>
      %304 = vector.shape_cast %303 : vector<128xf32> to vector<1x128xf32>
      %cst_124 = arith.constant 3.200000e+01 : f32
      %305 = vector.broadcast %cst_124 : f32 to vector<1x128xf32>
      %306 = arith.divf %304, %305 : vector<1x128xf32>
      %cst_125 = arith.constant 9.99999974E-6 : f32
      %307 = vector.broadcast %cst_125 : f32 to vector<1x128xf32>
      %308 = arith.addf %306, %307 : vector<1x128xf32>
      %309 = math.rsqrt %308 : vector<1x128xf32>
      %310 = vector.broadcast %309 : vector<1x128xf32> to vector<32x128xf32>
      %311 = arith.mulf %301, %310 : vector<32x128xf32>
      %312 = vector.broadcast %1 : vector<32x1xf32> to vector<32x128xf32>
      %313 = arith.mulf %311, %312 : vector<32x128xf32>
      %314 = vector.broadcast %2 : vector<32x1xf32> to vector<32x128xf32>
      %315 = arith.addf %313, %314 : vector<32x128xf32>
      %316 = tpu.concatenate %191, %315 in 1 : vector<32x128xf32>, vector<32x128xf32> -> vector<32x256xf32>
      %c0_126 = arith.constant 0 : index
      %317 = arith.index_cast %22 : i32 to index
      %c0_127 = arith.constant 0 : index
      %c0_128 = arith.constant 0 : index
      %318 = vector.load %arg14[%c0_126, %317, %c0_127, %c0_128] : memref<1x4x32x256xf32, #tpu.memory_space<vmem>>, vector<1x1x32x256xf32>
      %319 = vector.shape_cast %318 : vector<1x1x32x256xf32> to vector<32x256xf32>
      %320 = vector.shape_cast %316 : vector<32x256xf32> to vector<1x1x32x256xf32>
      tpu.vector_store %arg14[%c0_126, %317, %c0_127, %c0_128], %320 {strides = array<i32>} : memref<1x4x32x256xf32, #tpu.memory_space<vmem>>, vector<1x1x32x256xf32>,
    }
    %c4_i32_22 = arith.constant 4 : i32
    return
  }
  func.func @transform_0(%arg0: i32, %arg1: i32, %arg2: memref<9xi32, #tpu.memory_space<smem>>, %arg3: memref<9xi32, #tpu.memory_space<smem>>) -> (i32, i32, i32, i32) {
    %0 = arith.index_cast %arg1 : i32 to index
    %1 = memref.load %arg2[%0] : memref<9xi32, #tpu.memory_space<smem>>
    %c0_i32 = arith.constant 0 : i32
    %c0_i32_0 = arith.constant 0 : i32
    %c0_i32_1 = arith.constant 0 : i32
    return %1, %arg0, %c0_i32, %c0_i32_0 : i32, i32, i32, i32
  }
  func.func @transform_1(%arg0: i32, %arg1: i32, %arg2: memref<9xi32, #tpu.memory_space<smem>>, %arg3: memref<9xi32, #tpu.memory_space<smem>>) -> (i32, i32, i32, i32) {
    %0 = arith.index_cast %arg1 : i32 to index
    %1 = memref.load %arg3[%0] : memref<9xi32, #tpu.memory_space<smem>>
    %c0_i32 = arith.constant 0 : i32
    %c0_i32_0 = arith.constant 0 : i32
    %c0_i32_1 = arith.constant 0 : i32
    return %1, %arg0, %c0_i32, %c0_i32_0 : i32, i32, i32, i32
  }
  func.func @transform_2(%arg0: i32, %arg1: i32, %arg2: memref<9xi32, #tpu.memory_space<smem>>, %arg3: memref<9xi32, #tpu.memory_space<smem>>) -> (i32, i32, i32, i32) {
    %0 = arith.index_cast %arg1 : i32 to index
    %1 = memref.load %arg2[%0] : memref<9xi32, #tpu.memory_space<smem>>
    %c0_i32 = arith.constant 0 : i32
    %c0_i32_0 = arith.constant 0 : i32
    %c0_i32_1 = arith.constant 0 : i32
    return %1, %arg0, %c0_i32, %c0_i32_0 : i32, i32, i32, i32
  }
  func.func @transform_3(%arg0: i32, %arg1: i32, %arg2: memref<9xi32, #tpu.memory_space<smem>>, %arg3: memref<9xi32, #tpu.memory_space<smem>>) -> (i32, i32, i32) {
    %c0_i32 = arith.constant 0 : i32
    %c0_i32_0 = arith.constant 0 : i32
    %c0_i32_1 = arith.constant 0 : i32
    %c0_i32_2 = arith.constant 0 : i32
    return %c0_i32, %c0_i32_0, %c0_i32_1 : i32, i32, i32
  }
  func.func @transform_4(%arg0: i32, %arg1: i32, %arg2: memref<9xi32, #tpu.memory_space<smem>>, %arg3: memref<9xi32, #tpu.memory_space<smem>>) -> (i32, i32) {
    %c0_i32 = arith.constant 0 : i32
    %c0_i32_0 = arith.constant 0 : i32
    %c0_i32_1 = arith.constant 0 : i32
    return %c0_i32, %c0_i32_0 : i32, i32
  }
  func.func @transform_5(%arg0: i32, %arg1: i32, %arg2: memref<9xi32, #tpu.memory_space<smem>>, %arg3: memref<9xi32, #tpu.memory_space<smem>>) -> (i32, i32) {
    %c0_i32 = arith.constant 0 : i32
    %c0_i32_0 = arith.constant 0 : i32
    %c0_i32_1 = arith.constant 0 : i32
    return %c0_i32, %c0_i32_0 : i32, i32
  }
  func.func @transform_6(%arg0: i32, %arg1: i32, %arg2: memref<9xi32, #tpu.memory_space<smem>>, %arg3: memref<9xi32, #tpu.memory_space<smem>>) -> (i32, i32) {
    %c0_i32 = arith.constant 0 : i32
    %c0_i32_0 = arith.constant 0 : i32
    %c0_i32_1 = arith.constant 0 : i32
    return %c0_i32, %c0_i32_0 : i32, i32
  }
  func.func @transform_7(%arg0: i32, %arg1: i32, %arg2: memref<9xi32, #tpu.memory_space<smem>>, %arg3: memref<9xi32, #tpu.memory_space<smem>>) -> (i32, i32) {
    %c0_i32 = arith.constant 0 : i32
    %c0_i32_0 = arith.constant 0 : i32
    %c0_i32_1 = arith.constant 0 : i32
    return %c0_i32, %c0_i32_0 : i32, i32
  }
  func.func @transform_8(%arg0: i32, %arg1: i32, %arg2: memref<9xi32, #tpu.memory_space<smem>>, %arg3: memref<9xi32, #tpu.memory_space<smem>>) -> (i32, i32) {
    %c0_i32 = arith.constant 0 : i32
    %c0_i32_0 = arith.constant 0 : i32
    %c0_i32_1 = arith.constant 0 : i32
    return %c0_i32, %c0_i32_0 : i32, i32
  }
  func.func @transform_9(%arg0: i32, %arg1: i32, %arg2: memref<9xi32, #tpu.memory_space<smem>>, %arg3: memref<9xi32, #tpu.memory_space<smem>>) -> (i32, i32) {
    %c0_i32 = arith.constant 0 : i32
    %c0_i32_0 = arith.constant 0 : i32
    %c0_i32_1 = arith.constant 0 : i32
    return %c0_i32, %c0_i32_0 : i32, i32
  }
  func.func @transform_10(%arg0: i32, %arg1: i32, %arg2: memref<9xi32, #tpu.memory_space<smem>>, %arg3: memref<9xi32, #tpu.memory_space<smem>>) -> (i32, i32, i32, i32) {
    %c0_i32 = arith.constant 0 : i32
    %c0_i32_0 = arith.constant 0 : i32
    %c0_i32_1 = arith.constant 0 : i32
    return %arg1, %arg0, %c0_i32, %c0_i32_0 : i32, i32, i32, i32
  }
}

</mosaic_0001>

<llo_original>
// kernel: self_cross_attention_forward.1
$region0: #{self_cross_attention_forward.1}
  #allocation0 [shape = 'u32[]', space=smem, size = 0x4, offset = 0x4, fixed_abs, tag = 'smem constant byte address 0x4 - core index']
  #allocation1 [shape = 'u32[144,128]{1,0:T(1,128)}', space=vmem, size = 0x12000, scoped, tag = 'internal scratch']
  #allocation2 [shape = 'bf16[4,33,256]{2,1,0:T(8,128)(2,1)}', space=vmem, size = 0x14000, scoped, tag = 'scratch operand']
  #allocation3 [shape = 's32[1]{0}', space=sflag, size = 0x4, scoped, tag = 'scoped memory for self_cross_attention_forward.1']
  #allocation4 [shape = 'u8[512]{0}', space=smem, size = 0x200, scoped, tag = 'prefetched SMEM operand 0']
  #allocation5 [shape = 'u8[512]{0}', space=smem, size = 0x200, scoped, tag = 'prefetched SMEM operand 1']
  %s0 = inlined_call_operand.vmem [shape: s32[9], index: 0, kind: input, shape index: {}]
  %s1 = inlined_call_operand.vmem [shape: s32[9], index: 1, kind: input, shape index: {}]
  %s2 = inlined_call_operand.vmem [shape: bf16[3,4,32,256], index: 2, kind: input, shape index: {}]
  %s3 = inlined_call_operand.vmem [shape: bf16[5,4,64,256], index: 3, kind: input, shape index: {}]
  %s4 = inlined_call_operand.vmem [shape: f32[3,4,32,256], index: 4, kind: input, shape index: {}]
  %s5 = inlined_call_operand.vmem [shape: f32[4,32,8], index: 5, kind: input, shape index: {}]
  %s6 = inlined_call_operand.vmem [shape: f32[32,1], index: 6, kind: input, shape index: {}]
  %s7 = inlined_call_operand.vmem [shape: f32[32,1], index: 7, kind: input, shape index: {}]
  %s8 = inlined_call_operand.vmem [shape: f32[64,32], index: 8, kind: input, shape index: {}]
  %s9 = inlined_call_operand.vmem [shape: f32[64,1], index: 9, kind: input, shape index: {}]
  %s10 = inlined_call_operand.vmem [shape: f32[32,64], index: 10, kind: input, shape index: {}]
  %s11 = inlined_call_operand.vmem [shape: f32[32,1], index: 11, kind: input, shape index: {}]
  %s12 = inlined_call_operand.vmem [shape: f32[9,4,32,256], index: 12, kind: output, shape index: {}]
  %s13 = sld [smem:[#allocation0]]
  $region80: #{self_cross_attention_forward.1} parent=0
    _
  %s15 = ssub.s32 1, %s13
  %s16 = scalar_select 0, %s15, %s13
  %s17 = sshll.u32 %s0, 4
  %s18 = int_to_ptr.vmem [resolvable:$true] %s17
  %20 = dma.vmem_to_smem %s18, 16, [#allocation4], [#allocation3]
  %s21 = sshll.u32 %s1, 4
  %s22 = int_to_ptr.vmem [resolvable:$true] %s21
  %24 = dma.vmem_to_smem %s22, 16, [#allocation5], [#allocation3]
  %25 = dma.done [#allocation3], 32
  %26 = sfence
  loop: start=0, step=1, limit=11
  $region2: #{self_cross_attention_forward.1} parent=0 // loop_pre_header
    _
  $region3: #{self_cross_attention_forward.1} parent=0 // loop_header
    %s28 = sphi 0, %s32
    %p29 = scmp.ge.s32.totalorder %s28, 11
    %s35 = sphi 0, %s47
    %s36 = sphi 0, %s43
    %s37 = sphi 0, %s35
    %s38 = sphi 0, %s36
    %s39 = sphi 0, %s37
    %s40 = sphi 0, %s38
    %s54 = sphi 0, %s56
    %s57 = sphi 0, %s54
    %s58 = sphi 0, %s57
    %s74 = sphi 0, %s58
    %s84 = sphi 0, %s86
    %s87 = sphi 0, %s84
    %s88 = sphi 0, %s87
    %s104 = sphi 0, %s88
    %s114 = sphi 0, %s116
    %s117 = sphi 0, %s114
    %s118 = sphi 0, %s117
    %s134 = sphi 0, %s118
    %s138 = sphi 0, %s138
    %s140 = sphi 0, %s138
    %s141 = sphi 0, %s140
    %s155 = sphi 0, %s141
    %s159 = sphi 0, %s159
    %s161 = sphi 0, %s159
    %s162 = sphi 0, %s161
    %s176 = sphi 0, %s162
    %s180 = sphi 0, %s180
    %s182 = sphi 0, %s180
    %s183 = sphi 0, %s182
    %s197 = sphi 0, %s183
    %s201 = sphi 0, %s201
    %s203 = sphi 0, %s201
    %s204 = sphi 0, %s203
    %s218 = sphi 0, %s204
    %s222 = sphi 0, %s222
    %s224 = sphi 0, %s222
    %s225 = sphi 0, %s224
    %s239 = sphi 0, %s225
    %s243 = sphi 0, %s243
    %s245 = sphi 0, %s243
    %s246 = sphi 0, %s245
    %s260 = sphi 0, %s246
    %s264 = sphi 0, %s264
    %s266 = sphi 0, %s264
    %s267 = sphi 0, %s266
    %s281 = sphi 0, %s267
    %s289 = sphi 0, %s291
    %s292 = sphi 0, %s289
    %s293 = sphi 0, %s292
    %s309 = sphi 0, %s293
  $region4: #{self_cross_attention_forward.1} parent=0 // loop_header_branch
    %31 = sbr.rel (%p29) target = $region8
  $region5: #{self_cross_attention_forward.1} parent=0 // loop_body
    %s33 = ssub.s32 %s28, 1
    %s34 = ssub.s32 %s28, 2
    %s41 = sadd.s32 1, %s36
    %p42 = scmp.ge.s32.totalorder %s41, 9
    %s43 = scalar_select %p42, 0, %s41
    %s44 = sadd.s32 1, %s35
    %s45 = scalar_select %p42, %s44, %s35
    %p46 = scmp.ge.s32.totalorder %s45, 1
    %s47 = scalar_select %p46, 0, %s45
    %s48 = sld [smem:[#allocation4 + %s36]]
    %s49 = sld [smem:[#allocation4 + %s43]]
    %s50 = ssub.s32 %s48, %s49
    %s51 = ssub.s32 %s35, %s47
    %s52 = sor.u32 %s50, %s51
    %p53 = scmp.eq.s32.totalorder %s52, 0
    %s55 = sadd.s32 %s54, 1
    %s56 = scalar_select %p53, %s54, %s55
    %p59 = pneg %p53
    %p60 = scmp.eq.s32.totalorder %s28, 8
    %p61 = por %p59, %p60
    %p62 = scmp.ne.s32.totalorder %s54, %s57
    %p63 = scmp.eq.s32.totalorder %s28, 0
    %p64 = por %p62, %p63
    %p65 = scmp.ne.s32.totalorder %s54, %s57
    %p66 = scmp.eq.s32.totalorder %s33, 8
    %p67 = por %p65, %p66
    %p68 = scmp.ne.s32.totalorder %s57, %s58
    %p69 = scmp.eq.s32.totalorder %s33, 0
    %p70 = por %p68, %p69
    %p71 = scmp.ne.s32.totalorder %s57, %s58
    %p72 = scmp.eq.s32.totalorder %s34, 8
    %p73 = por %p71, %p72
    %p75 = scmp.ne.s32.totalorder %s58, %s74
    %p76 = scmp.eq.s32.totalorder %s34, 0
    %p77 = por %p75, %p76
    %s78 = sld [smem:[#allocation5 + %s36]]
    %s79 = sld [smem:[#allocation5 + %s43]]
    %s80 = ssub.s32 %s78, %s79
    %s81 = ssub.s32 %s35, %s47
    %s82 = sor.u32 %s80, %s81
    %p83 = scmp.eq.s32.totalorder %s82, 0
    %s85 = sadd.s32 %s84, 1
    %s86 = scalar_select %p83, %s84, %s85
    %p89 = pneg %p83
    %p90 = scmp.eq.s32.totalorder %s28, 8
    %p91 = por %p89, %p90
    %p92 = scmp.ne.s32.totalorder %s84, %s87
    %p93 = scmp.eq.s32.totalorder %s28, 0
    %p94 = por %p92, %p93
    %p95 = scmp.ne.s32.totalorder %s84, %s87
    %p96 = scmp.eq.s32.totalorder %s33, 8
    %p97 = por %p95, %p96
    %p98 = scmp.ne.s32.totalorder %s87, %s88
    %p99 = scmp.eq.s32.totalorder %s33, 0
    %p100 = por %p98, %p99
    %p101 = scmp.ne.s32.totalorder %s87, %s88
    %p102 = scmp.eq.s32.totalorder %s34, 8
    %p103 = por %p101, %p102
    %p105 = scmp.ne.s32.totalorder %s88, %s104
    %p106 = scmp.eq.s32.totalorder %s34, 0
    %p107 = por %p105, %p106
    %s108 = sld [smem:[#allocation4 + %s36]]
    %s109 = sld [smem:[#allocation4 + %s43]]
    %s110 = ssub.s32 %s108, %s109
    %s111 = ssub.s32 %s35, %s47
    %s112 = sor.u32 %s110, %s111
    %p113 = scmp.eq.s32.totalorder %s112, 0
    %s115 = sadd.s32 %s114, 1
    %s116 = scalar_select %p113, %s114, %s115
    %p119 = pneg %p113
    %p120 = scmp.eq.s32.totalorder %s28, 8
    %p121 = por %p119, %p120
    %p122 = scmp.ne.s32.totalorder %s114, %s117
    %p123 = scmp.eq.s32.totalorder %s28, 0
    %p124 = por %p122, %p123
    %p125 = scmp.ne.s32.totalorder %s114, %s117
    %p126 = scmp.eq.s32.totalorder %s33, 8
    %p127 = por %p125, %p126
    %p128 = scmp.ne.s32.totalorder %s117, %s118
    %p129 = scmp.eq.s32.totalorder %s33, 0
    %p130 = por %p128, %p129
    %p131 = scmp.ne.s32.totalorder %s117, %s118
    %p132 = scmp.eq.s32.totalorder %s34, 8
    %p133 = por %p131, %p132
    %p135 = scmp.ne.s32.totalorder %s118, %s134
    %p136 = scmp.eq.s32.totalorder %s34, 0
    %p137 = por %p135, %p136
    %s139 = sadd.s32 %s138, 1
    %p142 = scmp.eq.s32.totalorder %s28, 8
    %p143 = scmp.ne.s32.totalorder %s138, %s140
    %p144 = scmp.eq.s32.totalorder %s28, 0
    %p145 = por %p143, %p144
    %p146 = scmp.ne.s32.totalorder %s138, %s140
    %p147 = scmp.eq.s32.totalorder %s33, 8
    %p148 = por %p146, %p147
    %p149 = scmp.ne.s32.totalorder %s140, %s141
    %p150 = scmp.eq.s32.totalorder %s33, 0
    %p151 = por %p149, %p150
    %p152 = scmp.ne.s32.totalorder %s140, %s141
    %p153 = scmp.eq.s32.totalorder %s34, 8
    %p154 = por %p152, %p153
    %p156 = scmp.ne.s32.totalorder %s141, %s155
    %p157 = scmp.eq.s32.totalorder %s34, 0
    %p158 = por %p156, %p157
    %s160 = sadd.s32 %s159, 1
    %p163 = scmp.eq.s32.totalorder %s28, 8
    %p164 = scmp.ne.s32.totalorder %s159, %s161
    %p165 = scmp.eq.s32.totalorder %s28, 0
    %p166 = por %p164, %p165
    %p167 = scmp.ne.s32.totalorder %s159, %s161
    %p168 = scmp.eq.s32.totalorder %s33, 8
    %p169 = por %p167, %p168
    %p170 = scmp.ne.s32.totalorder %s161, %s162
    %p171 = scmp.eq.s32.totalorder %s33, 0
    %p172 = por %p170, %p171
    %p173 = scmp.ne.s32.totalorder %s161, %s162
    %p174 = scmp.eq.s32.totalorder %s34, 8
    %p175 = por %p173, %p174
    %p177 = scmp.ne.s32.totalorder %s162, %s176
    %p178 = scmp.eq.s32.totalorder %s34, 0
    %p179 = por %p177, %p178
    %s181 = sadd.s32 %s180, 1
    %p184 = scmp.eq.s32.totalorder %s28, 8
    %p185 = scmp.ne.s32.totalorder %s180, %s182
    %p186 = scmp.eq.s32.totalorder %s28, 0
    %p187 = por %p185, %p186
    %p188 = scmp.ne.s32.totalorder %s180, %s182
    %p189 = scmp.eq.s32.totalorder %s33, 8
    %p190 = por %p188, %p189
    %p191 = scmp.ne.s32.totalorder %s182, %s183
    %p192 = scmp.eq.s32.totalorder %s33, 0
    %p193 = por %p191, %p192
    %p194 = scmp.ne.s32.totalorder %s182, %s183
    %p195 = scmp.eq.s32.totalorder %s34, 8
    %p196 = por %p194, %p195
    %p198 = scmp.ne.s32.totalorder %s183, %s197
    %p199 = scmp.eq.s32.totalorder %s34, 0
    %p200 = por %p198, %p199
    %s202 = sadd.s32 %s201, 1
    %p205 = scmp.eq.s32.totalorder %s28, 8
    %p206 = scmp.ne.s32.totalorder %s201, %s203
    %p207 = scmp.eq.s32.totalorder %s28, 0
    %p208 = por %p206, %p207
    %p209 = scmp.ne.s32.totalorder %s201, %s203
    %p210 = scmp.eq.s32.totalorder %s33, 8
    %p211 = por %p209, %p210
    %p212 = scmp.ne.s32.totalorder %s203, %s204
    %p213 = scmp.eq.s32.totalorder %s33, 0
    %p214 = por %p212, %p213
    %p215 = scmp.ne.s32.totalorder %s203, %s204
    %p216 = scmp.eq.s32.totalorder %s34, 8
    %p217 = por %p215, %p216
    %p219 = scmp.ne.s32.totalorder %s204, %s218
    %p220 = scmp.eq.s32.totalorder %s34, 0
    %p221 = por %p219, %p220
    %s223 = sadd.s32 %s222, 1
    %p226 = scmp.eq.s32.totalorder %s28, 8
    %p227 = scmp.ne.s32.totalorder %s222, %s224
    %p228 = scmp.eq.s32.totalorder %s28, 0
    %p229 = por %p227, %p228
    %p230 = scmp.ne.s32.totalorder %s222, %s224
    %p231 = scmp.eq.s32.totalorder %s33, 8
    %p232 = por %p230, %p231
    %p233 = scmp.ne.s32.totalorder %s224, %s225
    %p234 = scmp.eq.s32.totalorder %s33, 0
    %p235 = por %p233, %p234
    %p236 = scmp.ne.s32.totalorder %s224, %s225
    %p237 = scmp.eq.s32.totalorder %s34, 8
    %p238 = por %p236, %p237
    %p240 = scmp.ne.s32.totalorder %s225, %s239
    %p241 = scmp.eq.s32.totalorder %s34, 0
    %p242 = por %p240, %p241
    %s244 = sadd.s32 %s243, 1
    %p247 = scmp.eq.s32.totalorder %s28, 8
    %p248 = scmp.ne.s32.totalorder %s243, %s245
    %p249 = scmp.eq.s32.totalorder %s28, 0
    %p250 = por %p248, %p249
    %p251 = scmp.ne.s32.totalorder %s243, %s245
    %p252 = scmp.eq.s32.totalorder %s33, 8
    %p253 = por %p251, %p252
    %p254 = scmp.ne.s32.totalorder %s245, %s246
    %p255 = scmp.eq.s32.totalorder %s33, 0
    %p256 = por %p254, %p255
    %p257 = scmp.ne.s32.totalorder %s245, %s246
    %p258 = scmp.eq.s32.totalorder %s34, 8
    %p259 = por %p257, %p258
    %p261 = scmp.ne.s32.totalorder %s246, %s260
    %p262 = scmp.eq.s32.totalorder %s34, 0
    %p263 = por %p261, %p262
    %s265 = sadd.s32 %s264, 1
    %p268 = scmp.eq.s32.totalorder %s28, 8
    %p269 = scmp.ne.s32.totalorder %s264, %s266
    %p270 = scmp.eq.s32.totalorder %s28, 0
    %p271 = por %p269, %p270
    %p272 = scmp.ne.s32.totalorder %s264, %s266
    %p273 = scmp.eq.s32.totalorder %s33, 8
    %p274 = por %p272, %p273
    %p275 = scmp.ne.s32.totalorder %s266, %s267
    %p276 = scmp.eq.s32.totalorder %s33, 0
    %p277 = por %p275, %p276
    %p278 = scmp.ne.s32.totalorder %s266, %s267
    %p279 = scmp.eq.s32.totalorder %s34, 8
    %p280 = por %p278, %p279
    %p282 = scmp.ne.s32.totalorder %s267, %s281
    %p283 = scmp.eq.s32.totalorder %s34, 0
    %p284 = por %p282, %p283
    %s285 = ssub.s32 %s36, %s43
    %s286 = ssub.s32 %s35, %s47
    %s287 = sor.u32 %s285, %s286
    %p288 = scmp.eq.s32.totalorder %s287, 0
    %s290 = sadd.s32 %s289, 1
    %s291 = scalar_select %p288, %s289, %s290
    %p294 = pneg %p288
    %p295 = scmp.eq.s32.totalorder %s28, 8
    %p296 = por %p294, %p295
    %p297 = scmp.ne.s32.totalorder %s289, %s292
    %p298 = scmp.eq.s32.totalorder %s28, 0
    %p299 = por %p297, %p298
    %p300 = scmp.ne.s32.totalorder %s289, %s292
    %p301 = scmp.eq.s32.totalorder %s33, 8
    %p302 = por %p300, %p301
    %p303 = scmp.ne.s32.totalorder %s292, %s293
    %p304 = scmp.eq.s32.totalorder %s33, 0
    %p305 = por %p303, %p304
    %p306 = scmp.ne.s32.totalorder %s292, %s293
    %p307 = scmp.eq.s32.totalorder %s34, 8
    %p308 = por %p306, %p307
    %p310 = scmp.ne.s32.totalorder %s293, %s309
    %p311 = scmp.eq.s32.totalorder %s34, 0
    %p312 = por %p310, %p311
    %p313 = scmp.le.s32.totalorder 1, %s28
    %p314 = scmp.lt.s32.totalorder %s28, 10
    %p315 = pnand %p313, %p314
    %p316 = pneg %p315
    // Predicated region
    $region9: #{self_cross_attention_forward.1} parent=5 // pred_check
      _
    $region10: #{self_cross_attention_forward.1} parent=5 // pred_check_branch
      %318 = sbr.rel (%p315) target = $region12
    $region11: #{self_cross_attention_forward.1} parent=5 // pred_region
      %s319 = ssub.s32 %s28, 1
      // Predicated region
      $region13: #{self_cross_attention_forward.1} parent=11 // pred_check
        %p320 = pneg %p151
      $region14: #{self_cross_attention_forward.1} parent=11 // pred_check_branch
        %322 = sbr.rel (%p320) target = $region16
      $region15: #{self_cross_attention_forward.1} parent=11 // pred_region
        _
      $region16: #{self_cross_attention_forward.1} parent=11 // pred_fallthru
        _
      // Predicated region
      $region17: #{self_cross_attention_forward.1} parent=11 // pred_check
        %p323 = pneg %p172
      $region18: #{self_cross_attention_forward.1} parent=11 // pred_check_branch
        %325 = sbr.rel (%p323) target = $region20
      $region19: #{self_cross_attention_forward.1} parent=11 // pred_region
        _
      $region20: #{self_cross_attention_forward.1} parent=11 // pred_fallthru
        _
      // Predicated region
      $region21: #{self_cross_attention_forward.1} parent=11 // pred_check
        %p326 = pneg %p193
      $region22: #{self_cross_attention_forward.1} parent=11 // pred_check_branch
        %328 = sbr.rel (%p326) target = $region24
      $region23: #{self_cross_attention_forward.1} parent=11 // pred_region
        _
      $region24: #{self_cross_attention_forward.1} parent=11 // pred_fallthru
        _
      // Predicated region
      $region25: #{self_cross_attention_forward.1} parent=11 // pred_check
        %p329 = pneg %p214
      $region26: #{self_cross_attention_forward.1} parent=11 // pred_check_branch
        %331 = sbr.rel (%p329) target = $region28
      $region27: #{self_cross_attention_forward.1} parent=11 // pred_region
        _
      $region28: #{self_cross_attention_forward.1} parent=11 // pred_fallthru
        _
      // Predicated region
      $region29: #{self_cross_attention_forward.1} parent=11 // pred_check
        %p332 = pneg %p235
      $region30: #{self_cross_attention_forward.1} parent=11 // pred_check_branch
        %334 = sbr.rel (%p332) target = $region32
      $region31: #{self_cross_attention_forward.1} parent=11 // pred_region
        _
      $region32: #{self_cross_attention_forward.1} parent=11 // pred_fallthru
        _
      // Predicated region
      $region33: #{self_cross_attention_forward.1} parent=11 // pred_check
        %p335 = pneg %p256
      $region34: #{self_cross_attention_forward.1} parent=11 // pred_check_branch
        %337 = sbr.rel (%p335) target = $region36
      $region35: #{self_cross_attention_forward.1} parent=11 // pred_region
        _
      $region36: #{self_cross_attention_forward.1} parent=11 // pred_fallthru
        _
      // Predicated region
      $region37: #{self_cross_attention_forward.1} parent=11 // pred_check
        %p338 = pneg %p277
      $region38: #{self_cross_attention_forward.1} parent=11 // pred_check_branch
        %340 = sbr.rel (%p338) target = $region40
      $region39: #{self_cross_attention_forward.1} parent=11 // pred_region
        _
      $region40: #{self_cross_attention_forward.1} parent=11 // pred_fallthru
        _
    $region12: #{self_cross_attention_forward.1} parent=5 // pred_fallthru
      _
    %p341 = scmp.lt.s32.totalorder %s28, 9
    // Predicated region
    $region41: #{self_cross_attention_forward.1} parent=5 // pred_check
      %p342 = pneg %p341
    $region42: #{self_cross_attention_forward.1} parent=5 // pred_check_branch
      %344 = sbr.rel (%p342) target = $region44
    $region43: #{self_cross_attention_forward.1} parent=5 // pred_region
      // Predicated region
      $region45: #{self_cross_attention_forward.1} parent=43 // pred_check
        %p345 = pneg %p64
      $region46: #{self_cross_attention_forward.1} parent=43 // pred_check_branch
        %347 = sbr.rel (%p345) target = $region48
      $region47: #{self_cross_attention_forward.1} parent=43 // pred_region
        %s348 = sld [smem:[#allocation4 + %s36]]
        %s349 = smul.u32 4, %s35
        %p350 = scmp.lt.s32.totalorder %s348, 2
        %s351 = scalar_select %p350, %s348, 2
        %p352 = scmp.lt.s32.totalorder %s349, 3
        %s353 = scalar_select %p352, %s349, 3
        %s354 = smul.addr %s353, 8
        %s355 = smul.addr %s351, 32
        %s356 = sadd.s32 %s354, %s355
        %s357 = smul.addr %s356, 4
        %s358 = scalar_lea.vmem %s2, %s357
        %s359 = sld [smem:[#allocation4 + %s36]]
        %s360 = smul.u32 4, %s35
      $region48: #{self_cross_attention_forward.1} parent=43 // pred_fallthru
        _
      // Predicated region
      $region49: #{self_cross_attention_forward.1} parent=43 // pred_check
        %p361 = pneg %p94
      $region50: #{self_cross_attention_forward.1} parent=43 // pred_check_branch
        %363 = sbr.rel (%p361) target = $region52
      $region51: #{self_cross_attention_forward.1} parent=43 // pred_region
        %s364 = sld [smem:[#allocation5 + %s36]]
        %s365 = smul.u32 4, %s35
        %p366 = scmp.lt.s32.totalorder %s364, 4
        %s367 = scalar_select %p366, %s364, 4
        %p368 = scmp.lt.s32.totalorder %s365, 3
        %s369 = scalar_select %p368, %s365, 3
        %s370 = smul.addr %s369, 16
        %s371 = smul.addr %s367, 64
        %s372 = sadd.s32 %s370, %s371
        %s373 = smul.addr %s372, 4
        %s374 = scalar_lea.vmem %s3, %s373
        %s375 = sld [smem:[#allocation5 + %s36]]
        %s376 = smul.u32 4, %s35
      $region52: #{self_cross_attention_forward.1} parent=43 // pred_fallthru
        _
      // Predicated region
      $region53: #{self_cross_attention_forward.1} parent=43 // pred_check
        %p377 = pneg %p124
      $region54: #{self_cross_attention_forward.1} parent=43 // pred_check_branch
        %379 = sbr.rel (%p377) target = $region56
      $region55: #{self_cross_attention_forward.1} parent=43 // pred_region
        %s380 = sld [smem:[#allocation4 + %s36]]
        %s381 = smul.u32 4, %s35
        %p382 = scmp.lt.s32.totalorder %s380, 2
        %s383 = scalar_select %p382, %s380, 2
        %p384 = scmp.lt.s32.totalorder %s381, 3
        %s385 = scalar_select %p384, %s381, 3
        %s386 = smul.addr %s385, 8
        %s387 = smul.addr %s383, 32
        %s388 = sadd.s32 %s386, %s387
        %s389 = smul.addr %s388, 8
        %s390 = scalar_lea.vmem %s4, %s389
        %s391 = sld [smem:[#allocation4 + %s36]]
        %s392 = smul.u32 4, %s35
      $region56: #{self_cross_attention_forward.1} parent=43 // pred_fallthru
        _
    $region44: #{self_cross_attention_forward.1} parent=5 // pred_fallthru
      _
    %p393 = scmp.le.s32.totalorder 1, %s28
    %p394 = scmp.lt.s32.totalorder %s28, 10
    %p395 = pnand %p393, %p394
    %p396 = pneg %p395
    // Predicated region
    $region57: #{self_cross_attention_forward.1} parent=5 // pred_check
      _
    $region58: #{self_cross_attention_forward.1} parent=5 // pred_check_branch
      %398 = sbr.rel (%p395) target = $region60
    $region59: #{self_cross_attention_forward.1} parent=5 // pred_region
      %s399 = ssub.s32 %s28, 1
      %s400 = sld [smem:[#allocation4 + %s38]]
      %s401 = smul.u32 4, %s37
      %p402 = scmp.lt.s32.totalorder %s400, 2
      %s403 = scalar_select %p402, %s400, 2
      %p404 = scmp.lt.s32.totalorder %s401, 3
      %s405 = scalar_select %p404, %s401, 3
      %s406 = smul.addr %s405, 8
      %s407 = smul.addr %s403, 32
      %s408 = sadd.s32 %s406, %s407
      %s409 = smul.addr %s408, 4
      %s410 = scalar_lea.vmem %s2, %s409
      %p411 = pneg %p70
      %p412 = pneg %p67
      %s413 = sld [smem:[#allocation5 + %s38]]
      %s414 = smul.u32 4, %s37
      %p415 = scmp.lt.s32.totalorder %s413, 4
      %s416 = scalar_select %p415, %s413, 4
      %p417 = scmp.lt.s32.totalorder %s414, 3
      %s418 = scalar_select %p417, %s414, 3
      %s419 = smul.addr %s418, 16
      %s420 = smul.addr %s416, 64
      %s421 = sadd.s32 %s419, %s420
      %s422 = smul.addr %s421, 4
      %s423 = scalar_lea.vmem %s3, %s422
      %p424 = pneg %p100
      %p425 = pneg %p97
      %s426 = sld [smem:[#allocation4 + %s38]]
      %s427 = smul.u32 4, %s37
      %p428 = scmp.lt.s32.totalorder %s426, 2
      %s429 = scalar_select %p428, %s426, 2
      %p430 = scmp.lt.s32.totalorder %s427, 3
      %s431 = scalar_select %p430, %s427, 3
      %s432 = smul.addr %s431, 8
      %s433 = smul.addr %s429, 32
      %s434 = sadd.s32 %s432, %s433
      %s435 = smul.addr %s434, 8
      %s436 = scalar_lea.vmem %s4, %s435
      %p437 = pneg %p130
      %p438 = pneg %p127
      %p439 = pneg %p151
      %p440 = pneg %p148
      %p441 = pneg %p172
      %p442 = pneg %p169
      %p443 = pneg %p193
      %p444 = pneg %p190
      %p445 = pneg %p214
      %p446 = pneg %p211
      %p447 = pneg %p235
      %p448 = pneg %p232
      %p449 = pneg %p256
      %p450 = pneg %p253
      %p451 = pneg %p277
      %p452 = pneg %p274
      %p453 = pneg %p305
      %p454 = pneg %p302
      %s455 = smul.u32 4, %s37
      %p456 = scmp.lt.s32.totalorder %s38, 8
      %s457 = scalar_select %p456, %s38, 8
      %p458 = scmp.lt.s32.totalorder %s455, 3
      %s459 = scalar_select %p458, %s455, 3
      %s460 = smul.addr %s459, 8
      %s461 = smul.addr %s457, 32
      %s462 = sadd.s32 %s460, %s461
      %s463 = smul.addr %s462, 8
      %s464 = scalar_lea.vmem %s12, %s463
      %s465 = sld [smem:[#allocation4 + %s38]]
      %s466 = smul.u32 4, %s37
      %p467 = scmp.lt.s32.totalorder %s465, 2
      %s468 = scalar_select %p467, %s465, 2
      %p469 = scmp.lt.s32.totalorder %s466, 3
      %s470 = scalar_select %p469, %s466, 3
      %s471 = smul.addr %s470, 8
      %s472 = smul.addr %s468, 32
      %s473 = sadd.s32 %s471, %s472
      %s474 = smul.addr %s473, 4
      %s475 = scalar_lea.vmem %s2, %s474
      %s476 = sld [smem:[#allocation4 + %s38]]
      %s477 = smul.u32 4, %s37
      %s478 = sld [smem:[#allocation5 + %s38]]
      %s479 = smul.u32 4, %s37
      %p480 = scmp.lt.s32.totalorder %s478, 4
      %s481 = scalar_select %p480, %s478, 4
      %p482 = scmp.lt.s32.totalorder %s479, 3
      %s483 = scalar_select %p482, %s479, 3
      %s484 = smul.addr %s483, 16
      %s485 = smul.addr %s481, 64
      %s486 = sadd.s32 %s484, %s485
      %s487 = smul.addr %s486, 4
      %s488 = scalar_lea.vmem %s3, %s487
      %s489 = sld [smem:[#allocation5 + %s38]]
      %s490 = smul.u32 4, %s37
      %s491 = sld [smem:[#allocation4 + %s38]]
      %s492 = smul.u32 4, %s37
      %p493 = scmp.lt.s32.totalorder %s491, 2
      %s494 = scalar_select %p493, %s491, 2
      %p495 = scmp.lt.s32.totalorder %s492, 3
      %s496 = scalar_select %p495, %s492, 3
      %s497 = smul.addr %s496, 8
      %s498 = smul.addr %s494, 32
      %s499 = sadd.s32 %s497, %s498
      %s500 = smul.addr %s499, 8
      %s501 = scalar_lea.vmem %s4, %s500
      %s502 = sld [smem:[#allocation4 + %s38]]
      %s503 = smul.u32 4, %s37
      %s504 = smul.u32 4, %s37
      %p505 = scmp.lt.s32.totalorder %s38, 8
      %s506 = scalar_select %p505, %s38, 8
      %p507 = scmp.lt.s32.totalorder %s504, 3
      %s508 = scalar_select %p507, %s504, 3
      %s509 = smul.addr %s508, 8
      %s510 = smul.addr %s506, 32
      %s511 = sadd.s32 %s509, %s510
      %s512 = smul.addr %s511, 8
      %s513 = scalar_lea.vmem %s12, %s512
      %s514 = smul.u32 4, %s37
      %v517 = vld [vmem:[%s5] sm:$0xff]
      %v518 = vld [vmem:[%s5 + $0x8] sm:$0xff]
      %v519 = vld [vmem:[%s5 + $0x10] sm:$0xff]
      %v520 = vld [vmem:[%s5 + $0x18] sm:$0xff]
      %v521 = vld [vmem:[%s5 + $0x20] sm:$0xff]
      %v522 = vld [vmem:[%s5 + $0x28] sm:$0xff]
      %v523 = vld [vmem:[%s5 + $0x30] sm:$0xff]
      %v524 = vld [vmem:[%s5 + $0x38] sm:$0xff]
      %v525 = vld [vmem:[%s5 + $0x40] sm:$0xff]
      %v526 = vld [vmem:[%s5 + $0x48] sm:$0xff]
      %v527 = vld [vmem:[%s5 + $0x50] sm:$0xff]
      %v528 = vld [vmem:[%s5 + $0x58] sm:$0xff]
      %v529 = vld [vmem:[%s5 + $0x60] sm:$0xff]
      %v530 = vld [vmem:[%s5 + $0x68] sm:$0xff]
      %v531 = vld [vmem:[%s5 + $0x70] sm:$0xff]
      %v532 = vld [vmem:[%s5 + $0x78] sm:$0xff]
      %v533 = vld [vmem:[%s6] sm:$0xff]
      %v534 = vld [vmem:[%s6 + $0x8] sm:$0xff]
      %v535 = vld [vmem:[%s6 + $0x10] sm:$0xff]
      %v536 = vld [vmem:[%s6 + $0x18] sm:$0xff]
      %v537 = vld [vmem:[%s7] sm:$0xff]
      %v538 = vld [vmem:[%s7 + $0x8] sm:$0xff]
      %v539 = vld [vmem:[%s7 + $0x10] sm:$0xff]
      %v540 = vld [vmem:[%s7 + $0x18] sm:$0xff]
      %v541 = vld [vmem:[%s8] sm:$0xff]
      %v542 = vld [vmem:[%s8 + $0x8] sm:$0xff]
      %v543 = vld [vmem:[%s8 + $0x10] sm:$0xff]
      %v544 = vld [vmem:[%s8 + $0x18] sm:$0xff]
      %v545 = vld [vmem:[%s8 + $0x20] sm:$0xff]
      %v546 = vld [vmem:[%s8 + $0x28] sm:$0xff]
      %v547 = vld [vmem:[%s8 + $0x30] sm:$0xff]
      %v548 = vld [vmem:[%s8 + $0x38] sm:$0xff]
      %v549 = vld [vmem:[%s9] sm:$0xff]
      %v550 = vld [vmem:[%s9 + $0x8] sm:$0xff]
      %v551 = vld [vmem:[%s9 + $0x10] sm:$0xff]
      %v552 = vld [vmem:[%s9 + $0x18] sm:$0xff]
      %v553 = vld [vmem:[%s9 + $0x20] sm:$0xff]
      %v554 = vld [vmem:[%s9 + $0x28] sm:$0xff]
      %v555 = vld [vmem:[%s9 + $0x30] sm:$0xff]
      %v556 = vld [vmem:[%s9 + $0x38] sm:$0xff]
      %v557 = vld [vmem:[%s10] sm:$0xff]
      %v558 = vld [vmem:[%s10 + $0x8] sm:$0xff]
      %v559 = vld [vmem:[%s10 + $0x10] sm:$0xff]
      %v560 = vld [vmem:[%s10 + $0x18] sm:$0xff]
      %v561 = vld [vmem:[%s11] sm:$0xff]
      %v562 = vld [vmem:[%s11 + $0x8] sm:$0xff]
      %v563 = vld [vmem:[%s11 + $0x10] sm:$0xff]
      %v564 = vld [vmem:[%s11 + $0x18] sm:$0xff]
      %vm565 = vcmask 1040384
      %vm566 = vsmask.f32 256
      %vm567 = vmand %vm565, %vm566
      %vm568 = vcmask 1044484
      %vm569 = vsmask.f32 4352
      %vm570 = vmand %vm568, %vm569
      %vm571 = vmor %vm570, %vm567
      %v572 = vld [vmem:[#allocation2 + $0x20] sm:$0x11]
      %v573 = vsel %vm571, 1065369472, %v572
      %574 = vst [vmem:[#allocation2 + $0x20] sm:$0x11] %v573
      %s575 = scalar_lea.vmem [#allocation2], 40
      %v576 = vld [vmem:[%s575 + $0x20] sm:$0x11]
      %v577 = vsel %vm571, 1065369472, %v576
      %578 = vst [vmem:[%s575 + $0x20] sm:$0x11] %v577
      %s579 = scalar_lea.vmem [#allocation2], 80
      %v580 = vld [vmem:[%s579 + $0x20] sm:$0x11]
      %v581 = vsel %vm571, 1065369472, %v580
      %582 = vst [vmem:[%s579 + $0x20] sm:$0x11] %v581
      %s583 = scalar_lea.vmem [#allocation2], 120
      %v584 = vld [vmem:[%s583 + $0x20] sm:$0x11]
      %v585 = vsel %vm571, 1065369472, %v584
      %586 = vst [vmem:[%s583 + $0x20] sm:$0x11] %v585
      loop: start=0, step=1, limit=4
      $region61: #{self_cross_attention_forward.1} parent=59 // loop_pre_header
        _
      $region62: #{self_cross_attention_forward.1} parent=59 // loop_header
        %s588 = sphi 0, %s592
        %p589 = scmp.ge.s32.totalorder %s588, 4
      $region63: #{self_cross_attention_forward.1} parent=59 // loop_header_branch
        %591 = sbr.rel (%p589) target = $region67
      $region64: #{self_cross_attention_forward.1} parent=59 // loop_body
        %s593 = smul.u32 %s588, 8
        %s594 = smul.addr %s593, 4
        %s595 = scalar_lea.vmem %s475, %s594
        %v596 = vld [vmem:[%s595] sm:$0xff]
        %v597 = vld [vmem:[%s595 + $0x8] sm:$0xff]
        %v598 = vld [vmem:[%s595 + $0x10] sm:$0xff]
        %v599 = vld [vmem:[%s595 + $0x18] sm:$0xff]
        %s600 = smul.u32 %s588, 16
        %s601 = smul.addr %s600, 4
        %s602 = scalar_lea.vmem %s488, %s601
        %v603 = vld [vmem:[%s602] sm:$0xff]
        %v604 = vld [vmem:[%s602 + $0x8] sm:$0xff]
        %v605 = vld [vmem:[%s602 + $0x10] sm:$0xff]
        %v606 = vld [vmem:[%s602 + $0x18] sm:$0xff]
        %v607 = vld [vmem:[%s602 + $0x20] sm:$0xff]
        %v608 = vld [vmem:[%s602 + $0x28] sm:$0xff]
        %v609 = vld [vmem:[%s602 + $0x30] sm:$0xff]
        %v610 = vld [vmem:[%s602 + $0x38] sm:$0xff]
        %s611 = smul.addr %s593, 8
        %s612 = scalar_lea.vmem %s501, %s611
        %v613 = vld [vmem:[%s612] sm:$0xff]
        %v614 = vld [vmem:[%s612 + $0x8] sm:$0xff]
        %v615 = vld [vmem:[%s612 + $0x10] sm:$0xff]
        %v616 = vld [vmem:[%s612 + $0x18] sm:$0xff]
        %v617 = vld [vmem:[%s612 + $0x20] sm:$0xff]
        %v618 = vld [vmem:[%s612 + $0x28] sm:$0xff]
        %v619 = vld [vmem:[%s612 + $0x30] sm:$0xff]
        %v620 = vld [vmem:[%s612 + $0x38] sm:$0xff]
        %v621 = vunpack.c.l.bf16 %v607
        %v622 = vunpack.c.h.bf16 %v607
        %vm623 = vcmask 64512
        %v625 = vsel %vm623, %v517, 0
        %v628 = vsel %vm623, %v518, 0
        %v631 = vsel %vm623, %v519, 0
        %v634 = vsel %vm623, %v520, 0
        %636 = vmatprep.subr.mxu0 %v622
        %637 = vmatpush1.msra.mxu0 %v621
        %638 = vmatprep.subr.mxu0 0.0
        %639 = vmatpush1.msra.mxu0 0.0
        %640 = vmatprep.subr.mxu0 0.0
        %641 = vmatpush1.msra.mxu0 0.0
        %642 = vmatprep.subr.mxu0 0.0
        %643 = vmatpush1.msra.mxu0 0.0
        %644 = vmatprep.subr.mxu0 0.0
        %645 = vmatpush1.msra.mxu0 0.0
        %646 = vmatprep.subr.mxu0 0.0
        %647 = vmatpush1.msra.mxu0 0.0
        %648 = vmatprep.subr.mxu0 0.0
        %649 = vmatpush1.msra.mxu0 0.0
        %650 = vmatprep.subr.mxu0 0.0
        %651 = vmatpush1.msra.mxu0 0.0
        %652 = vmatprep.subr.mxu0 0.0
        %653 = vmatpush1.msra.mxu0 0.0
        %654 = vmatprep.subr.mxu0 0.0
        %655 = vmatpush1.msra.mxu0 0.0
        %656 = vmatprep.subr.mxu0 0.0
        %657 = vmatpush1.msra.mxu0 0.0
        %658 = vmatprep.subr.mxu0 0.0
        %659 = vmatpush1.msra.mxu0 0.0
        %660 = vmatprep.subr.mxu0 0.0
        %661 = vmatpush1.msra.mxu0 0.0
        %662 = vmatprep.subr.mxu0 0.0
        %663 = vmatpush1.msra.mxu0 0.0
        %664 = vmatprep.subr.mxu0 0.0
        %665 = vmatpush1.msra.mxu0 0.0
        %666 = vmatprep.subr.mxu0 0.0
        %667 = vmatpush1.msra.mxu0 0.0
        %668 = vmatprep.subr.mxu0 0.0
        %669 = vmatpush1.msra.mxu0 0.0
        %670 = vmatprep.subr.mxu0 0.0
        %671 = vmatpush1.msra.mxu0 0.0
        %672 = vmatprep.subr.mxu0 0.0
        %673 = vmatpush1.msra.mxu0 0.0
        %674 = vmatprep.subr.mxu0 0.0
        %675 = vmatpush1.msra.mxu0 0.0
        %676 = vmatprep.subr.mxu0 0.0
        %677 = vmatpush1.msra.mxu0 0.0
        %678 = vmatprep.subr.mxu0 0.0
        %679 = vmatpush1.msra.mxu0 0.0
        %680 = vmatprep.subr.mxu0 0.0
        %681 = vmatpush1.msra.mxu0 0.0
        %682 = vmatprep.subr.mxu0 0.0
        %683 = vmatpush1.msra.mxu0 0.0
        %684 = vmatprep.subr.mxu0 0.0
        %685 = vmatpush1.msra.mxu0 0.0
        %686 = vmatprep.subr.mxu0 0.0
        %687 = vmatpush1.msra.mxu0 0.0
        %688 = vmatprep.subr.mxu0 0.0
        %689 = vmatpush1.msra.mxu0 0.0
        %690 = vmatprep.subr.mxu0 0.0
        %691 = vmatpush1.msra.mxu0 0.0
        %692 = vmatprep.subr.mxu0 0.0
        %693 = vmatpush1.msra.mxu0 0.0
        %694 = vmatprep.subr.mxu0 0.0
        %695 = vmatpush1.msra.mxu0 0.0
        %696 = vmatprep.subr.mxu0 0.0
        %697 = vmatpush1.msra.mxu0 0.0
        %698 = vmatprep.subr.mxu0 0.0
        %699 = vmatpush1.msra.mxu0 0.0
        %700 = vmatprep.mubr.f32.mxu0 0.0
        %701 = vmatmul.mubr.f32.gmra.mrb[0].mxu0 %v625
        %v702 = vpop.f32.mrb[0].mxu0
        %v703 = vadd.f32 0.0, %v702
        %v704 = vpop.f32.mrb[0].mxu0
        %v705 = vadd.f32 0.0, %v704
        %706 = vmatprep.mubr.f32.mxu0 0.0
        %707 = vmatmul.mubr.f32.gmra.mrb[0].mxu0 %v628
        %v708 = vpop.f32.mrb[0].mxu0
        %v709 = vadd.f32 0.0, %v708
        %v710 = vpop.f32.mrb[0].mxu0
        %v711 = vadd.f32 0.0, %v710
        %712 = vmatprep.mubr.f32.mxu0 0.0
        %713 = vmatmul.mubr.f32.gmra.mrb[0].mxu0 %v631
        %v714 = vpop.f32.mrb[0].mxu0
        %v715 = vadd.f32 0.0, %v714
        %v716 = vpop.f32.mrb[0].mxu0
        %v717 = vadd.f32 0.0, %v716
        %718 = vmatprep.mubr.f32.mxu0 0.0
        %719 = vmatmul.mubr.f32.gmra.mrb[0].mxu0 %v634
        %v720 = vpop.f32.mrb[0].mxu0
        %v721 = vadd.f32 0.0, %v720
        %v722 = vpop.f32.mrb[0].mxu0
        %v723 = vadd.f32 0.0, %v722
        %724 = vdwg.mxu0
        %v725 = vpack.c.bf16 %v709, %v703
        %v726 = vpack.c.bf16 %v711, %v705
        %v727 = vpack.c.bf16 %v721, %v715
        %v728 = vpack.c.bf16 %v723, %v717
        %v733 = vunpack.c.l.b16 %v725
        %v734 = vunpack.c.l.b16 %v726
        %v735 = vunpack.c.h.b16 %v725
        %v736 = vunpack.c.h.b16 %v726
        %v737 = vunpack.c.l.b16 %v727
        %v738 = vunpack.c.l.b16 %v728
        %v739 = vunpack.c.h.b16 %v727
        %v740 = vunpack.c.h.b16 %v728
        %v741 = vpack.c.b16 %v734, %v733
        %v742 = vpack.c.b16 %v736, %v735
        %v743 = vpack.c.b16 %v738, %v737
        %v744 = vpack.c.b16 %v740, %v739
        %749 = vst [vmem:[#allocation2] sm:$0xff] %v741
        %750 = vst [vmem:[#allocation2 + $0x8] sm:$0xff] %v742
        %751 = vst [vmem:[#allocation2 + $0x10] sm:$0xff] %v743
        %752 = vst [vmem:[#allocation2 + $0x18] sm:$0xff] %v744
        %v753 = vunpack.c.l.bf16 %v608
        %v754 = vunpack.c.h.bf16 %v608
        %v756 = vsel %vm623, %v521, 0
        %v759 = vsel %vm623, %v522, 0
        %v762 = vsel %vm623, %v523, 0
        %v765 = vsel %vm623, %v524, 0
        %767 = vmatprep.subr.mxu0 %v754
        %768 = vmatpush1.msra.mxu0 %v753
        %769 = vmatprep.subr.mxu0 0.0
        %770 = vmatpush1.msra.mxu0 0.0
        %771 = vmatprep.subr.mxu0 0.0
        %772 = vmatpush1.msra.mxu0 0.0
        %773 = vmatprep.subr.mxu0 0.0
        %774 = vmatpush1.msra.mxu0 0.0
        %775 = vmatprep.subr.mxu0 0.0
        %776 = vmatpush1.msra.mxu0 0.0
        %777 = vmatprep.subr.mxu0 0.0
        %778 = vmatpush1.msra.mxu0 0.0
        %779 = vmatprep.subr.mxu0 0.0
        %780 = vmatpush1.msra.mxu0 0.0
        %781 = vmatprep.subr.mxu0 0.0
        %782 = vmatpush1.msra.mxu0 0.0
        %783 = vmatprep.subr.mxu0 0.0
        %784 = vmatpush1.msra.mxu0 0.0
        %785 = vmatprep.subr.mxu0 0.0
        %786 = vmatpush1.msra.mxu0 0.0
        %787 = vmatprep.subr.mxu0 0.0
        %788 = vmatpush1.msra.mxu0 0.0
        %789 = vmatprep.subr.mxu0 0.0
        %790 = vmatpush1.msra.mxu0 0.0
        %791 = vmatprep.subr.mxu0 0.0
        %792 = vmatpush1.msra.mxu0 0.0
        %793 = vmatprep.subr.mxu0 0.0
        %794 = vmatpush1.msra.mxu0 0.0
        %795 = vmatprep.subr.mxu0 0.0
        %796 = vmatpush1.msra.mxu0 0.0
        %797 = vmatprep.subr.mxu0 0.0
        %798 = vmatpush1.msra.mxu0 0.0
        %799 = vmatprep.subr.mxu0 0.0
        %800 = vmatpush1.msra.mxu0 0.0
        %801 = vmatprep.subr.mxu0 0.0
        %802 = vmatpush1.msra.mxu0 0.0
        %803 = vmatprep.subr.mxu0 0.0
        %804 = vmatpush1.msra.mxu0 0.0
        %805 = vmatprep.subr.mxu0 0.0
        %806 = vmatpush1.msra.mxu0 0.0
        %807 = vmatprep.subr.mxu0 0.0
        %808 = vmatpush1.msra.mxu0 0.0
        %809 = vmatprep.subr.mxu0 0.0
        %810 = vmatpush1.msra.mxu0 0.0
        %811 = vmatprep.subr.mxu0 0.0
        %812 = vmatpush1.msra.mxu0 0.0
        %813 = vmatprep.subr.mxu0 0.0
        %814 = vmatpush1.msra.mxu0 0.0
        %815 = vmatprep.subr.mxu0 0.0
        %816 = vmatpush1.msra.mxu0 0.0
        %817 = vmatprep.subr.mxu0 0.0
        %818 = vmatpush1.msra.mxu0 0.0
        %819 = vmatprep.subr.mxu0 0.0
        %820 = vmatpush1.msra.mxu0 0.0
        %821 = vmatprep.subr.mxu0 0.0
        %822 = vmatpush1.msra.mxu0 0.0
        %823 = vmatprep.subr.mxu0 0.0
        %824 = vmatpush1.msra.mxu0 0.0
        %825 = vmatprep.subr.mxu0 0.0
        %826 = vmatpush1.msra.mxu0 0.0
        %827 = vmatprep.subr.mxu0 0.0
        %828 = vmatpush1.msra.mxu0 0.0
        %829 = vmatprep.subr.mxu0 0.0
        %830 = vmatpush1.msra.mxu0 0.0
        %831 = vmatprep.mubr.f32.mxu0 0.0
        %832 = vmatmul.mubr.f32.gmra.mrb[0].mxu0 %v756
        %v833 = vpop.f32.mrb[0].mxu0
        %v834 = vadd.f32 0.0, %v833
        %v835 = vpop.f32.mrb[0].mxu0
        %v836 = vadd.f32 0.0, %v835
        %837 = vmatprep.mubr.f32.mxu0 0.0
        %838 = vmatmul.mubr.f32.gmra.mrb[0].mxu0 %v759
        %v839 = vpop.f32.mrb[0].mxu0
        %v840 = vadd.f32 0.0, %v839
        %v841 = vpop.f32.mrb[0].mxu0
        %v842 = vadd.f32 0.0, %v841
        %843 = vmatprep.mubr.f32.mxu0 0.0
        %844 = vmatmul.mubr.f32.gmra.mrb[0].mxu0 %v762
        %v845 = vpop.f32.mrb[0].mxu0
        %v846 = vadd.f32 0.0, %v845
        %v847 = vpop.f32.mrb[0].mxu0
        %v848 = vadd.f32 0.0, %v847
        %849 = vmatprep.mubr.f32.mxu0 0.0
        %850 = vmatmul.mubr.f32.gmra.mrb[0].mxu0 %v765
        %v851 = vpop.f32.mrb[0].mxu0
        %v852 = vadd.f32 0.0, %v851
        %v853 = vpop.f32.mrb[0].mxu0
        %v854 = vadd.f32 0.0, %v853
        %855 = vdwg.mxu0
        %v856 = vpack.c.bf16 %v840, %v834
        %v857 = vpack.c.bf16 %v842, %v836
        %v858 = vpack.c.bf16 %v852, %v846
        %v859 = vpack.c.bf16 %v854, %v848
        %v864 = vunpack.c.l.b16 %v856
        %v865 = vunpack.c.l.b16 %v857
        %v866 = vunpack.c.h.b16 %v856
        %v867 = vunpack.c.h.b16 %v857
        %v868 = vunpack.c.l.b16 %v858
        %v869 = vunpack.c.l.b16 %v859
        %v870 = vunpack.c.h.b16 %v858
        %v871 = vunpack.c.h.b16 %v859
        %v872 = vpack.c.b16 %v865, %v864
        %v873 = vpack.c.b16 %v867, %v866
        %v874 = vpack.c.b16 %v869, %v868
        %v875 = vpack.c.b16 %v871, %v870
        %880 = vst [vmem:[%s575] sm:$0xff] %v872
        %881 = vst [vmem:[%s575 + $0x8] sm:$0xff] %v873
        %882 = vst [vmem:[%s575 + $0x10] sm:$0xff] %v874
        %883 = vst [vmem:[%s575 + $0x18] sm:$0xff] %v875
        %v884 = vunpack.c.l.bf16 %v609
        %v885 = vunpack.c.h.bf16 %v609
        %v887 = vsel %vm623, %v525, 0
        %v890 = vsel %vm623, %v526, 0
        %v893 = vsel %vm623, %v527, 0
        %v896 = vsel %vm623, %v528, 0
        %898 = vmatprep.subr.mxu0 %v885
        %899 = vmatpush1.msra.mxu0 %v884
        %900 = vmatprep.subr.mxu0 0.0
        %901 = vmatpush1.msra.mxu0 0.0
        %902 = vmatprep.subr.mxu0 0.0
        %903 = vmatpush1.msra.mxu0 0.0
        %904 = vmatprep.subr.mxu0 0.0
        %905 = vmatpush1.msra.mxu0 0.0
        %906 = vmatprep.subr.mxu0 0.0
        %907 = vmatpush1.msra.mxu0 0.0
        %908 = vmatprep.subr.mxu0 0.0
        %909 = vmatpush1.msra.mxu0 0.0
        %910 = vmatprep.subr.mxu0 0.0
        %911 = vmatpush1.msra.mxu0 0.0
        %912 = vmatprep.subr.mxu0 0.0
        %913 = vmatpush1.msra.mxu0 0.0
        %914 = vmatprep.subr.mxu0 0.0
        %915 = vmatpush1.msra.mxu0 0.0
        %916 = vmatprep.subr.mxu0 0.0
        %917 = vmatpush1.msra.mxu0 0.0
        %918 = vmatprep.subr.mxu0 0.0
        %919 = vmatpush1.msra.mxu0 0.0
        %920 = vmatprep.subr.mxu0 0.0
        %921 = vmatpush1.msra.mxu0 0.0
        %922 = vmatprep.subr.mxu0 0.0
        %923 = vmatpush1.msra.mxu0 0.0
        %924 = vmatprep.subr.mxu0 0.0
        %925 = vmatpush1.msra.mxu0 0.0
        %926 = vmatprep.subr.mxu0 0.0
        %927 = vmatpush1.msra.mxu0 0.0
        %928 = vmatprep.subr.mxu0 0.0
        %929 = vmatpush1.msra.mxu0 0.0
        %930 = vmatprep.subr.mxu0 0.0
        %931 = vmatpush1.msra.mxu0 0.0
        %932 = vmatprep.subr.mxu0 0.0
        %933 = vmatpush1.msra.mxu0 0.0
        %934 = vmatprep.subr.mxu0 0.0
        %935 = vmatpush1.msra.mxu0 0.0
        %936 = vmatprep.subr.mxu0 0.0
        %937 = vmatpush1.msra.mxu0 0.0
        %938 = vmatprep.subr.mxu0 0.0
        %939 = vmatpush1.msra.mxu0 0.0
        %940 = vmatprep.subr.mxu0 0.0
        %941 = vmatpush1.msra.mxu0 0.0
        %942 = vmatprep.subr.mxu0 0.0
        %943 = vmatpush1.msra.mxu0 0.0
        %944 = vmatprep.subr.mxu0 0.0
        %945 = vmatpush1.msra.mxu0 0.0
        %946 = vmatprep.subr.mxu0 0.0
        %947 = vmatpush1.msra.mxu0 0.0
        %948 = vmatprep.subr.mxu0 0.0
        %949 = vmatpush1.msra.mxu0 0.0
        %950 = vmatprep.subr.mxu0 0.0
        %951 = vmatpush1.msra.mxu0 0.0
        %952 = vmatprep.subr.mxu0 0.0
        %953 = vmatpush1.msra.mxu0 0.0
        %954 = vmatprep.subr.mxu0 0.0
        %955 = vmatpush1.msra.mxu0 0.0
        %956 = vmatprep.subr.mxu0 0.0
        %957 = vmatpush1.msra.mxu0 0.0
        %958 = vmatprep.subr.mxu0 0.0
        %959 = vmatpush1.msra.mxu0 0.0
        %960 = vmatprep.subr.mxu0 0.0
        %961 = vmatpush1.msra.mxu0 0.0
        %962 = vmatprep.mubr.f32.mxu0 0.0
        %963 = vmatmul.mubr.f32.gmra.mrb[0].mxu0 %v887
        %v964 = vpop.f32.mrb[0].mxu0
        %v965 = vadd.f32 0.0, %v964
        %v966 = vpop.f32.mrb[0].mxu0
        %v967 = vadd.f32 0.0, %v966
        %968 = vmatprep.mubr.f32.mxu0 0.0
        %969 = vmatmul.mubr.f32.gmra.mrb[0].mxu0 %v890
        %v970 = vpop.f32.mrb[0].mxu0
        %v971 = vadd.f32 0.0, %v970
        %v972 = vpop.f32.mrb[0].mxu0
        %v973 = vadd.f32 0.0, %v972
        %974 = vmatprep.mubr.f32.mxu0 0.0
        %975 = vmatmul.mubr.f32.gmra.mrb[0].mxu0 %v893
        %v976 = vpop.f32.mrb[0].mxu0
        %v977 = vadd.f32 0.0, %v976
        %v978 = vpop.f32.mrb[0].mxu0
        %v979 = vadd.f32 0.0, %v978
        %980 = vmatprep.mubr.f32.mxu0 0.0
        %981 = vmatmul.mubr.f32.gmra.mrb[0].mxu0 %v896
        %v982 = vpop.f32.mrb[0].mxu0
        %v983 = vadd.f32 0.0, %v982
        %v984 = vpop.f32.mrb[0].mxu0
        %v985 = vadd.f32 0.0, %v984
        %986 = vdwg.mxu0
        %v987 = vpack.c.bf16 %v971, %v965
        %v988 = vpack.c.bf16 %v973, %v967
        %v989 = vpack.c.bf16 %v983, %v977
        %v990 = vpack.c.bf16 %v985, %v979
        %v995 = vunpack.c.l.b16 %v987
        %v996 = vunpack.c.l.b16 %v988
        %v997 = vunpack.c.h.b16 %v987
        %v998 = vunpack.c.h.b16 %v988
        %v999 = vunpack.c.l.b16 %v989
        %v1000 = vunpack.c.l.b16 %v990
        %v1001 = vunpack.c.h.b16 %v989
        %v1002 = vunpack.c.h.b16 %v990
        %v1003 = vpack.c.b16 %v996, %v995
        %v1004 = vpack.c.b16 %v998, %v997
        %v1005 = vpack.c.b16 %v1000, %v999
        %v1006 = vpack.c.b16 %v1002, %v1001
        %1011 = vst [vmem:[%s579] sm:$0xff] %v1003
        %1012 = vst [vmem:[%s579 + $0x8] sm:$0xff] %v1004
        %1013 = vst [vmem:[%s579 + $0x10] sm:$0xff] %v1005
        %1014 = vst [vmem:[%s579 + $0x18] sm:$0xff] %v1006
        %v1015 = vunpack.c.l.bf16 %v610
        %v1016 = vunpack.c.h.bf16 %v610
        %v1018 = vsel %vm623, %v529, 0
        %v1021 = vsel %vm623, %v530, 0
        %v1024 = vsel %vm623, %v531, 0
        %v1027 = vsel %vm623, %v532, 0
        %1029 = vmatprep.subr.mxu0 %v1016
        %1030 = vmatpush1.msra.mxu0 %v1015
        %1031 = vmatprep.subr.mxu0 0.0
        %1032 = vmatpush1.msra.mxu0 0.0
        %1033 = vmatprep.subr.mxu0 0.0
        %1034 = vmatpush1.msra.mxu0 0.0
        %1035 = vmatprep.subr.mxu0 0.0
        %1036 = vmatpush1.msra.mxu0 0.0
        %1037 = vmatprep.subr.mxu0 0.0
        %1038 = vmatpush1.msra.mxu0 0.0
        %1039 = vmatprep.subr.mxu0 0.0
        %1040 = vmatpush1.msra.mxu0 0.0
        %1041 = vmatprep.subr.mxu0 0.0
        %1042 = vmatpush1.msra.mxu0 0.0
        %1043 = vmatprep.subr.mxu0 0.0
        %1044 = vmatpush1.msra.mxu0 0.0
        %1045 = vmatprep.subr.mxu0 0.0
        %1046 = vmatpush1.msra.mxu0 0.0
        %1047 = vmatprep.subr.mxu0 0.0
        %1048 = vmatpush1.msra.mxu0 0.0
        %1049 = vmatprep.subr.mxu0 0.0
        %1050 = vmatpush1.msra.mxu0 0.0
        %1051 = vmatprep.subr.mxu0 0.0
        %1052 = vmatpush1.msra.mxu0 0.0
        %1053 = vmatprep.subr.mxu0 0.0
        %1054 = vmatpush1.msra.mxu0 0.0
        %1055 = vmatprep.subr.mxu0 0.0
        %1056 = vmatpush1.msra.mxu0 0.0
        %1057 = vmatprep.subr.mxu0 0.0
        %1058 = vmatpush1.msra.mxu0 0.0
        %1059 = vmatprep.subr.mxu0 0.0
        %1060 = vmatpush1.msra.mxu0 0.0
        %1061 = vmatprep.subr.mxu0 0.0
        %1062 = vmatpush1.msra.mxu0 0.0
        %1063 = vmatprep.subr.mxu0 0.0
        %1064 = vmatpush1.msra.mxu0 0.0
        %1065 = vmatprep.subr.mxu0 0.0
        %1066 = vmatpush1.msra.mxu0 0.0
        %1067 = vmatprep.subr.mxu0 0.0
        %1068 = vmatpush1.msra.mxu0 0.0
        %1069 = vmatprep.subr.mxu0 0.0
        %1070 = vmatpush1.msra.mxu0 0.0
        %1071 = vmatprep.subr.mxu0 0.0
        %1072 = vmatpush1.msra.mxu0 0.0
        %1073 = vmatprep.subr.mxu0 0.0
        %1074 = vmatpush1.msra.mxu0 0.0
        %1075 = vmatprep.subr.mxu0 0.0
        %1076 = vmatpush1.msra.mxu0 0.0
        %1077 = vmatprep.subr.mxu0 0.0
        %1078 = vmatpush1.msra.mxu0 0.0
        %1079 = vmatprep.subr.mxu0 0.0
        %1080 = vmatpush1.msra.mxu0 0.0
        %1081 = vmatprep.subr.mxu0 0.0
        %1082 = vmatpush1.msra.mxu0 0.0
        %1083 = vmatprep.subr.mxu0 0.0
        %1084 = vmatpush1.msra.mxu0 0.0
        %1085 = vmatprep.subr.mxu0 0.0
        %1086 = vmatpush1.msra.mxu0 0.0
        %1087 = vmatprep.subr.mxu0 0.0
        %1088 = vmatpush1.msra.mxu0 0.0
        %1089 = vmatprep.subr.mxu0 0.0
        %1090 = vmatpush1.msra.mxu0 0.0
        %1091 = vmatprep.subr.mxu0 0.0
        %1092 = vmatpush1.msra.mxu0 0.0
        %1093 = vmatprep.mubr.f32.mxu0 0.0
        %1094 = vmatmul.mubr.f32.gmra.mrb[0].mxu0 %v1018
        %v1095 = vpop.f32.mrb[0].mxu0
        %v1096 = vadd.f32 0.0, %v1095
        %v1097 = vpop.f32.mrb[0].mxu0
        %v1098 = vadd.f32 0.0, %v1097
        %1099 = vmatprep.mubr.f32.mxu0 0.0
        %1100 = vmatmul.mubr.f32.gmra.mrb[0].mxu0 %v1021
        %v1101 = vpop.f32.mrb[0].mxu0
        %v1102 = vadd.f32 0.0, %v1101
        %v1103 = vpop.f32.mrb[0].mxu0
        %v1104 = vadd.f32 0.0, %v1103
        %1105 = vmatprep.mubr.f32.mxu0 0.0
        %1106 = vmatmul.mubr.f32.gmra.mrb[0].mxu0 %v1024
        %v1107 = vpop.f32.mrb[0].mxu0
        %v1108 = vadd.f32 0.0, %v1107
        %v1109 = vpop.f32.mrb[0].mxu0
        %v1110 = vadd.f32 0.0, %v1109
        %1111 = vmatprep.mubr.f32.mxu0 0.0
        %1112 = vmatmul.mubr.f32.gmra.mrb[0].mxu0 %v1027
        %v1113 = vpop.f32.mrb[0].mxu0
        %v1114 = vadd.f32 0.0, %v1113
        %v1115 = vpop.f32.mrb[0].mxu0
        %v1116 = vadd.f32 0.0, %v1115
        %1117 = vdwg.mxu0
        %v1118 = vpack.c.bf16 %v1102, %v1096
        %v1119 = vpack.c.bf16 %v1104, %v1098
        %v1120 = vpack.c.bf16 %v1114, %v1108
        %v1121 = vpack.c.bf16 %v1116, %v1110
        %v1126 = vunpack.c.l.b16 %v1118
        %v1127 = vunpack.c.l.b16 %v1119
        %v1128 = vunpack.c.h.b16 %v1118
        %v1129 = vunpack.c.h.b16 %v1119
        %v1130 = vunpack.c.l.b16 %v1120
        %v1131 = vunpack.c.l.b16 %v1121
        %v1132 = vunpack.c.h.b16 %v1120
        %v1133 = vunpack.c.h.b16 %v1121
        %v1134 = vpack.c.b16 %v1127, %v1126
        %v1135 = vpack.c.b16 %v1129, %v1128
        %v1136 = vpack.c.b16 %v1131, %v1130
        %v1137 = vpack.c.b16 %v1133, %v1132
        %1142 = vst [vmem:[%s583] sm:$0xff] %v1134
        %1143 = vst [vmem:[%s583 + $0x8] sm:$0xff] %v1135
        %1144 = vst [vmem:[%s583 + $0x10] sm:$0xff] %v1136
        %1145 = vst [vmem:[%s583 + $0x18] sm:$0xff] %v1137
        %1146 = vxpose.xlu0.c.b16.start [1/8] %v596, 128
        %1147 = vxpose.xlu0.c.b16.cont [2/8] 0, 128
        %1148 = vxpose.xlu0.c.b16.cont [3/8] 0, 128
        %1149 = vxpose.xlu0.c.b16.cont [4/8] 0, 128
        %1150 = vxpose.xlu0.c.b16.cont [5/8] 0, 128
        %1151 = vxpose.xlu0.c.b16.cont [6/8] 0, 128
        %1152 = vxpose.xlu0.c.b16.cont [7/8] 0, 128
        %1153 = vxpose.xlu0.c.b16.end [8/8] 0, 128
        %v1154 = vpop.trf.xlu0
        %v1155 = vpop.trf.xlu0
        %v1156 = vpop.trf.xlu0
        %v1157 = vpop.trf.xlu0
        %v1158 = vpop.trf.xlu0
        %v1159 = vpop.trf.xlu0
        %v1160 = vpop.trf.xlu0
        %v1161 = vpop.trf.xlu0
        %v1163 = vunpack.c.l.b16 %v603
        %v1164 = vunpack.c.h.b16 %v603
        %v1165 = vpack.c.b16 %v1163, %v1163
        %v1166 = vpack.c.b16 %v1164, %v1164
        %v1168 = vsel %vm623, %v1154, 0
        %v1171 = vsel %vm623, %v1155, 0
        %v1174 = vsel %vm623, %v1156, 0
        %v1177 = vsel %vm623, %v1157, 0
        %v1180 = vsel %vm623, %v1158, 0
        %v1183 = vsel %vm623, %v1159, 0
        %v1186 = vsel %vm623, %v1160, 0
        %v1189 = vsel %vm623, %v1161, 0
        %vm1191 = vcmask 1043456
        %v1193 = vsel %vm1191, %v1165, 0
        %v1196 = vsel %vm1191, %v1166, 0
        %1198 = vmatprep.subr.bf16.mxu0 %v1196
        %1199 = vmatpush1.bf16.msra.mxu0 %v1193
        %1200 = vmatprep.subr.bf16.mxu0 0
        %1201 = vmatpush1.bf16.msra.mxu0 0
        %1202 = vmatprep.subr.bf16.mxu0 0
        %1203 = vmatpush1.bf16.msra.mxu0 0
        %1204 = vmatprep.subr.bf16.mxu0 0
        %1205 = vmatpush1.bf16.msra.mxu0 0
        %1206 = vmatprep.subr.bf16.mxu0 0
        %1207 = vmatpush1.bf16.msra.mxu0 0
        %1208 = vmatprep.subr.bf16.mxu0 0
        %1209 = vmatpush1.bf16.msra.mxu0 0
        %1210 = vmatprep.subr.bf16.mxu0 0
        %1211 = vmatpush1.bf16.msra.mxu0 0
        %1212 = vmatprep.subr.bf16.mxu0 0
        %1213 = vmatpush1.bf16.msra.mxu0 0
        %1214 = vmatprep.subr.bf16.mxu0 0
        %1215 = vmatpush1.bf16.msra.mxu0 0
        %1216 = vmatprep.subr.bf16.mxu0 0
        %1217 = vmatpush1.bf16.msra.mxu0 0
        %1218 = vmatprep.subr.bf16.mxu0 0
        %1219 = vmatpush1.bf16.msra.mxu0 0
        %1220 = vmatprep.subr.bf16.mxu0 0
        %1221 = vmatpush1.bf16.msra.mxu0 0
        %1222 = vmatprep.subr.bf16.mxu0 0
        %1223 = vmatpush1.bf16.msra.mxu0 0
        %1224 = vmatprep.subr.bf16.mxu0 0
        %1225 = vmatpush1.bf16.msra.mxu0 0
        %1226 = vmatprep.subr.bf16.mxu0 0
        %1227 = vmatpush1.bf16.msra.mxu0 0
        %1228 = vmatprep.subr.bf16.mxu0 0
        %1229 = vmatpush1.bf16.msra.mxu0 0
        %1230 = vmatprep.mubr.bf16.mxu0 0
        %1231 = vmatmul.mubr.bf16.gmra.mrb[0].mxu0 %v1168
        %v1232 = vpop.f32.mrb[0].mxu0
        %v1233 = vadd.f32 0.0, %v1232
        %v1234 = vpop.f32.mrb[0].mxu0
        %v1235 = vadd.f32 0.0, %v1234
        %v1236 = vpop.f32.mrb[0].mxu0
        %v1237 = vadd.f32 0.0, %v1236
        %v1238 = vpop.f32.mrb[0].mxu0
        %v1239 = vadd.f32 0.0, %v1238
        %1240 = vmatprep.mubr.bf16.mxu0 0
        %1241 = vmatmul.mubr.bf16.gmra.mrb[0].mxu0 %v1171
        %v1242 = vpop.f32.mrb[0].mxu0
        %v1243 = vadd.f32 0.0, %v1242
        %v1244 = vpop.f32.mrb[0].mxu0
        %v1245 = vadd.f32 0.0, %v1244
        %v1246 = vpop.f32.mrb[0].mxu0
        %v1247 = vadd.f32 0.0, %v1246
        %v1248 = vpop.f32.mrb[0].mxu0
        %v1249 = vadd.f32 0.0, %v1248
        %1250 = vmatprep.mubr.bf16.mxu0 0
        %1251 = vmatmul.mubr.bf16.gmra.mrb[0].mxu0 %v1174
        %v1252 = vpop.f32.mrb[0].mxu0
        %v1253 = vadd.f32 0.0, %v1252
        %v1254 = vpop.f32.mrb[0].mxu0
        %v1255 = vadd.f32 0.0, %v1254
        %v1256 = vpop.f32.mrb[0].mxu0
        %v1257 = vadd.f32 0.0, %v1256
        %v1258 = vpop.f32.mrb[0].mxu0
        %v1259 = vadd.f32 0.0, %v1258
        %1260 = vmatprep.mubr.bf16.mxu0 0
        %1261 = vmatmul.mubr.bf16.gmra.mrb[0].mxu0 %v1177
        %v1262 = vpop.f32.mrb[0].mxu0
        %v1263 = vadd.f32 0.0, %v1262
        %v1264 = vpop.f32.mrb[0].mxu0
        %v1265 = vadd.f32 0.0, %v1264
        %v1266 = vpop.f32.mrb[0].mxu0
        %v1267 = vadd.f32 0.0, %v1266
        %v1268 = vpop.f32.mrb[0].mxu0
        %v1269 = vadd.f32 0.0, %v1268
        %1270 = vmatprep.mubr.bf16.mxu0 0
        %1271 = vmatmul.mubr.bf16.gmra.mrb[0].mxu0 %v1180
        %v1272 = vpop.f32.mrb[0].mxu0
        %v1273 = vadd.f32 0.0, %v1272
        %v1274 = vpop.f32.mrb[0].mxu0
        %v1275 = vadd.f32 0.0, %v1274
        %v1276 = vpop.f32.mrb[0].mxu0
        %v1277 = vadd.f32 0.0, %v1276
        %v1278 = vpop.f32.mrb[0].mxu0
        %v1279 = vadd.f32 0.0, %v1278
        %1280 = vmatprep.mubr.bf16.mxu0 0
        %1281 = vmatmul.mubr.bf16.gmra.mrb[0].mxu0 %v1183
        %v1282 = vpop.f32.mrb[0].mxu0
        %v1283 = vadd.f32 0.0, %v1282
        %v1284 = vpop.f32.mrb[0].mxu0
        %v1285 = vadd.f32 0.0, %v1284
        %v1286 = vpop.f32.mrb[0].mxu0
        %v1287 = vadd.f32 0.0, %v1286
        %v1288 = vpop.f32.mrb[0].mxu0
        %v1289 = vadd.f32 0.0, %v1288
        %1290 = vmatprep.mubr.bf16.mxu0 0
        %1291 = vmatmul.mubr.bf16.gmra.mrb[0].mxu0 %v1186
        %v1292 = vpop.f32.mrb[0].mxu0
        %v1293 = vadd.f32 0.0, %v1292
        %v1294 = vpop.f32.mrb[0].mxu0
        %v1295 = vadd.f32 0.0, %v1294
        %v1296 = vpop.f32.mrb[0].mxu0
        %v1297 = vadd.f32 0.0, %v1296
        %v1298 = vpop.f32.mrb[0].mxu0
        %v1299 = vadd.f32 0.0, %v1298
        %1300 = vmatprep.mubr.bf16.mxu0 0
        %1301 = vmatmul.mubr.bf16.gmra.mrb[0].mxu0 %v1189
        %v1302 = vpop.f32.mrb[0].mxu0
        %v1303 = vadd.f32 0.0, %v1302
        %v1304 = vpop.f32.mrb[0].mxu0
        %v1305 = vadd.f32 0.0, %v1304
        %v1306 = vpop.f32.mrb[0].mxu0
        %v1307 = vadd.f32 0.0, %v1306
        %v1308 = vpop.f32.mrb[0].mxu0
        %v1309 = vadd.f32 0.0, %v1308
        %1310 = vdwg.mxu0
        %v1311 = vmax.f32 %v1233, %v1235
        %1312 = vmax.xlane.f32.xlu0 %v1311
        %v1313 = vpop.xlane.xlu0 %1312
        %v1314 = vmax.f32 %v1237, %v1239
        %1315 = vmax.xlane.f32.xlu0 %v1314
        %v1316 = vpop.xlane.xlu0 %1315
        %v1317 = vmax.f32 %v1243, %v1245
        %1318 = vmax.xlane.f32.xlu0 %v1317
        %v1319 = vpop.xlane.xlu0 %1318
        %v1320 = vmax.f32 %v1247, %v1249
        %1321 = vmax.xlane.f32.xlu0 %v1320
        %v1322 = vpop.xlane.xlu0 %1321
        %v1323 = vmax.f32 %v1253, %v1255
        %1324 = vmax.xlane.f32.xlu0 %v1323
        %v1325 = vpop.xlane.xlu0 %1324
        %v1326 = vmax.f32 %v1257, %v1259
        %1327 = vmax.xlane.f32.xlu0 %v1326
        %v1328 = vpop.xlane.xlu0 %1327
        %v1329 = vmax.f32 %v1263, %v1265
        %1330 = vmax.xlane.f32.xlu0 %v1329
        %v1331 = vpop.xlane.xlu0 %1330
        %v1332 = vmax.f32 %v1267, %v1269
        %1333 = vmax.xlane.f32.xlu0 %v1332
        %v1334 = vpop.xlane.xlu0 %1333
        %v1335 = vmax.f32 %v1273, %v1275
        %1336 = vmax.xlane.f32.xlu0 %v1335
        %v1337 = vpop.xlane.xlu0 %1336
        %v1338 = vmax.f32 %v1277, %v1279
        %1339 = vmax.xlane.f32.xlu0 %v1338
        %v1340 = vpop.xlane.xlu0 %1339
        %v1341 = vmax.f32 %v1283, %v1285
        %1342 = vmax.xlane.f32.xlu0 %v1341
        %v1343 = vpop.xlane.xlu0 %1342
        %v1344 = vmax.f32 %v1287, %v1289
        %1345 = vmax.xlane.f32.xlu0 %v1344
        %v1346 = vpop.xlane.xlu0 %1345
        %v1347 = vmax.f32 %v1293, %v1295
        %1348 = vmax.xlane.f32.xlu0 %v1347
        %v1349 = vpop.xlane.xlu0 %1348
        %v1350 = vmax.f32 %v1297, %v1299
        %1351 = vmax.xlane.f32.xlu0 %v1350
        %v1352 = vpop.xlane.xlu0 %1351
        %v1353 = vmax.f32 %v1303, %v1305
        %1354 = vmax.xlane.f32.xlu0 %v1353
        %v1355 = vpop.xlane.xlu0 %1354
        %v1356 = vmax.f32 %v1307, %v1309
        %1357 = vmax.xlane.f32.xlu0 %v1356
        %v1358 = vpop.xlane.xlu0 %1357
        %v1359 = vsub.f32 %v1233, %v1313
        %v1360 = vsub.f32 %v1235, %v1313
        %v1361 = vsub.f32 %v1237, %v1316
        %v1362 = vsub.f32 %v1239, %v1316
        %v1363 = vsub.f32 %v1243, %v1319
        %v1364 = vsub.f32 %v1245, %v1319
        %v1365 = vsub.f32 %v1247, %v1322
        %v1366 = vsub.f32 %v1249, %v1322
        %v1367 = vsub.f32 %v1253, %v1325
        %v1368 = vsub.f32 %v1255, %v1325
        %v1369 = vsub.f32 %v1257, %v1328
        %v1370 = vsub.f32 %v1259, %v1328
        %v1371 = vsub.f32 %v1263, %v1331
        %v1372 = vsub.f32 %v1265, %v1331
        %v1373 = vsub.f32 %v1267, %v1334
        %v1374 = vsub.f32 %v1269, %v1334
        %v1375 = vsub.f32 %v1273, %v1337
        %v1376 = vsub.f32 %v1275, %v1337
        %v1377 = vsub.f32 %v1277, %v1340
        %v1378 = vsub.f32 %v1279, %v1340
        %v1379 = vsub.f32 %v1283, %v1343
        %v1380 = vsub.f32 %v1285, %v1343
        %v1381 = vsub.f32 %v1287, %v1346
        %v1382 = vsub.f32 %v1289, %v1346
        %v1383 = vsub.f32 %v1293, %v1349
        %v1384 = vsub.f32 %v1295, %v1349
        %v1385 = vsub.f32 %v1297, %v1352
        %v1386 = vsub.f32 %v1299, %v1352
        %v1387 = vsub.f32 %v1303, %v1355
        %v1388 = vsub.f32 %v1305, %v1355
        %v1389 = vsub.f32 %v1307, %v1358
        %v1390 = vsub.f32 %v1309, %v1358
        %v1391 = vmul.f32 %v1359, 1.442695
        %v1392 = vpow.pop %v1391
        %v1393 = vmul.f32 %v1360, 1.442695
        %v1394 = vpow.pop %v1393
        %v1395 = vmul.f32 %v1361, 1.442695
        %v1396 = vpow.pop %v1395
        %v1397 = vmul.f32 %v1362, 1.442695
        %v1398 = vpow.pop %v1397
        %v1399 = vmul.f32 %v1363, 1.442695
        %v1400 = vpow.pop %v1399
        %v1401 = vmul.f32 %v1364, 1.442695
        %v1402 = vpow.pop %v1401
        %v1403 = vmul.f32 %v1365, 1.442695
        %v1404 = vpow.pop %v1403
        %v1405 = vmul.f32 %v1366, 1.442695
        %v1406 = vpow.pop %v1405
        %v1407 = vmul.f32 %v1367, 1.442695
        %v1408 = vpow.pop %v1407
        %v1409 = vmul.f32 %v1368, 1.442695
        %v1410 = vpow.pop %v1409
        %v1411 = vmul.f32 %v1369, 1.442695
        %v1412 = vpow.pop %v1411
        %v1413 = vmul.f32 %v1370, 1.442695
        %v1414 = vpow.pop %v1413
        %v1415 = vmul.f32 %v1371, 1.442695
        %v1416 = vpow.pop %v1415
        %v1417 = vmul.f32 %v1372, 1.442695
        %v1418 = vpow.pop %v1417
        %v1419 = vmul.f32 %v1373, 1.442695
        %v1420 = vpow.pop %v1419
        %v1421 = vmul.f32 %v1374, 1.442695
        %v1422 = vpow.pop %v1421
        %v1423 = vmul.f32 %v1375, 1.442695
        %v1424 = vpow.pop %v1423
        %v1425 = vmul.f32 %v1376, 1.442695
        %v1426 = vpow.pop %v1425
        %v1427 = vmul.f32 %v1377, 1.442695
        %v1428 = vpow.pop %v1427
        %v1429 = vmul.f32 %v1378, 1.442695
        %v1430 = vpow.pop %v1429
        %v1431 = vmul.f32 %v1379, 1.442695
        %v1432 = vpow.pop %v1431
        %v1433 = vmul.f32 %v1380, 1.442695
        %v1434 = vpow.pop %v1433
        %v1435 = vmul.f32 %v1381, 1.442695
        %v1436 = vpow.pop %v1435
        %v1437 = vmul.f32 %v1382, 1.442695
        %v1438 = vpow.pop %v1437
        %v1439 = vmul.f32 %v1383, 1.442695
        %v1440 = vpow.pop %v1439
        %v1441 = vmul.f32 %v1384, 1.442695
        %v1442 = vpow.pop %v1441
        %v1443 = vmul.f32 %v1385, 1.442695
        %v1444 = vpow.pop %v1443
        %v1445 = vmul.f32 %v1386, 1.442695
        %v1446 = vpow.pop %v1445
        %v1447 = vmul.f32 %v1387, 1.442695
        %v1448 = vpow.pop %v1447
        %v1449 = vmul.f32 %v1388, 1.442695
        %v1450 = vpow.pop %v1449
        %v1451 = vmul.f32 %v1389, 1.442695
        %v1452 = vpow.pop %v1451
        %v1453 = vmul.f32 %v1390, 1.442695
        %v1454 = vpow.pop %v1453
        %v1455 = vpack.c.bf16 %v1396, %v1392
        %v1456 = vpack.c.bf16 %v1398, %v1394
        %v1457 = vpack.c.bf16 %v1404, %v1400
        %v1458 = vpack.c.bf16 %v1406, %v1402
        %v1459 = vpack.c.bf16 %v1412, %v1408
        %v1460 = vpack.c.bf16 %v1414, %v1410
        %v1461 = vpack.c.bf16 %v1420, %v1416
        %v1462 = vpack.c.bf16 %v1422, %v1418
        %v1463 = vpack.c.bf16 %v1428, %v1424
        %v1464 = vpack.c.bf16 %v1430, %v1426
        %v1465 = vpack.c.bf16 %v1436, %v1432
        %v1466 = vpack.c.bf16 %v1438, %v1434
        %v1467 = vpack.c.bf16 %v1444, %v1440
        %v1468 = vpack.c.bf16 %v1446, %v1442
        %v1469 = vpack.c.bf16 %v1452, %v1448
        %v1470 = vpack.c.bf16 %v1454, %v1450
        %v1471 = vld [vmem:[#allocation2] sm:$0xff]
        %v1472 = vld [vmem:[#allocation2 + $0x8] sm:$0xff]
        %v1473 = vld [vmem:[#allocation2 + $0x10] sm:$0xff]
        %v1474 = vld [vmem:[#allocation2 + $0x18] sm:$0xff]
        %v1475 = vld [vmem:[#allocation2 + $0x20] sm:$0x11]
        %v1481 = vunpack.c.l.b16 %v1471
        %v1482 = vunpack.c.h.b16 %v1471
        %v1483 = vunpack.c.l.b16 %v1472
        %v1484 = vunpack.c.h.b16 %v1472
        %v1485 = vunpack.c.l.b16 %v1473
        %v1486 = vunpack.c.h.b16 %v1473
        %v1487 = vunpack.c.l.b16 %v1474
        %v1488 = vunpack.c.h.b16 %v1474
        %v1489 = vunpack.c.l.b16 %v1475
        %v1490 = vunpack.c.h.b16 %v1475
        %v1491 = vpack.c.b16 %v1483, %v1481
        %v1492 = vpack.c.b16 %v1484, %v1482
        %v1493 = vpack.c.b16 %v1487, %v1485
        %v1494 = vpack.c.b16 %v1488, %v1486
        %v1495 = vpack.c.b16 %v1489, %v1489
        %v1496 = vpack.c.b16 %v1490, %v1490
        %1503 = vmatprep.subr.bf16.mxu0 %v1456
        %1504 = vmatpush1.bf16.xpose.msra.mxu0 %v1455
        %1505 = vmatprep.subr.bf16.mxu0 %v1458
        %1506 = vmatpush1.bf16.xpose.msra.mxu0 %v1457
        %1507 = vmatprep.subr.bf16.mxu0 %v1460
        %1508 = vmatpush1.bf16.xpose.msra.mxu0 %v1459
        %1509 = vmatprep.subr.bf16.mxu0 %v1462
        %1510 = vmatpush1.bf16.xpose.msra.mxu0 %v1461
        %1511 = vmatprep.subr.bf16.mxu0 %v1464
        %1512 = vmatpush1.bf16.xpose.msra.mxu0 %v1463
        %1513 = vmatprep.subr.bf16.mxu0 %v1466
        %1514 = vmatpush1.bf16.xpose.msra.mxu0 %v1465
        %1515 = vmatprep.subr.bf16.mxu0 %v1468
        %1516 = vmatpush1.bf16.xpose.msra.mxu0 %v1467
        %1517 = vmatprep.subr.bf16.mxu0 %v1470
        %1518 = vmatpush1.bf16.xpose.msra.mxu0 %v1469
        %1519 = vmatprep.subr.bf16.mxu0 0
        %1520 = vmatpush1.bf16.xpose.msra.mxu0 0
        %1521 = vmatprep.subr.bf16.mxu0 0
        %1522 = vmatpush1.bf16.xpose.msra.mxu0 0
        %1523 = vmatprep.subr.bf16.mxu0 0
        %1524 = vmatpush1.bf16.xpose.msra.mxu0 0
        %1525 = vmatprep.subr.bf16.mxu0 0
        %1526 = vmatpush1.bf16.xpose.msra.mxu0 0
        %1527 = vmatprep.subr.bf16.mxu0 0
        %1528 = vmatpush1.bf16.xpose.msra.mxu0 0
        %1529 = vmatprep.subr.bf16.mxu0 0
        %1530 = vmatpush1.bf16.xpose.msra.mxu0 0
        %1531 = vmatprep.subr.bf16.mxu0 0
        %1532 = vmatpush1.bf16.xpose.msra.mxu0 0
        %1533 = vmatprep.subr.bf16.mxu0 0
        %1534 = vmatpush1.bf16.xpose.msra.mxu0 0
        %1535 = vmatprep.mubr.bf16.mxu0 %v1492
        %1536 = vmatmul.mubr.bf16.gmra.mrb[0].mxu0 %v1491
        %v1537 = vpop.f32.mrb[0].mxu0
        %v1538 = vadd.f32 0.0, %v1537
        %v1539 = vpop.f32.mrb[0].mxu0
        %v1540 = vpop.f32.mrb[0].mxu0
        %v1541 = vadd.f32 0.0, %v1540
        %v1542 = vpop.f32.mrb[0].mxu0
        %1543 = vmatprep.mubr.bf16.mxu0 %v1494
        %1544 = vmatmul.mubr.bf16.gmra.mrb[0].mxu0 %v1493
        %v1545 = vpop.f32.mrb[0].mxu0
        %v1546 = vadd.f32 0.0, %v1545
        %v1547 = vpop.f32.mrb[0].mxu0
        %v1548 = vpop.f32.mrb[0].mxu0
        %v1549 = vadd.f32 0.0, %v1548
        %v1550 = vpop.f32.mrb[0].mxu0
        %1551 = vmatprep.mubr.bf16.mxu0 %v1496
        %1552 = vmatmul.mubr.bf16.gmra.mrb[0].mxu0 %v1495
        %v1553 = vpop.f32.mrb[0].mxu0
        %v1554 = vadd.f32 0.0, %v1553
        %v1555 = vpop.f32.mrb[0].mxu0
        %v1556 = vpop.f32.mrb[0].mxu0
        %v1557 = vpop.f32.mrb[0].mxu0
        %1558 = vdwg.mxu0
        %v1559 = vrcp.pop %v1554
        %v1560 = vlaneseq
        %v1561 = vshrl.u32 %v1560, 7
        %v1562 = vsub.s32 0, %v1561
        %v1563 = vrot.slane %v1559, %v1562
        %v1564 = vmul.f32 %v1538, %v1563
        %v1565 = vmul.f32 %v1541, %v1563
        %v1566 = vmul.f32 %v1546, %v1563
        %v1567 = vmul.f32 %v1549, %v1563
        %v1568 = vadd.f32 %v1564, 0.0
        %v1569 = vadd.f32 %v1565, 0.0
        %v1570 = vadd.f32 %v1566, 0.0
        %v1571 = vadd.f32 %v1567, 0.0
        %1572 = vxpose.xlu0.c.b16.start [1/8] %v597, 128
        %1573 = vxpose.xlu0.c.b16.cont [2/8] 0, 128
        %1574 = vxpose.xlu0.c.b16.cont [3/8] 0, 128
        %1575 = vxpose.xlu0.c.b16.cont [4/8] 0, 128
        %1576 = vxpose.xlu0.c.b16.cont [5/8] 0, 128
        %1577 = vxpose.xlu0.c.b16.cont [6/8] 0, 128
        %1578 = vxpose.xlu0.c.b16.cont [7/8] 0, 128
        %1579 = vxpose.xlu0.c.b16.end [8/8] 0, 128
        %v1580 = vpop.trf.xlu0
        %v1581 = vpop.trf.xlu0
        %v1582 = vpop.trf.xlu0
        %v1583 = vpop.trf.xlu0
        %v1584 = vpop.trf.xlu0
        %v1585 = vpop.trf.xlu0
        %v1586 = vpop.trf.xlu0
        %v1587 = vpop.trf.xlu0
        %v1589 = vunpack.c.l.b16 %v604
        %v1590 = vunpack.c.h.b16 %v604
        %v1591 = vpack.c.b16 %v1589, %v1589
        %v1592 = vpack.c.b16 %v1590, %v1590
        %v1594 = vsel %vm623, %v1580, 0
        %v1597 = vsel %vm623, %v1581, 0
        %v1600 = vsel %vm623, %v1582, 0
        %v1603 = vsel %vm623, %v1583, 0
        %v1606 = vsel %vm623, %v1584, 0
        %v1609 = vsel %vm623, %v1585, 0
        %v1612 = vsel %vm623, %v1586, 0
        %v1615 = vsel %vm623, %v1587, 0
        %v1618 = vsel %vm1191, %v1591, 0
        %v1621 = vsel %vm1191, %v1592, 0
        %1623 = vmatprep.subr.bf16.mxu0 %v1621
        %1624 = vmatpush1.bf16.msra.mxu0 %v1618
        %1625 = vmatprep.subr.bf16.mxu0 0
        %1626 = vmatpush1.bf16.msra.mxu0 0
        %1627 = vmatprep.subr.bf16.mxu0 0
        %1628 = vmatpush1.bf16.msra.mxu0 0
        %1629 = vmatprep.subr.bf16.mxu0 0
        %1630 = vmatpush1.bf16.msra.mxu0 0
        %1631 = vmatprep.subr.bf16.mxu0 0
        %1632 = vmatpush1.bf16.msra.mxu0 0
        %1633 = vmatprep.subr.bf16.mxu0 0
        %1634 = vmatpush1.bf16.msra.mxu0 0
        %1635 = vmatprep.subr.bf16.mxu0 0
        %1636 = vmatpush1.bf16.msra.mxu0 0
        %1637 = vmatprep.subr.bf16.mxu0 0
        %1638 = vmatpush1.bf16.msra.mxu0 0
        %1639 = vmatprep.subr.bf16.mxu0 0
        %1640 = vmatpush1.bf16.msra.mxu0 0
        %1641 = vmatprep.subr.bf16.mxu0 0
        %1642 = vmatpush1.bf16.msra.mxu0 0
        %1643 = vmatprep.subr.bf16.mxu0 0
        %1644 = vmatpush1.bf16.msra.mxu0 0
        %1645 = vmatprep.subr.bf16.mxu0 0
        %1646 = vmatpush1.bf16.msra.mxu0 0
        %1647 = vmatprep.subr.bf16.mxu0 0
        %1648 = vmatpush1.bf16.msra.mxu0 0
        %1649 = vmatprep.subr.bf16.mxu0 0
        %1650 = vmatpush1.bf16.msra.mxu0 0
        %1651 = vmatprep.subr.bf16.mxu0 0
        %1652 = vmatpush1.bf16.msra.mxu0 0
        %1653 = vmatprep.subr.bf16.mxu0 0
        %1654 = vmatpush1.bf16.msra.mxu0 0
        %1655 = vmatprep.mubr.bf16.mxu0 0
        %1656 = vmatmul.mubr.bf16.gmra.mrb[0].mxu0 %v1594
        %v1657 = vpop.f32.mrb[0].mxu0
        %v1658 = vadd.f32 0.0, %v1657
        %v1659 = vpop.f32.mrb[0].mxu0
        %v1660 = vadd.f32 0.0, %v1659
        %v1661 = vpop.f32.mrb[0].mxu0
        %v1662 = vadd.f32 0.0, %v1661
        %v1663 = vpop.f32.mrb[0].mxu0
        %v1664 = vadd.f32 0.0, %v1663
        %1665 = vmatprep.mubr.bf16.mxu0 0
        %1666 = vmatmul.mubr.bf16.gmra.mrb[0].mxu0 %v1597
        %v1667 = vpop.f32.mrb[0].mxu0
        %v1668 = vadd.f32 0.0, %v1667
        %v1669 = vpop.f32.mrb[0].mxu0
        %v1670 = vadd.f32 0.0, %v1669
        %v1671 = vpop.f32.mrb[0].mxu0
        %v1672 = vadd.f32 0.0, %v1671
        %v1673 = vpop.f32.mrb[0].mxu0
        %v1674 = vadd.f32 0.0, %v1673
        %1675 = vmatprep.mubr.bf16.mxu0 0
        %1676 = vmatmul.mubr.bf16.gmra.mrb[0].mxu0 %v1600
        %v1677 = vpop.f32.mrb[0].mxu0
        %v1678 = vadd.f32 0.0, %v1677
        %v1679 = vpop.f32.mrb[0].mxu0
        %v1680 = vadd.f32 0.0, %v1679
        %v1681 = vpop.f32.mrb[0].mxu0
        %v1682 = vadd.f32 0.0, %v1681
        %v1683 = vpop.f32.mrb[0].mxu0
        %v1684 = vadd.f32 0.0, %v1683
        %1685 = vmatprep.mubr.bf16.mxu0 0
        %1686 = vmatmul.mubr.bf16.gmra.mrb[0].mxu0 %v1603
        %v1687 = vpop.f32.mrb[0].mxu0
        %v1688 = vadd.f32 0.0, %v1687
        %v1689 = vpop.f32.mrb[0].mxu0
        %v1690 = vadd.f32 0.0, %v1689
        %v1691 = vpop.f32.mrb[0].mxu0
        %v1692 = vadd.f32 0.0, %v1691
        %v1693 = vpop.f32.mrb[0].mxu0
        %v1694 = vadd.f32 0.0, %v1693
        %1695 = vmatprep.mubr.bf16.mxu0 0
        %1696 = vmatmul.mubr.bf16.gmra.mrb[0].mxu0 %v1606
        %v1697 = vpop.f32.mrb[0].mxu0
        %v1698 = vadd.f32 0.0, %v1697
        %v1699 = vpop.f32.mrb[0].mxu0
        %v1700 = vadd.f32 0.0, %v1699
        %v1701 = vpop.f32.mrb[0].mxu0
        %v1702 = vadd.f32 0.0, %v1701
        %v1703 = vpop.f32.mrb[0].mxu0
        %v1704 = vadd.f32 0.0, %v1703
        %1705 = vmatprep.mubr.bf16.mxu0 0
        %1706 = vmatmul.mubr.bf16.gmra.mrb[0].mxu0 %v1609
        %v1707 = vpop.f32.mrb[0].mxu0
        %v1708 = vadd.f32 0.0, %v1707
        %v1709 = vpop.f32.mrb[0].mxu0
        %v1710 = vadd.f32 0.0, %v1709
        %v1711 = vpop.f32.mrb[0].mxu0
        %v1712 = vadd.f32 0.0, %v1711
        %v1713 = vpop.f32.mrb[0].mxu0
        %v1714 = vadd.f32 0.0, %v1713
        %1715 = vmatprep.mubr.bf16.mxu0 0
        %1716 = vmatmul.mubr.bf16.gmra.mrb[0].mxu0 %v1612
        %v1717 = vpop.f32.mrb[0].mxu0
        %v1718 = vadd.f32 0.0, %v1717
        %v1719 = vpop.f32.mrb[0].mxu0
        %v1720 = vadd.f32 0.0, %v1719
        %v1721 = vpop.f32.mrb[0].mxu0
        %v1722 = vadd.f32 0.0, %v1721
        %v1723 = vpop.f32.mrb[0].mxu0
        %v1724 = vadd.f32 0.0, %v1723
        %1725 = vmatprep.mubr.bf16.mxu0 0
        %1726 = vmatmul.mubr.bf16.gmra.mrb[0].mxu0 %v1615
        %v1727 = vpop.f32.mrb[0].mxu0
        %v1728 = vadd.f32 0.0, %v1727
        %v1729 = vpop.f32.mrb[0].mxu0
        %v1730 = vadd.f32 0.0, %v1729
        %v1731 = vpop.f32.mrb[0].mxu0
        %v1732 = vadd.f32 0.0, %v1731
        %v1733 = vpop.f32.mrb[0].mxu0
        %v1734 = vadd.f32 0.0, %v1733
        %1735 = vdwg.mxu0
        %v1736 = vmax.f32 %v1658, %v1660
        %1737 = vmax.xlane.f32.xlu0 %v1736
        %v1738 = vpop.xlane.xlu0 %1737
        %v1739 = vmax.f32 %v1662, %v1664
        %1740 = vmax.xlane.f32.xlu0 %v1739
        %v1741 = vpop.xlane.xlu0 %1740
        %v1742 = vmax.f32 %v1668, %v1670
        %1743 = vmax.xlane.f32.xlu0 %v1742
        %v1744 = vpop.xlane.xlu0 %1743
        %v1745 = vmax.f32 %v1672, %v1674
        %1746 = vmax.xlane.f32.xlu0 %v1745
        %v1747 = vpop.xlane.xlu0 %1746
        %v1748 = vmax.f32 %v1678, %v1680
        %1749 = vmax.xlane.f32.xlu0 %v1748
        %v1750 = vpop.xlane.xlu0 %1749
        %v1751 = vmax.f32 %v1682, %v1684
        %1752 = vmax.xlane.f32.xlu0 %v1751
        %v1753 = vpop.xlane.xlu0 %1752
        %v1754 = vmax.f32 %v1688, %v1690
        %1755 = vmax.xlane.f32.xlu0 %v1754
        %v1756 = vpop.xlane.xlu0 %1755
        %v1757 = vmax.f32 %v1692, %v1694
        %1758 = vmax.xlane.f32.xlu0 %v1757
        %v1759 = vpop.xlane.xlu0 %1758
        %v1760 = vmax.f32 %v1698, %v1700
        %1761 = vmax.xlane.f32.xlu0 %v1760
        %v1762 = vpop.xlane.xlu0 %1761
        %v1763 = vmax.f32 %v1702, %v1704
        %1764 = vmax.xlane.f32.xlu0 %v1763
        %v1765 = vpop.xlane.xlu0 %1764
        %v1766 = vmax.f32 %v1708, %v1710
        %1767 = vmax.xlane.f32.xlu0 %v1766
        %v1768 = vpop.xlane.xlu0 %1767
        %v1769 = vmax.f32 %v1712, %v1714
        %1770 = vmax.xlane.f32.xlu0 %v1769
        %v1771 = vpop.xlane.xlu0 %1770
        %v1772 = vmax.f32 %v1718, %v1720
        %1773 = vmax.xlane.f32.xlu0 %v1772
        %v1774 = vpop.xlane.xlu0 %1773
        %v1775 = vmax.f32 %v1722, %v1724
        %1776 = vmax.xlane.f32.xlu0 %v1775
        %v1777 = vpop.xlane.xlu0 %1776
        %v1778 = vmax.f32 %v1728, %v1730
        %1779 = vmax.xlane.f32.xlu0 %v1778
        %v1780 = vpop.xlane.xlu0 %1779
        %v1781 = vmax.f32 %v1732, %v1734
        %1782 = vmax.xlane.f32.xlu0 %v1781
        %v1783 = vpop.xlane.xlu0 %1782
        %v1784 = vsub.f32 %v1658, %v1738
        %v1785 = vsub.f32 %v1660, %v1738
        %v1786 = vsub.f32 %v1662, %v1741
        %v1787 = vsub.f32 %v1664, %v1741
        %v1788 = vsub.f32 %v1668, %v1744
        %v1789 = vsub.f32 %v1670, %v1744
        %v1790 = vsub.f32 %v1672, %v1747
        %v1791 = vsub.f32 %v1674, %v1747
        %v1792 = vsub.f32 %v1678, %v1750
        %v1793 = vsub.f32 %v1680, %v1750
        %v1794 = vsub.f32 %v1682, %v1753
        %v1795 = vsub.f32 %v1684, %v1753
        %v1796 = vsub.f32 %v1688, %v1756
        %v1797 = vsub.f32 %v1690, %v1756
        %v1798 = vsub.f32 %v1692, %v1759
        %v1799 = vsub.f32 %v1694, %v1759
        %v1800 = vsub.f32 %v1698, %v1762
        %v1801 = vsub.f32 %v1700, %v1762
        %v1802 = vsub.f32 %v1702, %v1765
        %v1803 = vsub.f32 %v1704, %v1765
        %v1804 = vsub.f32 %v1708, %v1768
        %v1805 = vsub.f32 %v1710, %v1768
        %v1806 = vsub.f32 %v1712, %v1771
        %v1807 = vsub.f32 %v1714, %v1771
        %v1808 = vsub.f32 %v1718, %v1774
        %v1809 = vsub.f32 %v1720, %v1774
        %v1810 = vsub.f32 %v1722, %v1777
        %v1811 = vsub.f32 %v1724, %v1777
        %v1812 = vsub.f32 %v1728, %v1780
        %v1813 = vsub.f32 %v1730, %v1780
        %v1814 = vsub.f32 %v1732, %v1783
        %v1815 = vsub.f32 %v1734, %v1783
        %v1816 = vmul.f32 %v1784, 1.442695
        %v1817 = vpow.pop %v1816
        %v1818 = vmul.f32 %v1785, 1.442695
        %v1819 = vpow.pop %v1818
        %v1820 = vmul.f32 %v1786, 1.442695
        %v1821 = vpow.pop %v1820
        %v1822 = vmul.f32 %v1787, 1.442695
        %v1823 = vpow.pop %v1822
        %v1824 = vmul.f32 %v1788, 1.442695
        %v1825 = vpow.pop %v1824
        %v1826 = vmul.f32 %v1789, 1.442695
        %v1827 = vpow.pop %v1826
        %v1828 = vmul.f32 %v1790, 1.442695
        %v1829 = vpow.pop %v1828
        %v1830 = vmul.f32 %v1791, 1.442695
        %v1831 = vpow.pop %v1830
        %v1832 = vmul.f32 %v1792, 1.442695
        %v1833 = vpow.pop %v1832
        %v1834 = vmul.f32 %v1793, 1.442695
        %v1835 = vpow.pop %v1834
        %v1836 = vmul.f32 %v1794, 1.442695
        %v1837 = vpow.pop %v1836
        %v1838 = vmul.f32 %v1795, 1.442695
        %v1839 = vpow.pop %v1838
        %v1840 = vmul.f32 %v1796, 1.442695
        %v1841 = vpow.pop %v1840
        %v1842 = vmul.f32 %v1797, 1.442695
        %v1843 = vpow.pop %v1842
        %v1844 = vmul.f32 %v1798, 1.442695
        %v1845 = vpow.pop %v1844
        %v1846 = vmul.f32 %v1799, 1.442695
        %v1847 = vpow.pop %v1846
        %v1848 = vmul.f32 %v1800, 1.442695
        %v1849 = vpow.pop %v1848
        %v1850 = vmul.f32 %v1801, 1.442695
        %v1851 = vpow.pop %v1850
        %v1852 = vmul.f32 %v1802, 1.442695
        %v1853 = vpow.pop %v1852
        %v1854 = vmul.f32 %v1803, 1.442695
        %v1855 = vpow.pop %v1854
        %v1856 = vmul.f32 %v1804, 1.442695
        %v1857 = vpow.pop %v1856
        %v1858 = vmul.f32 %v1805, 1.442695
        %v1859 = vpow.pop %v1858
        %v1860 = vmul.f32 %v1806, 1.442695
        %v1861 = vpow.pop %v1860
        %v1862 = vmul.f32 %v1807, 1.442695
        %v1863 = vpow.pop %v1862
        %v1864 = vmul.f32 %v1808, 1.442695
        %v1865 = vpow.pop %v1864
        %v1866 = vmul.f32 %v1809, 1.442695
        %v1867 = vpow.pop %v1866
        %v1868 = vmul.f32 %v1810, 1.442695
        %v1869 = vpow.pop %v1868
        %v1870 = vmul.f32 %v1811, 1.442695
        %v1871 = vpow.pop %v1870
        %v1872 = vmul.f32 %v1812, 1.442695
        %v1873 = vpow.pop %v1872
        %v1874 = vmul.f32 %v1813, 1.442695
        %v1875 = vpow.pop %v1874
        %v1876 = vmul.f32 %v1814, 1.442695
        %v1877 = vpow.pop %v1876
        %v1878 = vmul.f32 %v1815, 1.442695
        %v1879 = vpow.pop %v1878
        %v1880 = vpack.c.bf16 %v1821, %v1817
        %v1881 = vpack.c.bf16 %v1823, %v1819
        %v1882 = vpack.c.bf16 %v1829, %v1825
        %v1883 = vpack.c.bf16 %v1831, %v1827
        %v1884 = vpack.c.bf16 %v1837, %v1833
        %v1885 = vpack.c.bf16 %v1839, %v1835
        %v1886 = vpack.c.bf16 %v1845, %v1841
        %v1887 = vpack.c.bf16 %v1847, %v1843
        %v1888 = vpack.c.bf16 %v1853, %v1849
        %v1889 = vpack.c.bf16 %v1855, %v1851
        %v1890 = vpack.c.bf16 %v1861, %v1857
        %v1891 = vpack.c.bf16 %v1863, %v1859
        %v1892 = vpack.c.bf16 %v1869, %v1865
        %v1893 = vpack.c.bf16 %v1871, %v1867
        %v1894 = vpack.c.bf16 %v1877, %v1873
        %v1895 = vpack.c.bf16 %v1879, %v1875
        %v1896 = vld [vmem:[%s575] sm:$0xff]
        %v1897 = vld [vmem:[%s575 + $0x8] sm:$0xff]
        %v1898 = vld [vmem:[%s575 + $0x10] sm:$0xff]
        %v1899 = vld [vmem:[%s575 + $0x18] sm:$0xff]
        %v1900 = vld [vmem:[%s575 + $0x20] sm:$0x11]
        %v1906 = vunpack.c.l.b16 %v1896
        %v1907 = vunpack.c.h.b16 %v1896
        %v1908 = vunpack.c.l.b16 %v1897
        %v1909 = vunpack.c.h.b16 %v1897
        %v1910 = vunpack.c.l.b16 %v1898
        %v1911 = vunpack.c.h.b16 %v1898
        %v1912 = vunpack.c.l.b16 %v1899
        %v1913 = vunpack.c.h.b16 %v1899
        %v1914 = vunpack.c.l.b16 %v1900
        %v1915 = vunpack.c.h.b16 %v1900
        %v1916 = vpack.c.b16 %v1908, %v1906
        %v1917 = vpack.c.b16 %v1909, %v1907
        %v1918 = vpack.c.b16 %v1912, %v1910
        %v1919 = vpack.c.b16 %v1913, %v1911
        %v1920 = vpack.c.b16 %v1914, %v1914
        %v1921 = vpack.c.b16 %v1915, %v1915
        %1928 = vmatprep.subr.bf16.mxu0 %v1881
        %1929 = vmatpush1.bf16.xpose.msra.mxu0 %v1880
        %1930 = vmatprep.subr.bf16.mxu0 %v1883
        %1931 = vmatpush1.bf16.xpose.msra.mxu0 %v1882
        %1932 = vmatprep.subr.bf16.mxu0 %v1885
        %1933 = vmatpush1.bf16.xpose.msra.mxu0 %v1884
        %1934 = vmatprep.subr.bf16.mxu0 %v1887
        %1935 = vmatpush1.bf16.xpose.msra.mxu0 %v1886
        %1936 = vmatprep.subr.bf16.mxu0 %v1889
        %1937 = vmatpush1.bf16.xpose.msra.mxu0 %v1888
        %1938 = vmatprep.subr.bf16.mxu0 %v1891
        %1939 = vmatpush1.bf16.xpose.msra.mxu0 %v1890
        %1940 = vmatprep.subr.bf16.mxu0 %v1893
        %1941 = vmatpush1.bf16.xpose.msra.mxu0 %v1892
        %1942 = vmatprep.subr.bf16.mxu0 %v1895
        %1943 = vmatpush1.bf16.xpose.msra.mxu0 %v1894
        %1944 = vmatprep.subr.bf16.mxu0 0
        %1945 = vmatpush1.bf16.xpose.msra.mxu0 0
        %1946 = vmatprep.subr.bf16.mxu0 0
        %1947 = vmatpush1.bf16.xpose.msra.mxu0 0
        %1948 = vmatprep.subr.bf16.mxu0 0
        %1949 = vmatpush1.bf16.xpose.msra.mxu0 0
        %1950 = vmatprep.subr.bf16.mxu0 0
        %1951 = vmatpush1.bf16.xpose.msra.mxu0 0
        %1952 = vmatprep.subr.bf16.mxu0 0
        %1953 = vmatpush1.bf16.xpose.msra.mxu0 0
        %1954 = vmatprep.subr.bf16.mxu0 0
        %1955 = vmatpush1.bf16.xpose.msra.mxu0 0
        %1956 = vmatprep.subr.bf16.mxu0 0
        %1957 = vmatpush1.bf16.xpose.msra.mxu0 0
        %1958 = vmatprep.subr.bf16.mxu0 0
        %1959 = vmatpush1.bf16.xpose.msra.mxu0 0
        %1960 = vmatprep.mubr.bf16.mxu0 %v1917
        %1961 = vmatmul.mubr.bf16.gmra.mrb[0].mxu0 %v1916
        %v1962 = vpop.f32.mrb[0].mxu0
        %v1963 = vadd.f32 0.0, %v1962
        %v1964 = vpop.f32.mrb[0].mxu0
        %v1965 = vpop.f32.mrb[0].mxu0
        %v1966 = vadd.f32 0.0, %v1965
        %v1967 = vpop.f32.mrb[0].mxu0
        %1968 = vmatprep.mubr.bf16.mxu0 %v1919
        %1969 = vmatmul.mubr.bf16.gmra.mrb[0].mxu0 %v1918
        %v1970 = vpop.f32.mrb[0].mxu0
        %v1971 = vadd.f32 0.0, %v1970
        %v1972 = vpop.f32.mrb[0].mxu0
        %v1973 = vpop.f32.mrb[0].mxu0
        %v1974 = vadd.f32 0.0, %v1973
        %v1975 = vpop.f32.mrb[0].mxu0
        %1976 = vmatprep.mubr.bf16.mxu0 %v1921
        %1977 = vmatmul.mubr.bf16.gmra.mrb[0].mxu0 %v1920
        %v1978 = vpop.f32.mrb[0].mxu0
        %v1979 = vadd.f32 0.0, %v1978
        %v1980 = vpop.f32.mrb[0].mxu0
        %v1981 = vpop.f32.mrb[0].mxu0
        %v1982 = vpop.f32.mrb[0].mxu0
        %1983 = vdwg.mxu0
        %v1984 = vrcp.pop %v1979
        %v1985 = vlaneseq
        %v1986 = vshrl.u32 %v1985, 7
        %v1987 = vsub.s32 0, %v1986
        %v1988 = vrot.slane %v1984, %v1987
        %v1989 = vmul.f32 %v1963, %v1988
        %v1990 = vmul.f32 %v1966, %v1988
        %v1991 = vmul.f32 %v1971, %v1988
        %v1992 = vmul.f32 %v1974, %v1988
        %v1993 = vadd.f32 %v1568, %v1989
        %v1994 = vadd.f32 %v1569, %v1990
        %v1995 = vadd.f32 %v1570, %v1991
        %v1996 = vadd.f32 %v1571, %v1992
        %1997 = vxpose.xlu0.c.b16.start [1/8] %v598, 128
        %1998 = vxpose.xlu0.c.b16.cont [2/8] 0, 128
        %1999 = vxpose.xlu0.c.b16.cont [3/8] 0, 128
        %2000 = vxpose.xlu0.c.b16.cont [4/8] 0, 128
        %2001 = vxpose.xlu0.c.b16.cont [5/8] 0, 128
        %2002 = vxpose.xlu0.c.b16.cont [6/8] 0, 128
        %2003 = vxpose.xlu0.c.b16.cont [7/8] 0, 128
        %2004 = vxpose.xlu0.c.b16.end [8/8] 0, 128
        %v2005 = vpop.trf.xlu0
        %v2006 = vpop.trf.xlu0
        %v2007 = vpop.trf.xlu0
        %v2008 = vpop.trf.xlu0
        %v2009 = vpop.trf.xlu0
        %v2010 = vpop.trf.xlu0
        %v2011 = vpop.trf.xlu0
        %v2012 = vpop.trf.xlu0
        %v2014 = vunpack.c.l.b16 %v605
        %v2015 = vunpack.c.h.b16 %v605
        %v2016 = vpack.c.b16 %v2014, %v2014
        %v2017 = vpack.c.b16 %v2015, %v2015
        %v2019 = vsel %vm623, %v2005, 0
        %v2022 = vsel %vm623, %v2006, 0
        %v2025 = vsel %vm623, %v2007, 0
        %v2028 = vsel %vm623, %v2008, 0
        %v2031 = vsel %vm623, %v2009, 0
        %v2034 = vsel %vm623, %v2010, 0
        %v2037 = vsel %vm623, %v2011, 0
        %v2040 = vsel %vm623, %v2012, 0
        %v2043 = vsel %vm1191, %v2016, 0
        %v2046 = vsel %vm1191, %v2017, 0
        %2048 = vmatprep.subr.bf16.mxu0 %v2046
        %2049 = vmatpush1.bf16.msra.mxu0 %v2043
        %2050 = vmatprep.subr.bf16.mxu0 0
        %2051 = vmatpush1.bf16.msra.mxu0 0
        %2052 = vmatprep.subr.bf16.mxu0 0
        %2053 = vmatpush1.bf16.msra.mxu0 0
        %2054 = vmatprep.subr.bf16.mxu0 0
        %2055 = vmatpush1.bf16.msra.mxu0 0
        %2056 = vmatprep.subr.bf16.mxu0 0
        %2057 = vmatpush1.bf16.msra.mxu0 0
        %2058 = vmatprep.subr.bf16.mxu0 0
        %2059 = vmatpush1.bf16.msra.mxu0 0
        %2060 = vmatprep.subr.bf16.mxu0 0
        %2061 = vmatpush1.bf16.msra.mxu0 0
        %2062 = vmatprep.subr.bf16.mxu0 0
        %2063 = vmatpush1.bf16.msra.mxu0 0
        %2064 = vmatprep.subr.bf16.mxu0 0
        %2065 = vmatpush1.bf16.msra.mxu0 0
        %2066 = vmatprep.subr.bf16.mxu0 0
        %2067 = vmatpush1.bf16.msra.mxu0 0
        %2068 = vmatprep.subr.bf16.mxu0 0
        %2069 = vmatpush1.bf16.msra.mxu0 0
        %2070 = vmatprep.subr.bf16.mxu0 0
        %2071 = vmatpush1.bf16.msra.mxu0 0
        %2072 = vmatprep.subr.bf16.mxu0 0
        %2073 = vmatpush1.bf16.msra.mxu0 0
        %2074 = vmatprep.subr.bf16.mxu0 0
        %2075 = vmatpush1.bf16.msra.mxu0 0
        %2076 = vmatprep.subr.bf16.mxu0 0
        %2077 = vmatpush1.bf16.msra.mxu0 0
        %2078 = vmatprep.subr.bf16.mxu0 0
        %2079 = vmatpush1.bf16.msra.mxu0 0
        %2080 = vmatprep.mubr.bf16.mxu0 0
        %2081 = vmatmul.mubr.bf16.gmra.mrb[0].mxu0 %v2019
        %v2082 = vpop.f32.mrb[0].mxu0
        %v2083 = vadd.f32 0.0, %v2082
        %v2084 = vpop.f32.mrb[0].mxu0
        %v2085 = vadd.f32 0.0, %v2084
        %v2086 = vpop.f32.mrb[0].mxu0
        %v2087 = vadd.f32 0.0, %v2086
        %v2088 = vpop.f32.mrb[0].mxu0
        %v2089 = vadd.f32 0.0, %v2088
        %2090 = vmatprep.mubr.bf16.mxu0 0
        %2091 = vmatmul.mubr.bf16.gmra.mrb[0].mxu0 %v2022
        %v2092 = vpop.f32.mrb[0].mxu0
        %v2093 = vadd.f32 0.0, %v2092
        %v2094 = vpop.f32.mrb[0].mxu0
        %v2095 = vadd.f32 0.0, %v2094
        %v2096 = vpop.f32.mrb[0].mxu0
        %v2097 = vadd.f32 0.0, %v2096
        %v2098 = vpop.f32.mrb[0].mxu0
        %v2099 = vadd.f32 0.0, %v2098
        %2100 = vmatprep.mubr.bf16.mxu0 0
        %2101 = vmatmul.mubr.bf16.gmra.mrb[0].mxu0 %v2025
        %v2102 = vpop.f32.mrb[0].mxu0
        %v2103 = vadd.f32 0.0, %v2102
        %v2104 = vpop.f32.mrb[0].mxu0
        %v2105 = vadd.f32 0.0, %v2104
        %v2106 = vpop.f32.mrb[0].mxu0
        %v2107 = vadd.f32 0.0, %v2106
        %v2108 = vpop.f32.mrb[0].mxu0
        %v2109 = vadd.f32 0.0, %v2108
        %2110 = vmatprep.mubr.bf16.mxu0 0
        %2111 = vmatmul.mubr.bf16.gmra.mrb[0].mxu0 %v2028
        %v2112 = vpop.f32.mrb[0].mxu0
        %v2113 = vadd.f32 0.0, %v2112
        %v2114 = vpop.f32.mrb[0].mxu0
        %v2115 = vadd.f32 0.0, %v2114
        %v2116 = vpop.f32.mrb[0].mxu0
        %v2117 = vadd.f32 0.0, %v2116
        %v2118 = vpop.f32.mrb[0].mxu0
        %v2119 = vadd.f32 0.0, %v2118
        %2120 = vmatprep.mubr.bf16.mxu0 0
        %2121 = vmatmul.mubr.bf16.gmra.mrb[0].mxu0 %v2031
        %v2122 = vpop.f32.mrb[0].mxu0
        %v2123 = vadd.f32 0.0, %v2122
        %v2124 = vpop.f32.mrb[0].mxu0
        %v2125 = vadd.f32 0.0, %v2124
        %v2126 = vpop.f32.mrb[0].mxu0
        %v2127 = vadd.f32 0.0, %v2126
        %v2128 = vpop.f32.mrb[0].mxu0
        %v2129 = vadd.f32 0.0, %v2128
        %2130 = vmatprep.mubr.bf16.mxu0 0
        %2131 = vmatmul.mubr.bf16.gmra.mrb[0].mxu0 %v2034
        %v2132 = vpop.f32.mrb[0].mxu0
        %v2133 = vadd.f32 0.0, %v2132
        %v2134 = vpop.f32.mrb[0].mxu0
        %v2135 = vadd.f32 0.0, %v2134
        %v2136 = vpop.f32.mrb[0].mxu0
        %v2137 = vadd.f32 0.0, %v2136
        %v2138 = vpop.f32.mrb[0].mxu0
        %v2139 = vadd.f32 0.0, %v2138
        %2140 = vmatprep.mubr.bf16.mxu0 0
        %2141 = vmatmul.mubr.bf16.gmra.mrb[0].mxu0 %v2037
        %v2142 = vpop.f32.mrb[0].mxu0
        %v2143 = vadd.f32 0.0, %v2142
        %v2144 = vpop.f32.mrb[0].mxu0
        %v2145 = vadd.f32 0.0, %v2144
        %v2146 = vpop.f32.mrb[0].mxu0
        %v2147 = vadd.f32 0.0, %v2146
        %v2148 = vpop.f32.mrb[0].mxu0
        %v2149 = vadd.f32 0.0, %v2148
        %2150 = vmatprep.mubr.bf16.mxu0 0
        %2151 = vmatmul.mubr.bf16.gmra.mrb[0].mxu0 %v2040
        %v2152 = vpop.f32.mrb[0].mxu0
        %v2153 = vadd.f32 0.0, %v2152
        %v2154 = vpop.f32.mrb[0].mxu0
        %v2155 = vadd.f32 0.0, %v2154
        %v2156 = vpop.f32.mrb[0].mxu0
        %v2157 = vadd.f32 0.0, %v2156
        %v2158 = vpop.f32.mrb[0].mxu0
        %v2159 = vadd.f32 0.0, %v2158
        %2160 = vdwg.mxu0
        %v2161 = vmax.f32 %v2083, %v2085
        %2162 = vmax.xlane.f32.xlu0 %v2161
        %v2163 = vpop.xlane.xlu0 %2162
        %v2164 = vmax.f32 %v2087, %v2089
        %2165 = vmax.xlane.f32.xlu0 %v2164
        %v2166 = vpop.xlane.xlu0 %2165
        %v2167 = vmax.f32 %v2093, %v2095
        %2168 = vmax.xlane.f32.xlu0 %v2167
        %v2169 = vpop.xlane.xlu0 %2168
        %v2170 = vmax.f32 %v2097, %v2099
        %2171 = vmax.xlane.f32.xlu0 %v2170
        %v2172 = vpop.xlane.xlu0 %2171
        %v2173 = vmax.f32 %v2103, %v2105
        %2174 = vmax.xlane.f32.xlu0 %v2173
        %v2175 = vpop.xlane.xlu0 %2174
        %v2176 = vmax.f32 %v2107, %v2109
        %2177 = vmax.xlane.f32.xlu0 %v2176
        %v2178 = vpop.xlane.xlu0 %2177
        %v2179 = vmax.f32 %v2113, %v2115
        %2180 = vmax.xlane.f32.xlu0 %v2179
        %v2181 = vpop.xlane.xlu0 %2180
        %v2182 = vmax.f32 %v2117, %v2119
        %2183 = vmax.xlane.f32.xlu0 %v2182
        %v2184 = vpop.xlane.xlu0 %2183
        %v2185 = vmax.f32 %v2123, %v2125
        %2186 = vmax.xlane.f32.xlu0 %v2185
        %v2187 = vpop.xlane.xlu0 %2186
        %v2188 = vmax.f32 %v2127, %v2129
        %2189 = vmax.xlane.f32.xlu0 %v2188
        %v2190 = vpop.xlane.xlu0 %2189
        %v2191 = vmax.f32 %v2133, %v2135
        %2192 = vmax.xlane.f32.xlu0 %v2191
        %v2193 = vpop.xlane.xlu0 %2192
        %v2194 = vmax.f32 %v2137, %v2139
        %2195 = vmax.xlane.f32.xlu0 %v2194
        %v2196 = vpop.xlane.xlu0 %2195
        %v2197 = vmax.f32 %v2143, %v2145
        %2198 = vmax.xlane.f32.xlu0 %v2197
        %v2199 = vpop.xlane.xlu0 %2198
        %v2200 = vmax.f32 %v2147, %v2149
        %2201 = vmax.xlane.f32.xlu0 %v2200
        %v2202 = vpop.xlane.xlu0 %2201
        %v2203 = vmax.f32 %v2153, %v2155
        %2204 = vmax.xlane.f32.xlu0 %v2203
        %v2205 = vpop.xlane.xlu0 %2204
        %v2206 = vmax.f32 %v2157, %v2159
        %2207 = vmax.xlane.f32.xlu0 %v2206
        %v2208 = vpop.xlane.xlu0 %2207
        %v2209 = vsub.f32 %v2083, %v2163
        %v2210 = vsub.f32 %v2085, %v2163
        %v2211 = vsub.f32 %v2087, %v2166
        %v2212 = vsub.f32 %v2089, %v2166
        %v2213 = vsub.f32 %v2093, %v2169
        %v2214 = vsub.f32 %v2095, %v2169
        %v2215 = vsub.f32 %v2097, %v2172
        %v2216 = vsub.f32 %v2099, %v2172
        %v2217 = vsub.f32 %v2103, %v2175
        %v2218 = vsub.f32 %v2105, %v2175
        %v2219 = vsub.f32 %v2107, %v2178
        %v2220 = vsub.f32 %v2109, %v2178
        %v2221 = vsub.f32 %v2113, %v2181
        %v2222 = vsub.f32 %v2115, %v2181
        %v2223 = vsub.f32 %v2117, %v2184
        %v2224 = vsub.f32 %v2119, %v2184
        %v2225 = vsub.f32 %v2123, %v2187
        %v2226 = vsub.f32 %v2125, %v2187
        %v2227 = vsub.f32 %v2127, %v2190
        %v2228 = vsub.f32 %v2129, %v2190
        %v2229 = vsub.f32 %v2133, %v2193
        %v2230 = vsub.f32 %v2135, %v2193
        %v2231 = vsub.f32 %v2137, %v2196
        %v2232 = vsub.f32 %v2139, %v2196
        %v2233 = vsub.f32 %v2143, %v2199
        %v2234 = vsub.f32 %v2145, %v2199
        %v2235 = vsub.f32 %v2147, %v2202
        %v2236 = vsub.f32 %v2149, %v2202
        %v2237 = vsub.f32 %v2153, %v2205
        %v2238 = vsub.f32 %v2155, %v2205
        %v2239 = vsub.f32 %v2157, %v2208
        %v2240 = vsub.f32 %v2159, %v2208
        %v2241 = vmul.f32 %v2209, 1.442695
        %v2242 = vpow.pop %v2241
        %v2243 = vmul.f32 %v2210, 1.442695
        %v2244 = vpow.pop %v2243
        %v2245 = vmul.f32 %v2211, 1.442695
        %v2246 = vpow.pop %v2245
        %v2247 = vmul.f32 %v2212, 1.442695
        %v2248 = vpow.pop %v2247
        %v2249 = vmul.f32 %v2213, 1.442695
        %v2250 = vpow.pop %v2249
        %v2251 = vmul.f32 %v2214, 1.442695
        %v2252 = vpow.pop %v2251
        %v2253 = vmul.f32 %v2215, 1.442695
        %v2254 = vpow.pop %v2253
        %v2255 = vmul.f32 %v2216, 1.442695
        %v2256 = vpow.pop %v2255
        %v2257 = vmul.f32 %v2217, 1.442695
        %v2258 = vpow.pop %v2257
        %v2259 = vmul.f32 %v2218, 1.442695
        %v2260 = vpow.pop %v2259
        %v2261 = vmul.f32 %v2219, 1.442695
        %v2262 = vpow.pop %v2261
        %v2263 = vmul.f32 %v2220, 1.442695
        %v2264 = vpow.pop %v2263
        %v2265 = vmul.f32 %v2221, 1.442695
        %v2266 = vpow.pop %v2265
        %v2267 = vmul.f32 %v2222, 1.442695
        %v2268 = vpow.pop %v2267
        %v2269 = vmul.f32 %v2223, 1.442695
        %v2270 = vpow.pop %v2269
        %v2271 = vmul.f32 %v2224, 1.442695
        %v2272 = vpow.pop %v2271
        %v2273 = vmul.f32 %v2225, 1.442695
        %v2274 = vpow.pop %v2273
        %v2275 = vmul.f32 %v2226, 1.442695
        %v2276 = vpow.pop %v2275
        %v2277 = vmul.f32 %v2227, 1.442695
        %v2278 = vpow.pop %v2277
        %v2279 = vmul.f32 %v2228, 1.442695
        %v2280 = vpow.pop %v2279
        %v2281 = vmul.f32 %v2229, 1.442695
        %v2282 = vpow.pop %v2281
        %v2283 = vmul.f32 %v2230, 1.442695
        %v2284 = vpow.pop %v2283
        %v2285 = vmul.f32 %v2231, 1.442695
        %v2286 = vpow.pop %v2285
        %v2287 = vmul.f32 %v2232, 1.442695
        %v2288 = vpow.pop %v2287
        %v2289 = vmul.f32 %v2233, 1.442695
        %v2290 = vpow.pop %v2289
        %v2291 = vmul.f32 %v2234, 1.442695
        %v2292 = vpow.pop %v2291
        %v2293 = vmul.f32 %v2235, 1.442695
        %v2294 = vpow.pop %v2293
        %v2295 = vmul.f32 %v2236, 1.442695
        %v2296 = vpow.pop %v2295
        %v2297 = vmul.f32 %v2237, 1.442695
        %v2298 = vpow.pop %v2297
        %v2299 = vmul.f32 %v2238, 1.442695
        %v2300 = vpow.pop %v2299
        %v2301 = vmul.f32 %v2239, 1.442695
        %v2302 = vpow.pop %v2301
        %v2303 = vmul.f32 %v2240, 1.442695
        %v2304 = vpow.pop %v2303
        %v2305 = vpack.c.bf16 %v2246, %v2242
        %v2306 = vpack.c.bf16 %v2248, %v2244
        %v2307 = vpack.c.bf16 %v2254, %v2250
        %v2308 = vpack.c.bf16 %v2256, %v2252
        %v2309 = vpack.c.bf16 %v2262, %v2258
        %v2310 = vpack.c.bf16 %v2264, %v2260
        %v2311 = vpack.c.bf16 %v2270, %v2266
        %v2312 = vpack.c.bf16 %v2272, %v2268
        %v2313 = vpack.c.bf16 %v2278, %v2274
        %v2314 = vpack.c.bf16 %v2280, %v2276
        %v2315 = vpack.c.bf16 %v2286, %v2282
        %v2316 = vpack.c.bf16 %v2288, %v2284
        %v2317 = vpack.c.bf16 %v2294, %v2290
        %v2318 = vpack.c.bf16 %v2296, %v2292
        %v2319 = vpack.c.bf16 %v2302, %v2298
        %v2320 = vpack.c.bf16 %v2304, %v2300
        %v2321 = vld [vmem:[%s579] sm:$0xff]
        %v2322 = vld [vmem:[%s579 + $0x8] sm:$0xff]
        %v2323 = vld [vmem:[%s579 + $0x10] sm:$0xff]
        %v2324 = vld [vmem:[%s579 + $0x18] sm:$0xff]
        %v2325 = vld [vmem:[%s579 + $0x20] sm:$0x11]
        %v2331 = vunpack.c.l.b16 %v2321
        %v2332 = vunpack.c.h.b16 %v2321
        %v2333 = vunpack.c.l.b16 %v2322
        %v2334 = vunpack.c.h.b16 %v2322
        %v2335 = vunpack.c.l.b16 %v2323
        %v2336 = vunpack.c.h.b16 %v2323
        %v2337 = vunpack.c.l.b16 %v2324
        %v2338 = vunpack.c.h.b16 %v2324
        %v2339 = vunpack.c.l.b16 %v2325
        %v2340 = vunpack.c.h.b16 %v2325
        %v2341 = vpack.c.b16 %v2333, %v2331
        %v2342 = vpack.c.b16 %v2334, %v2332
        %v2343 = vpack.c.b16 %v2337, %v2335
        %v2344 = vpack.c.b16 %v2338, %v2336
        %v2345 = vpack.c.b16 %v2339, %v2339
        %v2346 = vpack.c.b16 %v2340, %v2340
        %2353 = vmatprep.subr.bf16.mxu0 %v2306
        %2354 = vmatpush1.bf16.xpose.msra.mxu0 %v2305
        %2355 = vmatprep.subr.bf16.mxu0 %v2308
        %2356 = vmatpush1.bf16.xpose.msra.mxu0 %v2307
        %2357 = vmatprep.subr.bf16.mxu0 %v2310
        %2358 = vmatpush1.bf16.xpose.msra.mxu0 %v2309
        %2359 = vmatprep.subr.bf16.mxu0 %v2312
        %2360 = vmatpush1.bf16.xpose.msra.mxu0 %v2311
        %2361 = vmatprep.subr.bf16.mxu0 %v2314
        %2362 = vmatpush1.bf16.xpose.msra.mxu0 %v2313
        %2363 = vmatprep.subr.bf16.mxu0 %v2316
        %2364 = vmatpush1.bf16.xpose.msra.mxu0 %v2315
        %2365 = vmatprep.subr.bf16.mxu0 %v2318
        %2366 = vmatpush1.bf16.xpose.msra.mxu0 %v2317
        %2367 = vmatprep.subr.bf16.mxu0 %v2320
        %2368 = vmatpush1.bf16.xpose.msra.mxu0 %v2319
        %2369 = vmatprep.subr.bf16.mxu0 0
        %2370 = vmatpush1.bf16.xpose.msra.mxu0 0
        %2371 = vmatprep.subr.bf16.mxu0 0
        %2372 = vmatpush1.bf16.xpose.msra.mxu0 0
        %2373 = vmatprep.subr.bf16.mxu0 0
        %2374 = vmatpush1.bf16.xpose.msra.mxu0 0
        %2375 = vmatprep.subr.bf16.mxu0 0
        %2376 = vmatpush1.bf16.xpose.msra.mxu0 0
        %2377 = vmatprep.subr.bf16.mxu0 0
        %2378 = vmatpush1.bf16.xpose.msra.mxu0 0
        %2379 = vmatprep.subr.bf16.mxu0 0
        %2380 = vmatpush1.bf16.xpose.msra.mxu0 0
        %2381 = vmatprep.subr.bf16.mxu0 0
        %2382 = vmatpush1.bf16.xpose.msra.mxu0 0
        %2383 = vmatprep.subr.bf16.mxu0 0
        %2384 = vmatpush1.bf16.xpose.msra.mxu0 0
        %2385 = vmatprep.mubr.bf16.mxu0 %v2342
        %2386 = vmatmul.mubr.bf16.gmra.mrb[0].mxu0 %v2341
        %v2387 = vpop.f32.mrb[0].mxu0
        %v2388 = vadd.f32 0.0, %v2387
        %v2389 = vpop.f32.mrb[0].mxu0
        %v2390 = vpop.f32.mrb[0].mxu0
        %v2391 = vadd.f32 0.0, %v2390
        %v2392 = vpop.f32.mrb[0].mxu0
        %2393 = vmatprep.mubr.bf16.mxu0 %v2344
        %2394 = vmatmul.mubr.bf16.gmra.mrb[0].mxu0 %v2343
        %v2395 = vpop.f32.mrb[0].mxu0
        %v2396 = vadd.f32 0.0, %v2395
        %v2397 = vpop.f32.mrb[0].mxu0
        %v2398 = vpop.f32.mrb[0].mxu0
        %v2399 = vadd.f32 0.0, %v2398
        %v2400 = vpop.f32.mrb[0].mxu0
        %2401 = vmatprep.mubr.bf16.mxu0 %v2346
        %2402 = vmatmul.mubr.bf16.gmra.mrb[0].mxu0 %v2345
        %v2403 = vpop.f32.mrb[0].mxu0
        %v2404 = vadd.f32 0.0, %v2403
        %v2405 = vpop.f32.mrb[0].mxu0
        %v2406 = vpop.f32.mrb[0].mxu0
        %v2407 = vpop.f32.mrb[0].mxu0
        %2408 = vdwg.mxu0
        %v2409 = vrcp.pop %v2404
        %v2410 = vlaneseq
        %v2411 = vshrl.u32 %v2410, 7
        %v2412 = vsub.s32 0, %v2411
        %v2413 = vrot.slane %v2409, %v2412
        %v2414 = vmul.f32 %v2388, %v2413
        %v2415 = vmul.f32 %v2391, %v2413
        %v2416 = vmul.f32 %v2396, %v2413
        %v2417 = vmul.f32 %v2399, %v2413
        %v2418 = vadd.f32 %v1993, %v2414
        %v2419 = vadd.f32 %v1994, %v2415
        %v2420 = vadd.f32 %v1995, %v2416
        %v2421 = vadd.f32 %v1996, %v2417
        %2422 = vxpose.xlu0.c.b16.start [1/8] %v599, 128
        %2423 = vxpose.xlu0.c.b16.cont [2/8] 0, 128
        %2424 = vxpose.xlu0.c.b16.cont [3/8] 0, 128
        %2425 = vxpose.xlu0.c.b16.cont [4/8] 0, 128
        %2426 = vxpose.xlu0.c.b16.cont [5/8] 0, 128
        %2427 = vxpose.xlu0.c.b16.cont [6/8] 0, 128
        %2428 = vxpose.xlu0.c.b16.cont [7/8] 0, 128
        %2429 = vxpose.xlu0.c.b16.end [8/8] 0, 128
        %v2430 = vpop.trf.xlu0
        %v2431 = vpop.trf.xlu0
        %v2432 = vpop.trf.xlu0
        %v2433 = vpop.trf.xlu0
        %v2434 = vpop.trf.xlu0
        %v2435 = vpop.trf.xlu0
        %v2436 = vpop.trf.xlu0
        %v2437 = vpop.trf.xlu0
        %v2439 = vunpack.c.l.b16 %v606
        %v2440 = vunpack.c.h.b16 %v606
        %v2441 = vpack.c.b16 %v2439, %v2439
        %v2442 = vpack.c.b16 %v2440, %v2440
        %v2444 = vsel %vm623, %v2430, 0
        %v2447 = vsel %vm623, %v2431, 0
        %v2450 = vsel %vm623, %v2432, 0
        %v2453 = vsel %vm623, %v2433, 0
        %v2456 = vsel %vm623, %v2434, 0
        %v2459 = vsel %vm623, %v2435, 0
        %v2462 = vsel %vm623, %v2436, 0
        %v2465 = vsel %vm623, %v2437, 0
        %v2468 = vsel %vm1191, %v2441, 0
        %v2471 = vsel %vm1191, %v2442, 0
        %2473 = vmatprep.subr.bf16.mxu0 %v2471
        %2474 = vmatpush1.bf16.msra.mxu0 %v2468
        %2475 = vmatprep.subr.bf16.mxu0 0
        %2476 = vmatpush1.bf16.msra.mxu0 0
        %2477 = vmatprep.subr.bf16.mxu0 0
        %2478 = vmatpush1.bf16.msra.mxu0 0
        %2479 = vmatprep.subr.bf16.mxu0 0
        %2480 = vmatpush1.bf16.msra.mxu0 0
        %2481 = vmatprep.subr.bf16.mxu0 0
        %2482 = vmatpush1.bf16.msra.mxu0 0
        %2483 = vmatprep.subr.bf16.mxu0 0
        %2484 = vmatpush1.bf16.msra.mxu0 0
        %2485 = vmatprep.subr.bf16.mxu0 0
        %2486 = vmatpush1.bf16.msra.mxu0 0
        %2487 = vmatprep.subr.bf16.mxu0 0
        %2488 = vmatpush1.bf16.msra.mxu0 0
        %2489 = vmatprep.subr.bf16.mxu0 0
        %2490 = vmatpush1.bf16.msra.mxu0 0
        %2491 = vmatprep.subr.bf16.mxu0 0
        %2492 = vmatpush1.bf16.msra.mxu0 0
        %2493 = vmatprep.subr.bf16.mxu0 0
        %2494 = vmatpush1.bf16.msra.mxu0 0
        %2495 = vmatprep.subr.bf16.mxu0 0
        %2496 = vmatpush1.bf16.msra.mxu0 0
        %2497 = vmatprep.subr.bf16.mxu0 0
        %2498 = vmatpush1.bf16.msra.mxu0 0
        %2499 = vmatprep.subr.bf16.mxu0 0
        %2500 = vmatpush1.bf16.msra.mxu0 0
        %2501 = vmatprep.subr.bf16.mxu0 0
        %2502 = vmatpush1.bf16.msra.mxu0 0
        %2503 = vmatprep.subr.bf16.mxu0 0
        %2504 = vmatpush1.bf16.msra.mxu0 0
        %2505 = vmatprep.mubr.bf16.mxu0 0
        %2506 = vmatmul.mubr.bf16.gmra.mrb[0].mxu0 %v2444
        %v2507 = vpop.f32.mrb[0].mxu0
        %v2508 = vadd.f32 0.0, %v2507
        %v2509 = vpop.f32.mrb[0].mxu0
        %v2510 = vadd.f32 0.0, %v2509
        %v2511 = vpop.f32.mrb[0].mxu0
        %v2512 = vadd.f32 0.0, %v2511
        %v2513 = vpop.f32.mrb[0].mxu0
        %v2514 = vadd.f32 0.0, %v2513
        %2515 = vmatprep.mubr.bf16.mxu0 0
        %2516 = vmatmul.mubr.bf16.gmra.mrb[0].mxu0 %v2447
        %v2517 = vpop.f32.mrb[0].mxu0
        %v2518 = vadd.f32 0.0, %v2517
        %v2519 = vpop.f32.mrb[0].mxu0
        %v2520 = vadd.f32 0.0, %v2519
        %v2521 = vpop.f32.mrb[0].mxu0
        %v2522 = vadd.f32 0.0, %v2521
        %v2523 = vpop.f32.mrb[0].mxu0
        %v2524 = vadd.f32 0.0, %v2523
        %2525 = vmatprep.mubr.bf16.mxu0 0
        %2526 = vmatmul.mubr.bf16.gmra.mrb[0].mxu0 %v2450
        %v2527 = vpop.f32.mrb[0].mxu0
        %v2528 = vadd.f32 0.0, %v2527
        %v2529 = vpop.f32.mrb[0].mxu0
        %v2530 = vadd.f32 0.0, %v2529
        %v2531 = vpop.f32.mrb[0].mxu0
        %v2532 = vadd.f32 0.0, %v2531
        %v2533 = vpop.f32.mrb[0].mxu0
        %v2534 = vadd.f32 0.0, %v2533
        %2535 = vmatprep.mubr.bf16.mxu0 0
        %2536 = vmatmul.mubr.bf16.gmra.mrb[0].mxu0 %v2453
        %v2537 = vpop.f32.mrb[0].mxu0
        %v2538 = vadd.f32 0.0, %v2537
        %v2539 = vpop.f32.mrb[0].mxu0
        %v2540 = vadd.f32 0.0, %v2539
        %v2541 = vpop.f32.mrb[0].mxu0
        %v2542 = vadd.f32 0.0, %v2541
        %v2543 = vpop.f32.mrb[0].mxu0
        %v2544 = vadd.f32 0.0, %v2543
        %2545 = vmatprep.mubr.bf16.mxu0 0
        %2546 = vmatmul.mubr.bf16.gmra.mrb[0].mxu0 %v2456
        %v2547 = vpop.f32.mrb[0].mxu0
        %v2548 = vadd.f32 0.0, %v2547
        %v2549 = vpop.f32.mrb[0].mxu0
        %v2550 = vadd.f32 0.0, %v2549
        %v2551 = vpop.f32.mrb[0].mxu0
        %v2552 = vadd.f32 0.0, %v2551
        %v2553 = vpop.f32.mrb[0].mxu0
        %v2554 = vadd.f32 0.0, %v2553
        %2555 = vmatprep.mubr.bf16.mxu0 0
        %2556 = vmatmul.mubr.bf16.gmra.mrb[0].mxu0 %v2459
        %v2557 = vpop.f32.mrb[0].mxu0
        %v2558 = vadd.f32 0.0, %v2557
        %v2559 = vpop.f32.mrb[0].mxu0
        %v2560 = vadd.f32 0.0, %v2559
        %v2561 = vpop.f32.mrb[0].mxu0
        %v2562 = vadd.f32 0.0, %v2561
        %v2563 = vpop.f32.mrb[0].mxu0
        %v2564 = vadd.f32 0.0, %v2563
        %2565 = vmatprep.mubr.bf16.mxu0 0
        %2566 = vmatmul.mubr.bf16.gmra.mrb[0].mxu0 %v2462
        %v2567 = vpop.f32.mrb[0].mxu0
        %v2568 = vadd.f32 0.0, %v2567
        %v2569 = vpop.f32.mrb[0].mxu0
        %v2570 = vadd.f32 0.0, %v2569
        %v2571 = vpop.f32.mrb[0].mxu0
        %v2572 = vadd.f32 0.0, %v2571
        %v2573 = vpop.f32.mrb[0].mxu0
        %v2574 = vadd.f32 0.0, %v2573
        %2575 = vmatprep.mubr.bf16.mxu0 0
        %2576 = vmatmul.mubr.bf16.gmra.mrb[0].mxu0 %v2465
        %v2577 = vpop.f32.mrb[0].mxu0
        %v2578 = vadd.f32 0.0, %v2577
        %v2579 = vpop.f32.mrb[0].mxu0
        %v2580 = vadd.f32 0.0, %v2579
        %v2581 = vpop.f32.mrb[0].mxu0
        %v2582 = vadd.f32 0.0, %v2581
        %v2583 = vpop.f32.mrb[0].mxu0
        %v2584 = vadd.f32 0.0, %v2583
        %2585 = vdwg.mxu0
        %v2586 = vmax.f32 %v2508, %v2510
        %2587 = vmax.xlane.f32.xlu0 %v2586
        %v2588 = vpop.xlane.xlu0 %2587
        %v2589 = vmax.f32 %v2512, %v2514
        %2590 = vmax.xlane.f32.xlu0 %v2589
        %v2591 = vpop.xlane.xlu0 %2590
        %v2592 = vmax.f32 %v2518, %v2520
        %2593 = vmax.xlane.f32.xlu0 %v2592
        %v2594 = vpop.xlane.xlu0 %2593
        %v2595 = vmax.f32 %v2522, %v2524
        %2596 = vmax.xlane.f32.xlu0 %v2595
        %v2597 = vpop.xlane.xlu0 %2596
        %v2598 = vmax.f32 %v2528, %v2530
        %2599 = vmax.xlane.f32.xlu0 %v2598
        %v2600 = vpop.xlane.xlu0 %2599
        %v2601 = vmax.f32 %v2532, %v2534
        %2602 = vmax.xlane.f32.xlu0 %v2601
        %v2603 = vpop.xlane.xlu0 %2602
        %v2604 = vmax.f32 %v2538, %v2540
        %2605 = vmax.xlane.f32.xlu0 %v2604
        %v2606 = vpop.xlane.xlu0 %2605
        %v2607 = vmax.f32 %v2542, %v2544
        %2608 = vmax.xlane.f32.xlu0 %v2607
        %v2609 = vpop.xlane.xlu0 %2608
        %v2610 = vmax.f32 %v2548, %v2550
        %2611 = vmax.xlane.f32.xlu0 %v2610
        %v2612 = vpop.xlane.xlu0 %2611
        %v2613 = vmax.f32 %v2552, %v2554
        %2614 = vmax.xlane.f32.xlu0 %v2613
        %v2615 = vpop.xlane.xlu0 %2614
        %v2616 = vmax.f32 %v2558, %v2560
        %2617 = vmax.xlane.f32.xlu0 %v2616
        %v2618 = vpop.xlane.xlu0 %2617
        %v2619 = vmax.f32 %v2562, %v2564
        %2620 = vmax.xlane.f32.xlu0 %v2619
        %v2621 = vpop.xlane.xlu0 %2620
        %v2622 = vmax.f32 %v2568, %v2570
        %2623 = vmax.xlane.f32.xlu0 %v2622
        %v2624 = vpop.xlane.xlu0 %2623
        %v2625 = vmax.f32 %v2572, %v2574
        %2626 = vmax.xlane.f32.xlu0 %v2625
        %v2627 = vpop.xlane.xlu0 %2626
        %v2628 = vmax.f32 %v2578, %v2580
        %2629 = vmax.xlane.f32.xlu0 %v2628
        %v2630 = vpop.xlane.xlu0 %2629
        %v2631 = vmax.f32 %v2582, %v2584
        %2632 = vmax.xlane.f32.xlu0 %v2631
        %v2633 = vpop.xlane.xlu0 %2632
        %v2634 = vsub.f32 %v2508, %v2588
        %v2635 = vsub.f32 %v2510, %v2588
        %v2636 = vsub.f32 %v2512, %v2591
        %v2637 = vsub.f32 %v2514, %v2591
        %v2638 = vsub.f32 %v2518, %v2594
        %v2639 = vsub.f32 %v2520, %v2594
        %v2640 = vsub.f32 %v2522, %v2597
        %v2641 = vsub.f32 %v2524, %v2597
        %v2642 = vsub.f32 %v2528, %v2600
        %v2643 = vsub.f32 %v2530, %v2600
        %v2644 = vsub.f32 %v2532, %v2603
        %v2645 = vsub.f32 %v2534, %v2603
        %v2646 = vsub.f32 %v2538, %v2606
        %v2647 = vsub.f32 %v2540, %v2606
        %v2648 = vsub.f32 %v2542, %v2609
        %v2649 = vsub.f32 %v2544, %v2609
        %v2650 = vsub.f32 %v2548, %v2612
        %v2651 = vsub.f32 %v2550, %v2612
        %v2652 = vsub.f32 %v2552, %v2615
        %v2653 = vsub.f32 %v2554, %v2615
        %v2654 = vsub.f32 %v2558, %v2618
        %v2655 = vsub.f32 %v2560, %v2618
        %v2656 = vsub.f32 %v2562, %v2621
        %v2657 = vsub.f32 %v2564, %v2621
        %v2658 = vsub.f32 %v2568, %v2624
        %v2659 = vsub.f32 %v2570, %v2624
        %v2660 = vsub.f32 %v2572, %v2627
        %v2661 = vsub.f32 %v2574, %v2627
        %v2662 = vsub.f32 %v2578, %v2630
        %v2663 = vsub.f32 %v2580, %v2630
        %v2664 = vsub.f32 %v2582, %v2633
        %v2665 = vsub.f32 %v2584, %v2633
        %v2666 = vmul.f32 %v2634, 1.442695
        %v2667 = vpow.pop %v2666
        %v2668 = vmul.f32 %v2635, 1.442695
        %v2669 = vpow.pop %v2668
        %v2670 = vmul.f32 %v2636, 1.442695
        %v2671 = vpow.pop %v2670
        %v2672 = vmul.f32 %v2637, 1.442695
        %v2673 = vpow.pop %v2672
        %v2674 = vmul.f32 %v2638, 1.442695
        %v2675 = vpow.pop %v2674
        %v2676 = vmul.f32 %v2639, 1.442695
        %v2677 = vpow.pop %v2676
        %v2678 = vmul.f32 %v2640, 1.442695
        %v2679 = vpow.pop %v2678
        %v2680 = vmul.f32 %v2641, 1.442695
        %v2681 = vpow.pop %v2680
        %v2682 = vmul.f32 %v2642, 1.442695
        %v2683 = vpow.pop %v2682
        %v2684 = vmul.f32 %v2643, 1.442695
        %v2685 = vpow.pop %v2684
        %v2686 = vmul.f32 %v2644, 1.442695
        %v2687 = vpow.pop %v2686
        %v2688 = vmul.f32 %v2645, 1.442695
        %v2689 = vpow.pop %v2688
        %v2690 = vmul.f32 %v2646, 1.442695
        %v2691 = vpow.pop %v2690
        %v2692 = vmul.f32 %v2647, 1.442695
        %v2693 = vpow.pop %v2692
        %v2694 = vmul.f32 %v2648, 1.442695
        %v2695 = vpow.pop %v2694
        %v2696 = vmul.f32 %v2649, 1.442695
        %v2697 = vpow.pop %v2696
        %v2698 = vmul.f32 %v2650, 1.442695
        %v2699 = vpow.pop %v2698
        %v2700 = vmul.f32 %v2651, 1.442695
        %v2701 = vpow.pop %v2700
        %v2702 = vmul.f32 %v2652, 1.442695
        %v2703 = vpow.pop %v2702
        %v2704 = vmul.f32 %v2653, 1.442695
        %v2705 = vpow.pop %v2704
        %v2706 = vmul.f32 %v2654, 1.442695
        %v2707 = vpow.pop %v2706
        %v2708 = vmul.f32 %v2655, 1.442695
        %v2709 = vpow.pop %v2708
        %v2710 = vmul.f32 %v2656, 1.442695
        %v2711 = vpow.pop %v2710
        %v2712 = vmul.f32 %v2657, 1.442695
        %v2713 = vpow.pop %v2712
        %v2714 = vmul.f32 %v2658, 1.442695
        %v2715 = vpow.pop %v2714
        %v2716 = vmul.f32 %v2659, 1.442695
        %v2717 = vpow.pop %v2716
        %v2718 = vmul.f32 %v2660, 1.442695
        %v2719 = vpow.pop %v2718
        %v2720 = vmul.f32 %v2661, 1.442695
        %v2721 = vpow.pop %v2720
        %v2722 = vmul.f32 %v2662, 1.442695
        %v2723 = vpow.pop %v2722
        %v2724 = vmul.f32 %v2663, 1.442695
        %v2725 = vpow.pop %v2724
        %v2726 = vmul.f32 %v2664, 1.442695
        %v2727 = vpow.pop %v2726
        %v2728 = vmul.f32 %v2665, 1.442695
        %v2729 = vpow.pop %v2728
        %v2730 = vpack.c.bf16 %v2671, %v2667
        %v2731 = vpack.c.bf16 %v2673, %v2669
        %v2732 = vpack.c.bf16 %v2679, %v2675
        %v2733 = vpack.c.bf16 %v2681, %v2677
        %v2734 = vpack.c.bf16 %v2687, %v2683
        %v2735 = vpack.c.bf16 %v2689, %v2685
        %v2736 = vpack.c.bf16 %v2695, %v2691
        %v2737 = vpack.c.bf16 %v2697, %v2693
        %v2738 = vpack.c.bf16 %v2703, %v2699
        %v2739 = vpack.c.bf16 %v2705, %v2701
        %v2740 = vpack.c.bf16 %v2711, %v2707
        %v2741 = vpack.c.bf16 %v2713, %v2709
        %v2742 = vpack.c.bf16 %v2719, %v2715
        %v2743 = vpack.c.bf16 %v2721, %v2717
        %v2744 = vpack.c.bf16 %v2727, %v2723
        %v2745 = vpack.c.bf16 %v2729, %v2725
        %v2746 = vld [vmem:[%s583] sm:$0xff]
        %v2747 = vld [vmem:[%s583 + $0x8] sm:$0xff]
        %v2748 = vld [vmem:[%s583 + $0x10] sm:$0xff]
        %v2749 = vld [vmem:[%s583 + $0x18] sm:$0xff]
        %v2750 = vld [vmem:[%s583 + $0x20] sm:$0x11]
        %v2756 = vunpack.c.l.b16 %v2746
        %v2757 = vunpack.c.h.b16 %v2746
        %v2758 = vunpack.c.l.b16 %v2747
        %v2759 = vunpack.c.h.b16 %v2747
        %v2760 = vunpack.c.l.b16 %v2748
        %v2761 = vunpack.c.h.b16 %v2748
        %v2762 = vunpack.c.l.b16 %v2749
        %v2763 = vunpack.c.h.b16 %v2749
        %v2764 = vunpack.c.l.b16 %v2750
        %v2765 = vunpack.c.h.b16 %v2750
        %v2766 = vpack.c.b16 %v2758, %v2756
        %v2767 = vpack.c.b16 %v2759, %v2757
        %v2768 = vpack.c.b16 %v2762, %v2760
        %v2769 = vpack.c.b16 %v2763, %v2761
        %v2770 = vpack.c.b16 %v2764, %v2764
        %v2771 = vpack.c.b16 %v2765, %v2765
        %2778 = vmatprep.subr.bf16.mxu0 %v2731
        %2779 = vmatpush1.bf16.xpose.msra.mxu0 %v2730
        %2780 = vmatprep.subr.bf16.mxu0 %v2733
        %2781 = vmatpush1.bf16.xpose.msra.mxu0 %v2732
        %2782 = vmatprep.subr.bf16.mxu0 %v2735
        %2783 = vmatpush1.bf16.xpose.msra.mxu0 %v2734
        %2784 = vmatprep.subr.bf16.mxu0 %v2737
        %2785 = vmatpush1.bf16.xpose.msra.mxu0 %v2736
        %2786 = vmatprep.subr.bf16.mxu0 %v2739
        %2787 = vmatpush1.bf16.xpose.msra.mxu0 %v2738
        %2788 = vmatprep.subr.bf16.mxu0 %v2741
        %2789 = vmatpush1.bf16.xpose.msra.mxu0 %v2740
        %2790 = vmatprep.subr.bf16.mxu0 %v2743
        %2791 = vmatpush1.bf16.xpose.msra.mxu0 %v2742
        %2792 = vmatprep.subr.bf16.mxu0 %v2745
        %2793 = vmatpush1.bf16.xpose.msra.mxu0 %v2744
        %2794 = vmatprep.subr.bf16.mxu0 0
        %2795 = vmatpush1.bf16.xpose.msra.mxu0 0
        %2796 = vmatprep.subr.bf16.mxu0 0
        %2797 = vmatpush1.bf16.xpose.msra.mxu0 0
        %2798 = vmatprep.subr.bf16.mxu0 0
        %2799 = vmatpush1.bf16.xpose.msra.mxu0 0
        %2800 = vmatprep.subr.bf16.mxu0 0
        %2801 = vmatpush1.bf16.xpose.msra.mxu0 0
        %2802 = vmatprep.subr.bf16.mxu0 0
        %2803 = vmatpush1.bf16.xpose.msra.mxu0 0
        %2804 = vmatprep.subr.bf16.mxu0 0
        %2805 = vmatpush1.bf16.xpose.msra.mxu0 0
        %2806 = vmatprep.subr.bf16.mxu0 0
        %2807 = vmatpush1.bf16.xpose.msra.mxu0 0
        %2808 = vmatprep.subr.bf16.mxu0 0
        %2809 = vmatpush1.bf16.xpose.msra.mxu0 0
        %2810 = vmatprep.mubr.bf16.mxu0 %v2767
        %2811 = vmatmul.mubr.bf16.gmra.mrb[0].mxu0 %v2766
        %v2812 = vpop.f32.mrb[0].mxu0
        %v2813 = vadd.f32 0.0, %v2812
        %v2814 = vpop.f32.mrb[0].mxu0
        %v2815 = vpop.f32.mrb[0].mxu0
        %v2816 = vadd.f32 0.0, %v2815
        %v2817 = vpop.f32.mrb[0].mxu0
        %2818 = vmatprep.mubr.bf16.mxu0 %v2769
        %2819 = vmatmul.mubr.bf16.gmra.mrb[0].mxu0 %v2768
        %v2820 = vpop.f32.mrb[0].mxu0
        %v2821 = vadd.f32 0.0, %v2820
        %v2822 = vpop.f32.mrb[0].mxu0
        %v2823 = vpop.f32.mrb[0].mxu0
        %v2824 = vadd.f32 0.0, %v2823
        %v2825 = vpop.f32.mrb[0].mxu0
        %2826 = vmatprep.mubr.bf16.mxu0 %v2771
        %2827 = vmatmul.mubr.bf16.gmra.mrb[0].mxu0 %v2770
        %v2828 = vpop.f32.mrb[0].mxu0
        %v2829 = vadd.f32 0.0, %v2828
        %v2830 = vpop.f32.mrb[0].mxu0
        %v2831 = vpop.f32.mrb[0].mxu0
        %v2832 = vpop.f32.mrb[0].mxu0
        %2833 = vdwg.mxu0
        %v2834 = vrcp.pop %v2829
        %v2835 = vlaneseq
        %v2836 = vshrl.u32 %v2835, 7
        %v2837 = vsub.s32 0, %v2836
        %v2838 = vrot.slane %v2834, %v2837
        %v2839 = vmul.f32 %v2813, %v2838
        %v2840 = vmul.f32 %v2816, %v2838
        %v2841 = vmul.f32 %v2821, %v2838
        %v2842 = vmul.f32 %v2824, %v2838
        %v2843 = vadd.f32 %v2418, %v2839
        %v2844 = vadd.f32 %v2419, %v2840
        %v2845 = vadd.f32 %v2420, %v2841
        %v2846 = vadd.f32 %v2421, %v2842
        %v2847 = vadd.f32 %v2843, %v613
        %v2848 = vadd.f32 %v2844, %v615
        %v2849 = vadd.f32 %v2845, %v617
        %v2850 = vadd.f32 %v2846, %v619
        %v2851 = vadd.f32 %v2847, %v2848
        %v2852 = vadd.f32 %v2851, %v2849
        %v2853 = vadd.f32 %v2852, %v2850
        %v2854 = vrot.slane %v2853, 4
        %v2855 = vadd.f32 %v2853, %v2854
        %v2856 = vrot.slane %v2855, 2
        %v2857 = vadd.f32 %v2855, %v2856
        %v2858 = vrot.slane %v2857, 1
        %v2859 = vadd.f32 %v2857, %v2858
        %v2860 = vrcp.pop 32.0
        %v2861 = vmul.f32 %v2859, %v2860
        %v2862 = vsub.f32 %v2847, %v2861
        %v2863 = vsub.f32 %v2848, %v2861
        %v2864 = vsub.f32 %v2849, %v2861
        %v2865 = vsub.f32 %v2850, %v2861
        %v2866 = vmul.f32 %v2862, %v2862
        %v2867 = vmul.f32 %v2863, %v2863
        %v2868 = vmul.f32 %v2864, %v2864
        %v2869 = vmul.f32 %v2865, %v2865
        %v2870 = vadd.f32 %v2866, %v2867
        %v2871 = vadd.f32 %v2870, %v2868
        %v2872 = vadd.f32 %v2871, %v2869
        %v2873 = vrot.slane %v2872, 4
        %v2874 = vadd.f32 %v2872, %v2873
        %v2875 = vrot.slane %v2874, 2
        %v2876 = vadd.f32 %v2874, %v2875
        %v2877 = vrot.slane %v2876, 1
        %v2878 = vadd.f32 %v2876, %v2877
        %v2879 = vmul.f32 %v2878, %v2860
        %v2880 = vadd.f32 %v2879, 1e-05
        %v2881 = vrsqrt.pop %v2880
        %v2882 = vmul.f32 %v2862, %v2881
        %v2883 = vmul.f32 %v2863, %v2881
        %v2884 = vmul.f32 %v2864, %v2881
        %v2885 = vmul.f32 %v2865, %v2881
        %2887 = vset.pattern.permute.xlu0 0
        %2888 = vperm.xlu0 %2887, %v533
        %v2889 = vpop.permute.xlu0 %2888
        %2892 = vset.pattern.permute.xlu0 0
        %2893 = vperm.xlu0 %2892, %v534
        %v2894 = vpop.permute.xlu0 %2893
        %2897 = vset.pattern.permute.xlu0 0
        %2898 = vperm.xlu0 %2897, %v535
        %v2899 = vpop.permute.xlu0 %2898
        %2902 = vset.pattern.permute.xlu0 0
        %2903 = vperm.xlu0 %2902, %v536
        %v2904 = vpop.permute.xlu0 %2903
        %v2906 = vmul.f32 %v2882, %v2889
        %v2907 = vmul.f32 %v2883, %v2894
        %v2908 = vmul.f32 %v2884, %v2899
        %v2909 = vmul.f32 %v2885, %v2904
        %2911 = vset.pattern.permute.xlu0 0
        %2912 = vperm.xlu0 %2911, %v537
        %v2913 = vpop.permute.xlu0 %2912
        %2916 = vset.pattern.permute.xlu0 0
        %2917 = vperm.xlu0 %2916, %v538
        %v2918 = vpop.permute.xlu0 %2917
        %2921 = vset.pattern.permute.xlu0 0
        %2922 = vperm.xlu0 %2921, %v539
        %v2923 = vpop.permute.xlu0 %2922
        %2926 = vset.pattern.permute.xlu0 0
        %2927 = vperm.xlu0 %2926, %v540
        %v2928 = vpop.permute.xlu0 %2927
        %v2930 = vadd.f32 %v2906, %v2913
        %v2931 = vadd.f32 %v2907, %v2918
        %v2932 = vadd.f32 %v2908, %v2923
        %v2933 = vadd.f32 %v2909, %v2928
        %2935 = vset.pattern.permute.xlu0 0
        %2936 = vperm.xlu0 %2935, %v549
        %v2937 = vpop.permute.xlu0 %2936
        %2940 = vset.pattern.permute.xlu0 0
        %2941 = vperm.xlu0 %2940, %v550
        %v2942 = vpop.permute.xlu0 %2941
        %2945 = vset.pattern.permute.xlu0 0
        %2946 = vperm.xlu0 %2945, %v551
        %v2947 = vpop.permute.xlu0 %2946
        %2950 = vset.pattern.permute.xlu0 0
        %2951 = vperm.xlu0 %2950, %v552
        %v2952 = vpop.permute.xlu0 %2951
        %2955 = vset.pattern.permute.xlu0 0
        %2956 = vperm.xlu0 %2955, %v553
        %v2957 = vpop.permute.xlu0 %2956
        %2960 = vset.pattern.permute.xlu0 0
        %2961 = vperm.xlu0 %2960, %v554
        %v2962 = vpop.permute.xlu0 %2961
        %2965 = vset.pattern.permute.xlu0 0
        %2966 = vperm.xlu0 %2965, %v555
        %v2967 = vpop.permute.xlu0 %2966
        %2970 = vset.pattern.permute.xlu0 0
        %2971 = vperm.xlu0 %2970, %v556
        %v2972 = vpop.permute.xlu0 %2971
        %vm2974 = vcmask 261120
        %v2976 = vsel %vm2974, %v541, 0
        %v2979 = vsel %vm2974, %v542, 0
        %v2982 = vsel %vm2974, %v543, 0
        %v2985 = vsel %vm2974, %v544, 0
        %v2988 = vsel %vm2974, %v545, 0
        %v2991 = vsel %vm2974, %v546, 0
        %v2994 = vsel %vm2974, %v547, 0
        %v2997 = vsel %vm2974, %v548, 0
        %2999 = vmatprep.subr.mxu0 0.0
        %3000 = vmatpush1.msra.mxu0 %v2930
        %3001 = vmatprep.subr.mxu0 0.0
        %3002 = vmatpush1.msra.mxu0 %v2931
        %3003 = vmatprep.subr.mxu0 0.0
        %3004 = vmatpush1.msra.mxu0 %v2932
        %3005 = vmatprep.subr.mxu0 0.0
        %3006 = vmatpush1.msra.mxu0 %v2933
        %3007 = vmatprep.subr.mxu0 0.0
        %3008 = vmatpush1.msra.mxu0 0.0
        %3009 = vmatprep.subr.mxu0 0.0
        %3010 = vmatpush1.msra.mxu0 0.0
        %3011 = vmatprep.subr.mxu0 0.0
        %3012 = vmatpush1.msra.mxu0 0.0
        %3013 = vmatprep.subr.mxu0 0.0
        %3014 = vmatpush1.msra.mxu0 0.0
        %3015 = vmatprep.subr.mxu0 0.0
        %3016 = vmatpush1.msra.mxu0 0.0
        %3017 = vmatprep.subr.mxu0 0.0
        %3018 = vmatpush1.msra.mxu0 0.0
        %3019 = vmatprep.subr.mxu0 0.0
        %3020 = vmatpush1.msra.mxu0 0.0
        %3021 = vmatprep.subr.mxu0 0.0
        %3022 = vmatpush1.msra.mxu0 0.0
        %3023 = vmatprep.subr.mxu0 0.0
        %3024 = vmatpush1.msra.mxu0 0.0
        %3025 = vmatprep.subr.mxu0 0.0
        %3026 = vmatpush1.msra.mxu0 0.0
        %3027 = vmatprep.subr.mxu0 0.0
        %3028 = vmatpush1.msra.mxu0 0.0
        %3029 = vmatprep.subr.mxu0 0.0
        %3030 = vmatpush1.msra.mxu0 0.0
        %3031 = vmatprep.subr.mxu0 0.0
        %3032 = vmatpush1.msra.mxu0 0.0
        %3033 = vmatprep.subr.mxu0 0.0
        %3034 = vmatpush1.msra.mxu0 0.0
        %3035 = vmatprep.subr.mxu0 0.0
        %3036 = vmatpush1.msra.mxu0 0.0
        %3037 = vmatprep.subr.mxu0 0.0
        %3038 = vmatpush1.msra.mxu0 0.0
        %3039 = vmatprep.subr.mxu0 0.0
        %3040 = vmatpush1.msra.mxu0 0.0
        %3041 = vmatprep.subr.mxu0 0.0
        %3042 = vmatpush1.msra.mxu0 0.0
        %3043 = vmatprep.subr.mxu0 0.0
        %3044 = vmatpush1.msra.mxu0 0.0
        %3045 = vmatprep.subr.mxu0 0.0
        %3046 = vmatpush1.msra.mxu0 0.0
        %3047 = vmatprep.subr.mxu0 0.0
        %3048 = vmatpush1.msra.mxu0 0.0
        %3049 = vmatprep.subr.mxu0 0.0
        %3050 = vmatpush1.msra.mxu0 0.0
        %3051 = vmatprep.subr.mxu0 0.0
        %3052 = vmatpush1.msra.mxu0 0.0
        %3053 = vmatprep.subr.mxu0 0.0
        %3054 = vmatpush1.msra.mxu0 0.0
        %3055 = vmatprep.subr.mxu0 0.0
        %3056 = vmatpush1.msra.mxu0 0.0
        %3057 = vmatprep.subr.mxu0 0.0
        %3058 = vmatpush1.msra.mxu0 0.0
        %3059 = vmatprep.subr.mxu0 0.0
        %3060 = vmatpush1.msra.mxu0 0.0
        %3061 = vmatprep.subr.mxu0 0.0
        %3062 = vmatpush1.msra.mxu0 0.0
        %3063 = vmatprep.mubr.f32.mxu0 0.0
        %3064 = vmatmul.mubr.f32.gmra.mrb[0].mxu0 %v2976
        %v3065 = vpop.f32.mrb[0].mxu0
        %v3066 = vadd.f32 %v2937, %v3065
        %v3067 = vpop.f32.mrb[0].mxu0
        %3068 = vmatprep.mubr.f32.mxu0 0.0
        %3069 = vmatmul.mubr.f32.gmra.mrb[0].mxu0 %v2979
        %v3070 = vpop.f32.mrb[0].mxu0
        %v3071 = vadd.f32 %v2942, %v3070
        %v3072 = vpop.f32.mrb[0].mxu0
        %3073 = vmatprep.mubr.f32.mxu0 0.0
        %3074 = vmatmul.mubr.f32.gmra.mrb[0].mxu0 %v2982
        %v3075 = vpop.f32.mrb[0].mxu0
        %v3076 = vadd.f32 %v2947, %v3075
        %v3077 = vpop.f32.mrb[0].mxu0
        %3078 = vmatprep.mubr.f32.mxu0 0.0
        %3079 = vmatmul.mubr.f32.gmra.mrb[0].mxu0 %v2985
        %v3080 = vpop.f32.mrb[0].mxu0
        %v3081 = vadd.f32 %v2952, %v3080
        %v3082 = vpop.f32.mrb[0].mxu0
        %3083 = vmatprep.mubr.f32.mxu0 0.0
        %3084 = vmatmul.mubr.f32.gmra.mrb[0].mxu0 %v2988
        %v3085 = vpop.f32.mrb[0].mxu0
        %v3086 = vadd.f32 %v2957, %v3085
        %v3087 = vpop.f32.mrb[0].mxu0
        %3088 = vmatprep.mubr.f32.mxu0 0.0
        %3089 = vmatmul.mubr.f32.gmra.mrb[0].mxu0 %v2991
        %v3090 = vpop.f32.mrb[0].mxu0
        %v3091 = vadd.f32 %v2962, %v3090
        %v3092 = vpop.f32.mrb[0].mxu0
        %3093 = vmatprep.mubr.f32.mxu0 0.0
        %3094 = vmatmul.mubr.f32.gmra.mrb[0].mxu0 %v2994
        %v3095 = vpop.f32.mrb[0].mxu0
        %v3096 = vadd.f32 %v2967, %v3095
        %v3097 = vpop.f32.mrb[0].mxu0
        %3098 = vmatprep.mubr.f32.mxu0 0.0
        %3099 = vmatmul.mubr.f32.gmra.mrb[0].mxu0 %v2997
        %v3100 = vpop.f32.mrb[0].mxu0
        %v3101 = vadd.f32 %v2972, %v3100
        %v3102 = vpop.f32.mrb[0].mxu0
        %3103 = vdwg.mxu0
        %v3104 = vmax.f32 %v3066, 0.0
        %v3105 = vmax.f32 %v3071, 0.0
        %v3106 = vmax.f32 %v3076, 0.0
        %v3107 = vmax.f32 %v3081, 0.0
        %v3108 = vmax.f32 %v3086, 0.0
        %v3109 = vmax.f32 %v3091, 0.0
        %v3110 = vmax.f32 %v3096, 0.0
        %v3111 = vmax.f32 %v3101, 0.0
        %3113 = vset.pattern.permute.xlu0 0
        %3114 = vperm.xlu0 %3113, %v561
        %v3115 = vpop.permute.xlu0 %3114
        %3118 = vset.pattern.permute.xlu0 0
        %3119 = vperm.xlu0 %3118, %v562
        %v3120 = vpop.permute.xlu0 %3119
        %3123 = vset.pattern.permute.xlu0 0
        %3124 = vperm.xlu0 %3123, %v563
        %v3125 = vpop.permute.xlu0 %3124
        %3128 = vset.pattern.permute.xlu0 0
        %3129 = vperm.xlu0 %3128, %v564
        %v3130 = vpop.permute.xlu0 %3129
        %vm3132 = vcmask 523264
        %v3134 = vsel %vm3132, %v557, 0
        %v3137 = vsel %vm3132, %v558, 0
        %v3140 = vsel %vm3132, %v559, 0
        %v3143 = vsel %vm3132, %v560, 0
        %3145 = vmatprep.subr.mxu0 0.0
        %3146 = vmatpush1.msra.mxu0 %v3104
        %3147 = vmatprep.subr.mxu0 0.0
        %3148 = vmatpush1.msra.mxu0 %v3105
        %3149 = vmatprep.subr.mxu0 0.0
        %3150 = vmatpush1.msra.mxu0 %v3106
        %3151 = vmatprep.subr.mxu0 0.0
        %3152 = vmatpush1.msra.mxu0 %v3107
        %3153 = vmatprep.subr.mxu0 0.0
        %3154 = vmatpush1.msra.mxu0 %v3108
        %3155 = vmatprep.subr.mxu0 0.0
        %3156 = vmatpush1.msra.mxu0 %v3109
        %3157 = vmatprep.subr.mxu0 0.0
        %3158 = vmatpush1.msra.mxu0 %v3110
        %3159 = vmatprep.subr.mxu0 0.0
        %3160 = vmatpush1.msra.mxu0 %v3111
        %3161 = vmatprep.subr.mxu0 0.0
        %3162 = vmatpush1.msra.mxu0 0.0
        %3163 = vmatprep.subr.mxu0 0.0
        %3164 = vmatpush1.msra.mxu0 0.0
        %3165 = vmatprep.subr.mxu0 0.0
        %3166 = vmatpush1.msra.mxu0 0.0
        %3167 = vmatprep.subr.mxu0 0.0
        %3168 = vmatpush1.msra.mxu0 0.0
        %3169 = vmatprep.subr.mxu0 0.0
        %3170 = vmatpush1.msra.mxu0 0.0
        %3171 = vmatprep.subr.mxu0 0.0
        %3172 = vmatpush1.msra.mxu0 0.0
        %3173 = vmatprep.subr.mxu0 0.0
        %3174 = vmatpush1.msra.mxu0 0.0
        %3175 = vmatprep.subr.mxu0 0.0
        %3176 = vmatpush1.msra.mxu0 0.0
        %3177 = vmatprep.subr.mxu0 0.0
        %3178 = vmatpush1.msra.mxu0 0.0
        %3179 = vmatprep.subr.mxu0 0.0
        %3180 = vmatpush1.msra.mxu0 0.0
        %3181 = vmatprep.subr.mxu0 0.0
        %3182 = vmatpush1.msra.mxu0 0.0
        %3183 = vmatprep.subr.mxu0 0.0
        %3184 = vmatpush1.msra.mxu0 0.0
        %3185 = vmatprep.subr.mxu0 0.0
        %3186 = vmatpush1.msra.mxu0 0.0
        %3187 = vmatprep.subr.mxu0 0.0
        %3188 = vmatpush1.msra.mxu0 0.0
        %3189 = vmatprep.subr.mxu0 0.0
        %3190 = vmatpush1.msra.mxu0 0.0
        %3191 = vmatprep.subr.mxu0 0.0
        %3192 = vmatpush1.msra.mxu0 0.0
        %3193 = vmatprep.subr.mxu0 0.0
        %3194 = vmatpush1.msra.mxu0 0.0
        %3195 = vmatprep.subr.mxu0 0.0
        %3196 = vmatpush1.msra.mxu0 0.0
        %3197 = vmatprep.subr.mxu0 0.0
        %3198 = vmatpush1.msra.mxu0 0.0
        %3199 = vmatprep.subr.mxu0 0.0
        %3200 = vmatpush1.msra.mxu0 0.0
        %3201 = vmatprep.subr.mxu0 0.0
        %3202 = vmatpush1.msra.mxu0 0.0
        %3203 = vmatprep.subr.mxu0 0.0
        %3204 = vmatpush1.msra.mxu0 0.0
        %3205 = vmatprep.subr.mxu0 0.0
        %3206 = vmatpush1.msra.mxu0 0.0
        %3207 = vmatprep.subr.mxu0 0.0
        %3208 = vmatpush1.msra.mxu0 0.0
        %3209 = vmatprep.mubr.f32.mxu0 0.0
        %3210 = vmatmul.mubr.f32.gmra.mrb[0].mxu0 %v3134
        %v3211 = vpop.f32.mrb[0].mxu0
        %v3212 = vadd.f32 %v3115, %v3211
        %v3213 = vpop.f32.mrb[0].mxu0
        %3214 = vmatprep.mubr.f32.mxu0 0.0
        %3215 = vmatmul.mubr.f32.gmra.mrb[0].mxu0 %v3137
        %v3216 = vpop.f32.mrb[0].mxu0
        %v3217 = vadd.f32 %v3120, %v3216
        %v3218 = vpop.f32.mrb[0].mxu0
        %3219 = vmatprep.mubr.f32.mxu0 0.0
        %3220 = vmatmul.mubr.f32.gmra.mrb[0].mxu0 %v3140
        %v3221 = vpop.f32.mrb[0].mxu0
        %v3222 = vadd.f32 %v3125, %v3221
        %v3223 = vpop.f32.mrb[0].mxu0
        %3224 = vmatprep.mubr.f32.mxu0 0.0
        %3225 = vmatmul.mubr.f32.gmra.mrb[0].mxu0 %v3143
        %v3226 = vpop.f32.mrb[0].mxu0
        %v3227 = vadd.f32 %v3130, %v3226
        %v3228 = vpop.f32.mrb[0].mxu0
        %3229 = vdwg.mxu0
        %v3230 = vadd.f32 %v3212, %v2847
        %v3231 = vadd.f32 %v3217, %v2848
        %v3232 = vadd.f32 %v3222, %v2849
        %v3233 = vadd.f32 %v3227, %v2850
        %v3234 = vadd.f32 %v3230, %v3231
        %v3235 = vadd.f32 %v3234, %v3232
        %v3236 = vadd.f32 %v3235, %v3233
        %v3237 = vrot.slane %v3236, 4
        %v3238 = vadd.f32 %v3236, %v3237
        %v3239 = vrot.slane %v3238, 2
        %v3240 = vadd.f32 %v3238, %v3239
        %v3241 = vrot.slane %v3240, 1
        %v3242 = vadd.f32 %v3240, %v3241
        %v3243 = vmul.f32 %v3242, %v2860
        %v3244 = vsub.f32 %v3230, %v3243
        %v3245 = vsub.f32 %v3231, %v3243
        %v3246 = vsub.f32 %v3232, %v3243
        %v3247 = vsub.f32 %v3233, %v3243
        %v3248 = vmul.f32 %v3244, %v3244
        %v3249 = vmul.f32 %v3245, %v3245
        %v3250 = vmul.f32 %v3246, %v3246
        %v3251 = vmul.f32 %v3247, %v3247
        %v3252 = vadd.f32 %v3248, %v3249
        %v3253 = vadd.f32 %v3252, %v3250
        %v3254 = vadd.f32 %v3253, %v3251
        %v3255 = vrot.slane %v3254, 4
        %v3256 = vadd.f32 %v3254, %v3255
        %v3257 = vrot.slane %v3256, 2
        %v3258 = vadd.f32 %v3256, %v3257
        %v3259 = vrot.slane %v3258, 1
        %v3260 = vadd.f32 %v3258, %v3259
        %v3261 = vmul.f32 %v3260, %v2860
        %v3262 = vadd.f32 %v3261, 1e-05
        %v3263 = vrsqrt.pop %v3262
        %v3264 = vmul.f32 %v3244, %v3263
        %v3265 = vmul.f32 %v3245, %v3263
        %v3266 = vmul.f32 %v3246, %v3263
        %v3267 = vmul.f32 %v3247, %v3263
        %v3268 = vmul.f32 %v3264, %v2889
        %v3269 = vmul.f32 %v3265, %v2894
        %v3270 = vmul.f32 %v3266, %v2899
        %v3271 = vmul.f32 %v3267, %v2904
        %v3272 = vadd.f32 %v3268, %v2913
        %v3273 = vadd.f32 %v3269, %v2918
        %v3274 = vadd.f32 %v3270, %v2923
        %v3275 = vadd.f32 %v3271, %v2928
        %v3277 = vunpack.c.h.b16 %v596
        %v3278 = vpack.c.b16 %v3277, %v3277
        %3280 = vxpose.xlu0.c.b16.start [1/8] %v3278, 128
        %3281 = vxpose.xlu0.c.b16.cont [2/8] 0, 128
        %3282 = vxpose.xlu0.c.b16.cont [3/8] 0, 128
        %3283 = vxpose.xlu0.c.b16.cont [4/8] 0, 128
        %3284 = vxpose.xlu0.c.b16.cont [5/8] 0, 128
        %3285 = vxpose.xlu0.c.b16.cont [6/8] 0, 128
        %3286 = vxpose.xlu0.c.b16.cont [7/8] 0, 128
        %3287 = vxpose.xlu0.c.b16.end [8/8] 0, 128
        %v3288 = vpop.trf.xlu0
        %v3289 = vpop.trf.xlu0
        %v3290 = vpop.trf.xlu0
        %v3291 = vpop.trf.xlu0
        %v3292 = vpop.trf.xlu0
        %v3293 = vpop.trf.xlu0
        %v3294 = vpop.trf.xlu0
        %v3295 = vpop.trf.xlu0
        %v3297 = vsel %vm623, %v3288, 0
        %v3300 = vsel %vm623, %v3289, 0
        %v3303 = vsel %vm623, %v3290, 0
        %v3306 = vsel %vm623, %v3291, 0
        %v3309 = vsel %vm623, %v3292, 0
        %v3312 = vsel %vm623, %v3293, 0
        %v3315 = vsel %vm623, %v3294, 0
        %v3318 = vsel %vm623, %v3295, 0
        %3320 = vmatprep.subr.bf16.mxu0 %v1196
        %3321 = vmatpush1.bf16.msra.mxu0 %v1193
        %3322 = vmatprep.subr.bf16.mxu0 0
        %3323 = vmatpush1.bf16.msra.mxu0 0
        %3324 = vmatprep.subr.bf16.mxu0 0
        %3325 = vmatpush1.bf16.msra.mxu0 0
        %3326 = vmatprep.subr.bf16.mxu0 0
        %3327 = vmatpush1.bf16.msra.mxu0 0
        %3328 = vmatprep.subr.bf16.mxu0 0
        %3329 = vmatpush1.bf16.msra.mxu0 0
        %3330 = vmatprep.subr.bf16.mxu0 0
        %3331 = vmatpush1.bf16.msra.mxu0 0
        %3332 = vmatprep.subr.bf16.mxu0 0
        %3333 = vmatpush1.bf16.msra.mxu0 0
        %3334 = vmatprep.subr.bf16.mxu0 0
        %3335 = vmatpush1.bf16.msra.mxu0 0
        %3336 = vmatprep.subr.bf16.mxu0 0
        %3337 = vmatpush1.bf16.msra.mxu0 0
        %3338 = vmatprep.subr.bf16.mxu0 0
        %3339 = vmatpush1.bf16.msra.mxu0 0
        %3340 = vmatprep.subr.bf16.mxu0 0
        %3341 = vmatpush1.bf16.msra.mxu0 0
        %3342 = vmatprep.subr.bf16.mxu0 0
        %3343 = vmatpush1.bf16.msra.mxu0 0
        %3344 = vmatprep.subr.bf16.mxu0 0
        %3345 = vmatpush1.bf16.msra.mxu0 0
        %3346 = vmatprep.subr.bf16.mxu0 0
        %3347 = vmatpush1.bf16.msra.mxu0 0
        %3348 = vmatprep.subr.bf16.mxu0 0
        %3349 = vmatpush1.bf16.msra.mxu0 0
        %3350 = vmatprep.subr.bf16.mxu0 0
        %3351 = vmatpush1.bf16.msra.mxu0 0
        %3352 = vmatprep.mubr.bf16.mxu0 0
        %3353 = vmatmul.mubr.bf16.gmra.mrb[0].mxu0 %v3297
        %v3354 = vpop.f32.mrb[0].mxu0
        %v3355 = vadd.f32 0.0, %v3354
        %v3356 = vpop.f32.mrb[0].mxu0
        %v3357 = vadd.f32 0.0, %v3356
        %v3358 = vpop.f32.mrb[0].mxu0
        %v3359 = vadd.f32 0.0, %v3358
        %v3360 = vpop.f32.mrb[0].mxu0
        %v3361 = vadd.f32 0.0, %v3360
        %3362 = vmatprep.mubr.bf16.mxu0 0
        %3363 = vmatmul.mubr.bf16.gmra.mrb[0].mxu0 %v3300
        %v3364 = vpop.f32.mrb[0].mxu0
        %v3365 = vadd.f32 0.0, %v3364
        %v3366 = vpop.f32.mrb[0].mxu0
        %v3367 = vadd.f32 0.0, %v3366
        %v3368 = vpop.f32.mrb[0].mxu0
        %v3369 = vadd.f32 0.0, %v3368
        %v3370 = vpop.f32.mrb[0].mxu0
        %v3371 = vadd.f32 0.0, %v3370
        %3372 = vmatprep.mubr.bf16.mxu0 0
        %3373 = vmatmul.mubr.bf16.gmra.mrb[0].mxu0 %v3303
        %v3374 = vpop.f32.mrb[0].mxu0
        %v3375 = vadd.f32 0.0, %v3374
        %v3376 = vpop.f32.mrb[0].mxu0
        %v3377 = vadd.f32 0.0, %v3376
        %v3378 = vpop.f32.mrb[0].mxu0
        %v3379 = vadd.f32 0.0, %v3378
        %v3380 = vpop.f32.mrb[0].mxu0
        %v3381 = vadd.f32 0.0, %v3380
        %3382 = vmatprep.mubr.bf16.mxu0 0
        %3383 = vmatmul.mubr.bf16.gmra.mrb[0].mxu0 %v3306
        %v3384 = vpop.f32.mrb[0].mxu0
        %v3385 = vadd.f32 0.0, %v3384
        %v3386 = vpop.f32.mrb[0].mxu0
        %v3387 = vadd.f32 0.0, %v3386
        %v3388 = vpop.f32.mrb[0].mxu0
        %v3389 = vadd.f32 0.0, %v3388
        %v3390 = vpop.f32.mrb[0].mxu0
        %v3391 = vadd.f32 0.0, %v3390
        %3392 = vmatprep.mubr.bf16.mxu0 0
        %3393 = vmatmul.mubr.bf16.gmra.mrb[0].mxu0 %v3309
        %v3394 = vpop.f32.mrb[0].mxu0
        %v3395 = vadd.f32 0.0, %v3394
        %v3396 = vpop.f32.mrb[0].mxu0
        %v3397 = vadd.f32 0.0, %v3396
        %v3398 = vpop.f32.mrb[0].mxu0
        %v3399 = vadd.f32 0.0, %v3398
        %v3400 = vpop.f32.mrb[0].mxu0
        %v3401 = vadd.f32 0.0, %v3400
        %3402 = vmatprep.mubr.bf16.mxu0 0
        %3403 = vmatmul.mubr.bf16.gmra.mrb[0].mxu0 %v3312
        %v3404 = vpop.f32.mrb[0].mxu0
        %v3405 = vadd.f32 0.0, %v3404
        %v3406 = vpop.f32.mrb[0].mxu0
        %v3407 = vadd.f32 0.0, %v3406
        %v3408 = vpop.f32.mrb[0].mxu0
        %v3409 = vadd.f32 0.0, %v3408
        %v3410 = vpop.f32.mrb[0].mxu0
        %v3411 = vadd.f32 0.0, %v3410
        %3412 = vmatprep.mubr.bf16.mxu0 0
        %3413 = vmatmul.mubr.bf16.gmra.mrb[0].mxu0 %v3315
        %v3414 = vpop.f32.mrb[0].mxu0
        %v3415 = vadd.f32 0.0, %v3414
        %v3416 = vpop.f32.mrb[0].mxu0
        %v3417 = vadd.f32 0.0, %v3416
        %v3418 = vpop.f32.mrb[0].mxu0
        %v3419 = vadd.f32 0.0, %v3418
        %v3420 = vpop.f32.mrb[0].mxu0
        %v3421 = vadd.f32 0.0, %v3420
        %3422 = vmatprep.mubr.bf16.mxu0 0
        %3423 = vmatmul.mubr.bf16.gmra.mrb[0].mxu0 %v3318
        %v3424 = vpop.f32.mrb[0].mxu0
        %v3425 = vadd.f32 0.0, %v3424
        %v3426 = vpop.f32.mrb[0].mxu0
        %v3427 = vadd.f32 0.0, %v3426
        %v3428 = vpop.f32.mrb[0].mxu0
        %v3429 = vadd.f32 0.0, %v3428
        %v3430 = vpop.f32.mrb[0].mxu0
        %v3431 = vadd.f32 0.0, %v3430
        %3432 = vdwg.mxu0
        %v3433 = vmax.f32 %v3355, %v3357
        %3434 = vmax.xlane.f32.xlu0 %v3433
        %v3435 = vpop.xlane.xlu0 %3434
        %v3436 = vmax.f32 %v3359, %v3361
        %3437 = vmax.xlane.f32.xlu0 %v3436
        %v3438 = vpop.xlane.xlu0 %3437
        %v3439 = vmax.f32 %v3365, %v3367
        %3440 = vmax.xlane.f32.xlu0 %v3439
        %v3441 = vpop.xlane.xlu0 %3440
        %v3442 = vmax.f32 %v3369, %v3371
        %3443 = vmax.xlane.f32.xlu0 %v3442
        %v3444 = vpop.xlane.xlu0 %3443
        %v3445 = vmax.f32 %v3375, %v3377
        %3446 = vmax.xlane.f32.xlu0 %v3445
        %v3447 = vpop.xlane.xlu0 %3446
        %v3448 = vmax.f32 %v3379, %v3381
        %3449 = vmax.xlane.f32.xlu0 %v3448
        %v3450 = vpop.xlane.xlu0 %3449
        %v3451 = vmax.f32 %v3385, %v3387
        %3452 = vmax.xlane.f32.xlu0 %v3451
        %v3453 = vpop.xlane.xlu0 %3452
        %v3454 = vmax.f32 %v3389, %v3391
        %3455 = vmax.xlane.f32.xlu0 %v3454
        %v3456 = vpop.xlane.xlu0 %3455
        %v3457 = vmax.f32 %v3395, %v3397
        %3458 = vmax.xlane.f32.xlu0 %v3457
        %v3459 = vpop.xlane.xlu0 %3458
        %v3460 = vmax.f32 %v3399, %v3401
        %3461 = vmax.xlane.f32.xlu0 %v3460
        %v3462 = vpop.xlane.xlu0 %3461
        %v3463 = vmax.f32 %v3405, %v3407
        %3464 = vmax.xlane.f32.xlu0 %v3463
        %v3465 = vpop.xlane.xlu0 %3464
        %v3466 = vmax.f32 %v3409, %v3411
        %3467 = vmax.xlane.f32.xlu0 %v3466
        %v3468 = vpop.xlane.xlu0 %3467
        %v3469 = vmax.f32 %v3415, %v3417
        %3470 = vmax.xlane.f32.xlu0 %v3469
        %v3471 = vpop.xlane.xlu0 %3470
        %v3472 = vmax.f32 %v3419, %v3421
        %3473 = vmax.xlane.f32.xlu0 %v3472
        %v3474 = vpop.xlane.xlu0 %3473
        %v3475 = vmax.f32 %v3425, %v3427
        %3476 = vmax.xlane.f32.xlu0 %v3475
        %v3477 = vpop.xlane.xlu0 %3476
        %v3478 = vmax.f32 %v3429, %v3431
        %3479 = vmax.xlane.f32.xlu0 %v3478
        %v3480 = vpop.xlane.xlu0 %3479
        %v3481 = vsub.f32 %v3355, %v3435
        %v3482 = vsub.f32 %v3357, %v3435
        %v3483 = vsub.f32 %v3359, %v3438
        %v3484 = vsub.f32 %v3361, %v3438
        %v3485 = vsub.f32 %v3365, %v3441
        %v3486 = vsub.f32 %v3367, %v3441
        %v3487 = vsub.f32 %v3369, %v3444
        %v3488 = vsub.f32 %v3371, %v3444
        %v3489 = vsub.f32 %v3375, %v3447
        %v3490 = vsub.f32 %v3377, %v3447
        %v3491 = vsub.f32 %v3379, %v3450
        %v3492 = vsub.f32 %v3381, %v3450
        %v3493 = vsub.f32 %v3385, %v3453
        %v3494 = vsub.f32 %v3387, %v3453
        %v3495 = vsub.f32 %v3389, %v3456
        %v3496 = vsub.f32 %v3391, %v3456
        %v3497 = vsub.f32 %v3395, %v3459
        %v3498 = vsub.f32 %v3397, %v3459
        %v3499 = vsub.f32 %v3399, %v3462
        %v3500 = vsub.f32 %v3401, %v3462
        %v3501 = vsub.f32 %v3405, %v3465
        %v3502 = vsub.f32 %v3407, %v3465
        %v3503 = vsub.f32 %v3409, %v3468
        %v3504 = vsub.f32 %v3411, %v3468
        %v3505 = vsub.f32 %v3415, %v3471
        %v3506 = vsub.f32 %v3417, %v3471
        %v3507 = vsub.f32 %v3419, %v3474
        %v3508 = vsub.f32 %v3421, %v3474
        %v3509 = vsub.f32 %v3425, %v3477
        %v3510 = vsub.f32 %v3427, %v3477
        %v3511 = vsub.f32 %v3429, %v3480
        %v3512 = vsub.f32 %v3431, %v3480
        %v3513 = vmul.f32 %v3481, 1.442695
        %v3514 = vpow.pop %v3513
        %v3515 = vmul.f32 %v3482, 1.442695
        %v3516 = vpow.pop %v3515
        %v3517 = vmul.f32 %v3483, 1.442695
        %v3518 = vpow.pop %v3517
        %v3519 = vmul.f32 %v3484, 1.442695
        %v3520 = vpow.pop %v3519
        %v3521 = vmul.f32 %v3485, 1.442695
        %v3522 = vpow.pop %v3521
        %v3523 = vmul.f32 %v3486, 1.442695
        %v3524 = vpow.pop %v3523
        %v3525 = vmul.f32 %v3487, 1.442695
        %v3526 = vpow.pop %v3525
        %v3527 = vmul.f32 %v3488, 1.442695
        %v3528 = vpow.pop %v3527
        %v3529 = vmul.f32 %v3489, 1.442695
        %v3530 = vpow.pop %v3529
        %v3531 = vmul.f32 %v3490, 1.442695
        %v3532 = vpow.pop %v3531
        %v3533 = vmul.f32 %v3491, 1.442695
        %v3534 = vpow.pop %v3533
        %v3535 = vmul.f32 %v3492, 1.442695
        %v3536 = vpow.pop %v3535
        %v3537 = vmul.f32 %v3493, 1.442695
        %v3538 = vpow.pop %v3537
        %v3539 = vmul.f32 %v3494, 1.442695
        %v3540 = vpow.pop %v3539
        %v3541 = vmul.f32 %v3495, 1.442695
        %v3542 = vpow.pop %v3541
        %v3543 = vmul.f32 %v3496, 1.442695
        %v3544 = vpow.pop %v3543
        %v3545 = vmul.f32 %v3497, 1.442695
        %v3546 = vpow.pop %v3545
        %v3547 = vmul.f32 %v3498, 1.442695
        %v3548 = vpow.pop %v3547
        %v3549 = vmul.f32 %v3499, 1.442695
        %v3550 = vpow.pop %v3549
        %v3551 = vmul.f32 %v3500, 1.442695
        %v3552 = vpow.pop %v3551
        %v3553 = vmul.f32 %v3501, 1.442695
        %v3554 = vpow.pop %v3553
        %v3555 = vmul.f32 %v3502, 1.442695
        %v3556 = vpow.pop %v3555
        %v3557 = vmul.f32 %v3503, 1.442695
        %v3558 = vpow.pop %v3557
        %v3559 = vmul.f32 %v3504, 1.442695
        %v3560 = vpow.pop %v3559
        %v3561 = vmul.f32 %v3505, 1.442695
        %v3562 = vpow.pop %v3561
        %v3563 = vmul.f32 %v3506, 1.442695
        %v3564 = vpow.pop %v3563
        %v3565 = vmul.f32 %v3507, 1.442695
        %v3566 = vpow.pop %v3565
        %v3567 = vmul.f32 %v3508, 1.442695
        %v3568 = vpow.pop %v3567
        %v3569 = vmul.f32 %v3509, 1.442695
        %v3570 = vpow.pop %v3569
        %v3571 = vmul.f32 %v3510, 1.442695
        %v3572 = vpow.pop %v3571
        %v3573 = vmul.f32 %v3511, 1.442695
        %v3574 = vpow.pop %v3573
        %v3575 = vmul.f32 %v3512, 1.442695
        %v3576 = vpow.pop %v3575
        %v3577 = vpack.c.bf16 %v3518, %v3514
        %v3578 = vpack.c.bf16 %v3520, %v3516
        %v3579 = vpack.c.bf16 %v3526, %v3522
        %v3580 = vpack.c.bf16 %v3528, %v3524
        %v3581 = vpack.c.bf16 %v3534, %v3530
        %v3582 = vpack.c.bf16 %v3536, %v3532
        %v3583 = vpack.c.bf16 %v3542, %v3538
        %v3584 = vpack.c.bf16 %v3544, %v3540
        %v3585 = vpack.c.bf16 %v3550, %v3546
        %v3586 = vpack.c.bf16 %v3552, %v3548
        %v3587 = vpack.c.bf16 %v3558, %v3554
        %v3588 = vpack.c.bf16 %v3560, %v3556
        %v3589 = vpack.c.bf16 %v3566, %v3562
        %v3590 = vpack.c.bf16 %v3568, %v3564
        %v3591 = vpack.c.bf16 %v3574, %v3570
        %v3592 = vpack.c.bf16 %v3576, %v3572
        %3593 = vmatprep.subr.bf16.mxu0 %v3578
        %3594 = vmatpush1.bf16.xpose.msra.mxu0 %v3577
        %3595 = vmatprep.subr.bf16.mxu0 %v3580
        %3596 = vmatpush1.bf16.xpose.msra.mxu0 %v3579
        %3597 = vmatprep.subr.bf16.mxu0 %v3582
        %3598 = vmatpush1.bf16.xpose.msra.mxu0 %v3581
        %3599 = vmatprep.subr.bf16.mxu0 %v3584
        %3600 = vmatpush1.bf16.xpose.msra.mxu0 %v3583
        %3601 = vmatprep.subr.bf16.mxu0 %v3586
        %3602 = vmatpush1.bf16.xpose.msra.mxu0 %v3585
        %3603 = vmatprep.subr.bf16.mxu0 %v3588
        %3604 = vmatpush1.bf16.xpose.msra.mxu0 %v3587
        %3605 = vmatprep.subr.bf16.mxu0 %v3590
        %3606 = vmatpush1.bf16.xpose.msra.mxu0 %v3589
        %3607 = vmatprep.subr.bf16.mxu0 %v3592
        %3608 = vmatpush1.bf16.xpose.msra.mxu0 %v3591
        %3609 = vmatprep.subr.bf16.mxu0 0
        %3610 = vmatpush1.bf16.xpose.msra.mxu0 0
        %3611 = vmatprep.subr.bf16.mxu0 0
        %3612 = vmatpush1.bf16.xpose.msra.mxu0 0
        %3613 = vmatprep.subr.bf16.mxu0 0
        %3614 = vmatpush1.bf16.xpose.msra.mxu0 0
        %3615 = vmatprep.subr.bf16.mxu0 0
        %3616 = vmatpush1.bf16.xpose.msra.mxu0 0
        %3617 = vmatprep.subr.bf16.mxu0 0
        %3618 = vmatpush1.bf16.xpose.msra.mxu0 0
        %3619 = vmatprep.subr.bf16.mxu0 0
        %3620 = vmatpush1.bf16.xpose.msra.mxu0 0
        %3621 = vmatprep.subr.bf16.mxu0 0
        %3622 = vmatpush1.bf16.xpose.msra.mxu0 0
        %3623 = vmatprep.subr.bf16.mxu0 0
        %3624 = vmatpush1.bf16.xpose.msra.mxu0 0
        %3625 = vmatprep.mubr.bf16.mxu0 %v1492
        %3626 = vmatmul.mubr.bf16.gmra.mrb[0].mxu0 %v1491
        %v3627 = vpop.f32.mrb[0].mxu0
        %v3628 = vadd.f32 0.0, %v3627
        %v3629 = vpop.f32.mrb[0].mxu0
        %v3630 = vpop.f32.mrb[0].mxu0
        %v3631 = vadd.f32 0.0, %v3630
        %v3632 = vpop.f32.mrb[0].mxu0
        %3633 = vmatprep.mubr.bf16.mxu0 %v1494
        %3634 = vmatmul.mubr.bf16.gmra.mrb[0].mxu0 %v1493
        %v3635 = vpop.f32.mrb[0].mxu0
        %v3636 = vadd.f32 0.0, %v3635
        %v3637 = vpop.f32.mrb[0].mxu0
        %v3638 = vpop.f32.mrb[0].mxu0
        %v3639 = vadd.f32 0.0, %v3638
        %v3640 = vpop.f32.mrb[0].mxu0
        %3641 = vmatprep.mubr.bf16.mxu0 %v1496
        %3642 = vmatmul.mubr.bf16.gmra.mrb[0].mxu0 %v1495
        %v3643 = vpop.f32.mrb[0].mxu0
        %v3644 = vadd.f32 0.0, %v3643
        %v3645 = vpop.f32.mrb[0].mxu0
        %v3646 = vpop.f32.mrb[0].mxu0
        %v3647 = vpop.f32.mrb[0].mxu0
        %3648 = vdwg.mxu0
        %v3649 = vrcp.pop %v3644
        %v3650 = vlaneseq
        %v3651 = vshrl.u32 %v3650, 7
        %v3652 = vsub.s32 0, %v3651
        %v3653 = vrot.slane %v3649, %v3652
        %v3654 = vmul.f32 %v3628, %v3653
        %v3655 = vmul.f32 %v3631, %v3653
        %v3656 = vmul.f32 %v3636, %v3653
        %v3657 = vmul.f32 %v3639, %v3653
        %v3658 = vadd.f32 %v3654, 0.0
        %v3659 = vadd.f32 %v3655, 0.0
        %v3660 = vadd.f32 %v3656, 0.0
        %v3661 = vadd.f32 %v3657, 0.0
        %v3663 = vunpack.c.h.b16 %v597
        %v3664 = vpack.c.b16 %v3663, %v3663
        %3666 = vxpose.xlu0.c.b16.start [1/8] %v3664, 128
        %3667 = vxpose.xlu0.c.b16.cont [2/8] 0, 128
        %3668 = vxpose.xlu0.c.b16.cont [3/8] 0, 128
        %3669 = vxpose.xlu0.c.b16.cont [4/8] 0, 128
        %3670 = vxpose.xlu0.c.b16.cont [5/8] 0, 128
        %3671 = vxpose.xlu0.c.b16.cont [6/8] 0, 128
        %3672 = vxpose.xlu0.c.b16.cont [7/8] 0, 128
        %3673 = vxpose.xlu0.c.b16.end [8/8] 0, 128
        %v3674 = vpop.trf.xlu0
        %v3675 = vpop.trf.xlu0
        %v3676 = vpop.trf.xlu0
        %v3677 = vpop.trf.xlu0
        %v3678 = vpop.trf.xlu0
        %v3679 = vpop.trf.xlu0
        %v3680 = vpop.trf.xlu0
        %v3681 = vpop.trf.xlu0
        %v3683 = vsel %vm623, %v3674, 0
        %v3686 = vsel %vm623, %v3675, 0
        %v3689 = vsel %vm623, %v3676, 0
        %v3692 = vsel %vm623, %v3677, 0
        %v3695 = vsel %vm623, %v3678, 0
        %v3698 = vsel %vm623, %v3679, 0
        %v3701 = vsel %vm623, %v3680, 0
        %v3704 = vsel %vm623, %v3681, 0
        %3706 = vmatprep.subr.bf16.mxu0 %v1621
        %3707 = vmatpush1.bf16.msra.mxu0 %v1618
        %3708 = vmatprep.subr.bf16.mxu0 0
        %3709 = vmatpush1.bf16.msra.mxu0 0
        %3710 = vmatprep.subr.bf16.mxu0 0
        %3711 = vmatpush1.bf16.msra.mxu0 0
        %3712 = vmatprep.subr.bf16.mxu0 0
        %3713 = vmatpush1.bf16.msra.mxu0 0
        %3714 = vmatprep.subr.bf16.mxu0 0
        %3715 = vmatpush1.bf16.msra.mxu0 0
        %3716 = vmatprep.subr.bf16.mxu0 0
        %3717 = vmatpush1.bf16.msra.mxu0 0
        %3718 = vmatprep.subr.bf16.mxu0 0
        %3719 = vmatpush1.bf16.msra.mxu0 0
        %3720 = vmatprep.subr.bf16.mxu0 0
        %3721 = vmatpush1.bf16.msra.mxu0 0
        %3722 = vmatprep.subr.bf16.mxu0 0
        %3723 = vmatpush1.bf16.msra.mxu0 0
        %3724 = vmatprep.subr.bf16.mxu0 0
        %3725 = vmatpush1.bf16.msra.mxu0 0
        %3726 = vmatprep.subr.bf16.mxu0 0
        %3727 = vmatpush1.bf16.msra.mxu0 0
        %3728 = vmatprep.subr.bf16.mxu0 0
        %3729 = vmatpush1.bf16.msra.mxu0 0
        %3730 = vmatprep.subr.bf16.mxu0 0
        %3731 = vmatpush1.bf16.msra.mxu0 0
        %3732 = vmatprep.subr.bf16.mxu0 0
        %3733 = vmatpush1.bf16.msra.mxu0 0
        %3734 = vmatprep.subr.bf16.mxu0 0
        %3735 = vmatpush1.bf16.msra.mxu0 0
        %3736 = vmatprep.subr.bf16.mxu0 0
        %3737 = vmatpush1.bf16.msra.mxu0 0
        %3738 = vmatprep.mubr.bf16.mxu0 0
        %3739 = vmatmul.mubr.bf16.gmra.mrb[0].mxu0 %v3683
        %v3740 = vpop.f32.mrb[0].mxu0
        %v3741 = vadd.f32 0.0, %v3740
        %v3742 = vpop.f32.mrb[0].mxu0
        %v3743 = vadd.f32 0.0, %v3742
        %v3744 = vpop.f32.mrb[0].mxu0
        %v3745 = vadd.f32 0.0, %v3744
        %v3746 = vpop.f32.mrb[0].mxu0
        %v3747 = vadd.f32 0.0, %v3746
        %3748 = vmatprep.mubr.bf16.mxu0 0
        %3749 = vmatmul.mubr.bf16.gmra.mrb[0].mxu0 %v3686
        %v3750 = vpop.f32.mrb[0].mxu0
        %v3751 = vadd.f32 0.0, %v3750
        %v3752 = vpop.f32.mrb[0].mxu0
        %v3753 = vadd.f32 0.0, %v3752
        %v3754 = vpop.f32.mrb[0].mxu0
        %v3755 = vadd.f32 0.0, %v3754
        %v3756 = vpop.f32.mrb[0].mxu0
        %v3757 = vadd.f32 0.0, %v3756
        %3758 = vmatprep.mubr.bf16.mxu0 0
        %3759 = vmatmul.mubr.bf16.gmra.mrb[0].mxu0 %v3689
        %v3760 = vpop.f32.mrb[0].mxu0
        %v3761 = vadd.f32 0.0, %v3760
        %v3762 = vpop.f32.mrb[0].mxu0
        %v3763 = vadd.f32 0.0, %v3762
        %v3764 = vpop.f32.mrb[0].mxu0
        %v3765 = vadd.f32 0.0, %v3764
        %v3766 = vpop.f32.mrb[0].mxu0
        %v3767 = vadd.f32 0.0, %v3766
        %3768 = vmatprep.mubr.bf16.mxu0 0
        %3769 = vmatmul.mubr.bf16.gmra.mrb[0].mxu0 %v3692
        %v3770 = vpop.f32.mrb[0].mxu0
        %v3771 = vadd.f32 0.0, %v3770
        %v3772 = vpop.f32.mrb[0].mxu0
        %v3773 = vadd.f32 0.0, %v3772
        %v3774 = vpop.f32.mrb[0].mxu0
        %v3775 = vadd.f32 0.0, %v3774
        %v3776 = vpop.f32.mrb[0].mxu0
        %v3777 = vadd.f32 0.0, %v3776
        %3778 = vmatprep.mubr.bf16.mxu0 0
        %3779 = vmatmul.mubr.bf16.gmra.mrb[0].mxu0 %v3695
        %v3780 = vpop.f32.mrb[0].mxu0
        %v3781 = vadd.f32 0.0, %v3780
        %v3782 = vpop.f32.mrb[0].mxu0
        %v3783 = vadd.f32 0.0, %v3782
        %v3784 = vpop.f32.mrb[0].mxu0
        %v3785 = vadd.f32 0.0, %v3784
        %v3786 = vpop.f32.mrb[0].mxu0
        %v3787 = vadd.f32 0.0, %v3786
        %3788 = vmatprep.mubr.bf16.mxu0 0
        %3789 = vmatmul.mubr.bf16.gmra.mrb[0].mxu0 %v3698
        %v3790 = vpop.f32.mrb[0].mxu0
        %v3791 = vadd.f32 0.0, %v3790
        %v3792 = vpop.f32.mrb[0].mxu0
        %v3793 = vadd.f32 0.0, %v3792
        %v3794 = vpop.f32.mrb[0].mxu0
        %v3795 = vadd.f32 0.0, %v3794
        %v3796 = vpop.f32.mrb[0].mxu0
        %v3797 = vadd.f32 0.0, %v3796
        %3798 = vmatprep.mubr.bf16.mxu0 0
        %3799 = vmatmul.mubr.bf16.gmra.mrb[0].mxu0 %v3701
        %v3800 = vpop.f32.mrb[0].mxu0
        %v3801 = vadd.f32 0.0, %v3800
        %v3802 = vpop.f32.mrb[0].mxu0
        %v3803 = vadd.f32 0.0, %v3802
        %v3804 = vpop.f32.mrb[0].mxu0
        %v3805 = vadd.f32 0.0, %v3804
        %v3806 = vpop.f32.mrb[0].mxu0
        %v3807 = vadd.f32 0.0, %v3806
        %3808 = vmatprep.mubr.bf16.mxu0 0
        %3809 = vmatmul.mubr.bf16.gmra.mrb[0].mxu0 %v3704
        %v3810 = vpop.f32.mrb[0].mxu0
        %v3811 = vadd.f32 0.0, %v3810
        %v3812 = vpop.f32.mrb[0].mxu0
        %v3813 = vadd.f32 0.0, %v3812
        %v3814 = vpop.f32.mrb[0].mxu0
        %v3815 = vadd.f32 0.0, %v3814
        %v3816 = vpop.f32.mrb[0].mxu0
        %v3817 = vadd.f32 0.0, %v3816
        %3818 = vdwg.mxu0
        %v3819 = vmax.f32 %v3741, %v3743
        %3820 = vmax.xlane.f32.xlu0 %v3819
        %v3821 = vpop.xlane.xlu0 %3820
        %v3822 = vmax.f32 %v3745, %v3747
        %3823 = vmax.xlane.f32.xlu0 %v3822
        %v3824 = vpop.xlane.xlu0 %3823
        %v3825 = vmax.f32 %v3751, %v3753
        %3826 = vmax.xlane.f32.xlu0 %v3825
        %v3827 = vpop.xlane.xlu0 %3826
        %v3828 = vmax.f32 %v3755, %v3757
        %3829 = vmax.xlane.f32.xlu0 %v3828
        %v3830 = vpop.xlane.xlu0 %3829
        %v3831 = vmax.f32 %v3761, %v3763
        %3832 = vmax.xlane.f32.xlu0 %v3831
        %v3833 = vpop.xlane.xlu0 %3832
        %v3834 = vmax.f32 %v3765, %v3767
        %3835 = vmax.xlane.f32.xlu0 %v3834
        %v3836 = vpop.xlane.xlu0 %3835
        %v3837 = vmax.f32 %v3771, %v3773
        %3838 = vmax.xlane.f32.xlu0 %v3837
        %v3839 = vpop.xlane.xlu0 %3838
        %v3840 = vmax.f32 %v3775, %v3777
        %3841 = vmax.xlane.f32.xlu0 %v3840
        %v3842 = vpop.xlane.xlu0 %3841
        %v3843 = vmax.f32 %v3781, %v3783
        %3844 = vmax.xlane.f32.xlu0 %v3843
        %v3845 = vpop.xlane.xlu0 %3844
        %v3846 = vmax.f32 %v3785, %v3787
        %3847 = vmax.xlane.f32.xlu0 %v3846
        %v3848 = vpop.xlane.xlu0 %3847
        %v3849 = vmax.f32 %v3791, %v3793
        %3850 = vmax.xlane.f32.xlu0 %v3849
        %v3851 = vpop.xlane.xlu0 %3850
        %v3852 = vmax.f32 %v3795, %v3797
        %3853 = vmax.xlane.f32.xlu0 %v3852
        %v3854 = vpop.xlane.xlu0 %3853
        %v3855 = vmax.f32 %v3801, %v3803
        %3856 = vmax.xlane.f32.xlu0 %v3855
        %v3857 = vpop.xlane.xlu0 %3856
        %v3858 = vmax.f32 %v3805, %v3807
        %3859 = vmax.xlane.f32.xlu0 %v3858
        %v3860 = vpop.xlane.xlu0 %3859
        %v3861 = vmax.f32 %v3811, %v3813
        %3862 = vmax.xlane.f32.xlu0 %v3861
        %v3863 = vpop.xlane.xlu0 %3862
        %v3864 = vmax.f32 %v3815, %v3817
        %3865 = vmax.xlane.f32.xlu0 %v3864
        %v3866 = vpop.xlane.xlu0 %3865
        %v3867 = vsub.f32 %v3741, %v3821
        %v3868 = vsub.f32 %v3743, %v3821
        %v3869 = vsub.f32 %v3745, %v3824
        %v3870 = vsub.f32 %v3747, %v3824
        %v3871 = vsub.f32 %v3751, %v3827
        %v3872 = vsub.f32 %v3753, %v3827
        %v3873 = vsub.f32 %v3755, %v3830
        %v3874 = vsub.f32 %v3757, %v3830
        %v3875 = vsub.f32 %v3761, %v3833
        %v3876 = vsub.f32 %v3763, %v3833
        %v3877 = vsub.f32 %v3765, %v3836
        %v3878 = vsub.f32 %v3767, %v3836
        %v3879 = vsub.f32 %v3771, %v3839
        %v3880 = vsub.f32 %v3773, %v3839
        %v3881 = vsub.f32 %v3775, %v3842
        %v3882 = vsub.f32 %v3777, %v3842
        %v3883 = vsub.f32 %v3781, %v3845
        %v3884 = vsub.f32 %v3783, %v3845
        %v3885 = vsub.f32 %v3785, %v3848
        %v3886 = vsub.f32 %v3787, %v3848
        %v3887 = vsub.f32 %v3791, %v3851
        %v3888 = vsub.f32 %v3793, %v3851
        %v3889 = vsub.f32 %v3795, %v3854
        %v3890 = vsub.f32 %v3797, %v3854
        %v3891 = vsub.f32 %v3801, %v3857
        %v3892 = vsub.f32 %v3803, %v3857
        %v3893 = vsub.f32 %v3805, %v3860
        %v3894 = vsub.f32 %v3807, %v3860
        %v3895 = vsub.f32 %v3811, %v3863
        %v3896 = vsub.f32 %v3813, %v3863
        %v3897 = vsub.f32 %v3815, %v3866
        %v3898 = vsub.f32 %v3817, %v3866
        %v3899 = vmul.f32 %v3867, 1.442695
        %v3900 = vpow.pop %v3899
        %v3901 = vmul.f32 %v3868, 1.442695
        %v3902 = vpow.pop %v3901
        %v3903 = vmul.f32 %v3869, 1.442695
        %v3904 = vpow.pop %v3903
        %v3905 = vmul.f32 %v3870, 1.442695
        %v3906 = vpow.pop %v3905
        %v3907 = vmul.f32 %v3871, 1.442695
        %v3908 = vpow.pop %v3907
        %v3909 = vmul.f32 %v3872, 1.442695
        %v3910 = vpow.pop %v3909
        %v3911 = vmul.f32 %v3873, 1.442695
        %v3912 = vpow.pop %v3911
        %v3913 = vmul.f32 %v3874, 1.442695
        %v3914 = vpow.pop %v3913
        %v3915 = vmul.f32 %v3875, 1.442695
        %v3916 = vpow.pop %v3915
        %v3917 = vmul.f32 %v3876, 1.442695
        %v3918 = vpow.pop %v3917
        %v3919 = vmul.f32 %v3877, 1.442695
        %v3920 = vpow.pop %v3919
        %v3921 = vmul.f32 %v3878, 1.442695
        %v3922 = vpow.pop %v3921
        %v3923 = vmul.f32 %v3879, 1.442695
        %v3924 = vpow.pop %v3923
        %v3925 = vmul.f32 %v3880, 1.442695
        %v3926 = vpow.pop %v3925
        %v3927 = vmul.f32 %v3881, 1.442695
        %v3928 = vpow.pop %v3927
        %v3929 = vmul.f32 %v3882, 1.442695
        %v3930 = vpow.pop %v3929
        %v3931 = vmul.f32 %v3883, 1.442695
        %v3932 = vpow.pop %v3931
        %v3933 = vmul.f32 %v3884, 1.442695
        %v3934 = vpow.pop %v3933
        %v3935 = vmul.f32 %v3885, 1.442695
        %v3936 = vpow.pop %v3935
        %v3937 = vmul.f32 %v3886, 1.442695
        %v3938 = vpow.pop %v3937
        %v3939 = vmul.f32 %v3887, 1.442695
        %v3940 = vpow.pop %v3939
        %v3941 = vmul.f32 %v3888, 1.442695
        %v3942 = vpow.pop %v3941
        %v3943 = vmul.f32 %v3889, 1.442695
        %v3944 = vpow.pop %v3943
        %v3945 = vmul.f32 %v3890, 1.442695
        %v3946 = vpow.pop %v3945
        %v3947 = vmul.f32 %v3891, 1.442695
        %v3948 = vpow.pop %v3947
        %v3949 = vmul.f32 %v3892, 1.442695
        %v3950 = vpow.pop %v3949
        %v3951 = vmul.f32 %v3893, 1.442695
        %v3952 = vpow.pop %v3951
        %v3953 = vmul.f32 %v3894, 1.442695
        %v3954 = vpow.pop %v3953
        %v3955 = vmul.f32 %v3895, 1.442695
        %v3956 = vpow.pop %v3955
        %v3957 = vmul.f32 %v3896, 1.442695
        %v3958 = vpow.pop %v3957
        %v3959 = vmul.f32 %v3897, 1.442695
        %v3960 = vpow.pop %v3959
        %v3961 = vmul.f32 %v3898, 1.442695
        %v3962 = vpow.pop %v3961
        %v3963 = vpack.c.bf16 %v3904, %v3900
        %v3964 = vpack.c.bf16 %v3906, %v3902
        %v3965 = vpack.c.bf16 %v3912, %v3908
        %v3966 = vpack.c.bf16 %v3914, %v3910
        %v3967 = vpack.c.bf16 %v3920, %v3916
        %v3968 = vpack.c.bf16 %v3922, %v3918
        %v3969 = vpack.c.bf16 %v3928, %v3924
        %v3970 = vpack.c.bf16 %v3930, %v3926
        %v3971 = vpack.c.bf16 %v3936, %v3932
        %v3972 = vpack.c.bf16 %v3938, %v3934
        %v3973 = vpack.c.bf16 %v3944, %v3940
        %v3974 = vpack.c.bf16 %v3946, %v3942
        %v3975 = vpack.c.bf16 %v3952, %v3948
        %v3976 = vpack.c.bf16 %v3954, %v3950
        %v3977 = vpack.c.bf16 %v3960, %v3956
        %v3978 = vpack.c.bf16 %v3962, %v3958
        %3979 = vmatprep.subr.bf16.mxu0 %v3964
        %3980 = vmatpush1.bf16.xpose.msra.mxu0 %v3963
        %3981 = vmatprep.subr.bf16.mxu0 %v3966
        %3982 = vmatpush1.bf16.xpose.msra.mxu0 %v3965
        %3983 = vmatprep.subr.bf16.mxu0 %v3968
        %3984 = vmatpush1.bf16.xpose.msra.mxu0 %v3967
        %3985 = vmatprep.subr.bf16.mxu0 %v3970
        %3986 = vmatpush1.bf16.xpose.msra.mxu0 %v3969
        %3987 = vmatprep.subr.bf16.mxu0 %v3972
        %3988 = vmatpush1.bf16.xpose.msra.mxu0 %v3971
        %3989 = vmatprep.subr.bf16.mxu0 %v3974
        %3990 = vmatpush1.bf16.xpose.msra.mxu0 %v3973
        %3991 = vmatprep.subr.bf16.mxu0 %v3976
        %3992 = vmatpush1.bf16.xpose.msra.mxu0 %v3975
        %3993 = vmatprep.subr.bf16.mxu0 %v3978
        %3994 = vmatpush1.bf16.xpose.msra.mxu0 %v3977
        %3995 = vmatprep.subr.bf16.mxu0 0
        %3996 = vmatpush1.bf16.xpose.msra.mxu0 0
        %3997 = vmatprep.subr.bf16.mxu0 0
        %3998 = vmatpush1.bf16.xpose.msra.mxu0 0
        %3999 = vmatprep.subr.bf16.mxu0 0
        %4000 = vmatpush1.bf16.xpose.msra.mxu0 0
        %4001 = vmatprep.subr.bf16.mxu0 0
        %4002 = vmatpush1.bf16.xpose.msra.mxu0 0
        %4003 = vmatprep.subr.bf16.mxu0 0
        %4004 = vmatpush1.bf16.xpose.msra.mxu0 0
        %4005 = vmatprep.subr.bf16.mxu0 0
        %4006 = vmatpush1.bf16.xpose.msra.mxu0 0
        %4007 = vmatprep.subr.bf16.mxu0 0
        %4008 = vmatpush1.bf16.xpose.msra.mxu0 0
        %4009 = vmatprep.subr.bf16.mxu0 0
        %4010 = vmatpush1.bf16.xpose.msra.mxu0 0
        %4011 = vmatprep.mubr.bf16.mxu0 %v1917
        %4012 = vmatmul.mubr.bf16.gmra.mrb[0].mxu0 %v1916
        %v4013 = vpop.f32.mrb[0].mxu0
        %v4014 = vadd.f32 0.0, %v4013
        %v4015 = vpop.f32.mrb[0].mxu0
        %v4016 = vpop.f32.mrb[0].mxu0
        %v4017 = vadd.f32 0.0, %v4016
        %v4018 = vpop.f32.mrb[0].mxu0
        %4019 = vmatprep.mubr.bf16.mxu0 %v1919
        %4020 = vmatmul.mubr.bf16.gmra.mrb[0].mxu0 %v1918
        %v4021 = vpop.f32.mrb[0].mxu0
        %v4022 = vadd.f32 0.0, %v4021
        %v4023 = vpop.f32.mrb[0].mxu0
        %v4024 = vpop.f32.mrb[0].mxu0
        %v4025 = vadd.f32 0.0, %v4024
        %v4026 = vpop.f32.mrb[0].mxu0
        %4027 = vmatprep.mubr.bf16.mxu0 %v1921
        %4028 = vmatmul.mubr.bf16.gmra.mrb[0].mxu0 %v1920
        %v4029 = vpop.f32.mrb[0].mxu0
        %v4030 = vadd.f32 0.0, %v4029
        %v4031 = vpop.f32.mrb[0].mxu0
        %v4032 = vpop.f32.mrb[0].mxu0
        %v4033 = vpop.f32.mrb[0].mxu0
        %4034 = vdwg.mxu0
        %v4035 = vrcp.pop %v4030
        %v4036 = vlaneseq
        %v4037 = vshrl.u32 %v4036, 7
        %v4038 = vsub.s32 0, %v4037
        %v4039 = vrot.slane %v4035, %v4038
        %v4040 = vmul.f32 %v4014, %v4039
        %v4041 = vmul.f32 %v4017, %v4039
        %v4042 = vmul.f32 %v4022, %v4039
        %v4043 = vmul.f32 %v4025, %v4039
        %v4044 = vadd.f32 %v3658, %v4040
        %v4045 = vadd.f32 %v3659, %v4041
        %v4046 = vadd.f32 %v3660, %v4042
        %v4047 = vadd.f32 %v3661, %v4043
        %v4049 = vunpack.c.h.b16 %v598
        %v4050 = vpack.c.b16 %v4049, %v4049
        %4052 = vxpose.xlu0.c.b16.start [1/8] %v4050, 128
        %4053 = vxpose.xlu0.c.b16.cont [2/8] 0, 128
        %4054 = vxpose.xlu0.c.b16.cont [3/8] 0, 128
        %4055 = vxpose.xlu0.c.b16.cont [4/8] 0, 128
        %4056 = vxpose.xlu0.c.b16.cont [5/8] 0, 128
        %4057 = vxpose.xlu0.c.b16.cont [6/8] 0, 128
        %4058 = vxpose.xlu0.c.b16.cont [7/8] 0, 128
        %4059 = vxpose.xlu0.c.b16.end [8/8] 0, 128
        %v4060 = vpop.trf.xlu0
        %v4061 = vpop.trf.xlu0
        %v4062 = vpop.trf.xlu0
        %v4063 = vpop.trf.xlu0
        %v4064 = vpop.trf.xlu0
        %v4065 = vpop.trf.xlu0
        %v4066 = vpop.trf.xlu0
        %v4067 = vpop.trf.xlu0
        %v4069 = vsel %vm623, %v4060, 0
        %v4072 = vsel %vm623, %v4061, 0
        %v4075 = vsel %vm623, %v4062, 0
        %v4078 = vsel %vm623, %v4063, 0
        %v4081 = vsel %vm623, %v4064, 0
        %v4084 = vsel %vm623, %v4065, 0
        %v4087 = vsel %vm623, %v4066, 0
        %v4090 = vsel %vm623, %v4067, 0
        %4092 = vmatprep.subr.bf16.mxu0 %v2046
        %4093 = vmatpush1.bf16.msra.mxu0 %v2043
        %4094 = vmatprep.subr.bf16.mxu0 0
        %4095 = vmatpush1.bf16.msra.mxu0 0
        %4096 = vmatprep.subr.bf16.mxu0 0
        %4097 = vmatpush1.bf16.msra.mxu0 0
        %4098 = vmatprep.subr.bf16.mxu0 0
        %4099 = vmatpush1.bf16.msra.mxu0 0
        %4100 = vmatprep.subr.bf16.mxu0 0
        %4101 = vmatpush1.bf16.msra.mxu0 0
        %4102 = vmatprep.subr.bf16.mxu0 0
        %4103 = vmatpush1.bf16.msra.mxu0 0
        %4104 = vmatprep.subr.bf16.mxu0 0
        %4105 = vmatpush1.bf16.msra.mxu0 0
        %4106 = vmatprep.subr.bf16.mxu0 0
        %4107 = vmatpush1.bf16.msra.mxu0 0
        %4108 = vmatprep.subr.bf16.mxu0 0
        %4109 = vmatpush1.bf16.msra.mxu0 0
        %4110 = vmatprep.subr.bf16.mxu0 0
        %4111 = vmatpush1.bf16.msra.mxu0 0
        %4112 = vmatprep.subr.bf16.mxu0 0
        %4113 = vmatpush1.bf16.msra.mxu0 0
        %4114 = vmatprep.subr.bf16.mxu0 0
        %4115 = vmatpush1.bf16.msra.mxu0 0
        %4116 = vmatprep.subr.bf16.mxu0 0
        %4117 = vmatpush1.bf16.msra.mxu0 0
        %4118 = vmatprep.subr.bf16.mxu0 0
        %4119 = vmatpush1.bf16.msra.mxu0 0
        %4120 = vmatprep.subr.bf16.mxu0 0
        %4121 = vmatpush1.bf16.msra.mxu0 0
        %4122 = vmatprep.subr.bf16.mxu0 0
        %4123 = vmatpush1.bf16.msra.mxu0 0
        %4124 = vmatprep.mubr.bf16.mxu0 0
        %4125 = vmatmul.mubr.bf16.gmra.mrb[0].mxu0 %v4069
        %v4126 = vpop.f32.mrb[0].mxu0
        %v4127 = vadd.f32 0.0, %v4126
        %v4128 = vpop.f32.mrb[0].mxu0
        %v4129 = vadd.f32 0.0, %v4128
        %v4130 = vpop.f32.mrb[0].mxu0
        %v4131 = vadd.f32 0.0, %v4130
        %v4132 = vpop.f32.mrb[0].mxu0
        %v4133 = vadd.f32 0.0, %v4132
        %4134 = vmatprep.mubr.bf16.mxu0 0
        %4135 = vmatmul.mubr.bf16.gmra.mrb[0].mxu0 %v4072
        %v4136 = vpop.f32.mrb[0].mxu0
        %v4137 = vadd.f32 0.0, %v4136
        %v4138 = vpop.f32.mrb[0].mxu0
        %v4139 = vadd.f32 0.0, %v4138
        %v4140 = vpop.f32.mrb[0].mxu0
        %v4141 = vadd.f32 0.0, %v4140
        %v4142 = vpop.f32.mrb[0].mxu0
        %v4143 = vadd.f32 0.0, %v4142
        %4144 = vmatprep.mubr.bf16.mxu0 0
        %4145 = vmatmul.mubr.bf16.gmra.mrb[0].mxu0 %v4075
        %v4146 = vpop.f32.mrb[0].mxu0
        %v4147 = vadd.f32 0.0, %v4146
        %v4148 = vpop.f32.mrb[0].mxu0
        %v4149 = vadd.f32 0.0, %v4148
        %v4150 = vpop.f32.mrb[0].mxu0
        %v4151 = vadd.f32 0.0, %v4150
        %v4152 = vpop.f32.mrb[0].mxu0
        %v4153 = vadd.f32 0.0, %v4152
        %4154 = vmatprep.mubr.bf16.mxu0 0
        %4155 = vmatmul.mubr.bf16.gmra.mrb[0].mxu0 %v4078
        %v4156 = vpop.f32.mrb[0].mxu0
        %v4157 = vadd.f32 0.0, %v4156
        %v4158 = vpop.f32.mrb[0].mxu0
        %v4159 = vadd.f32 0.0, %v4158
        %v4160 = vpop.f32.mrb[0].mxu0
        %v4161 = vadd.f32 0.0, %v4160
        %v4162 = vpop.f32.mrb[0].mxu0
        %v4163 = vadd.f32 0.0, %v4162
        %4164 = vmatprep.mubr.bf16.mxu0 0
        %4165 = vmatmul.mubr.bf16.gmra.mrb[0].mxu0 %v4081
        %v4166 = vpop.f32.mrb[0].mxu0
        %v4167 = vadd.f32 0.0, %v4166
        %v4168 = vpop.f32.mrb[0].mxu0
        %v4169 = vadd.f32 0.0, %v4168
        %v4170 = vpop.f32.mrb[0].mxu0
        %v4171 = vadd.f32 0.0, %v4170
        %v4172 = vpop.f32.mrb[0].mxu0
        %v4173 = vadd.f32 0.0, %v4172
        %4174 = vmatprep.mubr.bf16.mxu0 0
        %4175 = vmatmul.mubr.bf16.gmra.mrb[0].mxu0 %v4084
        %v4176 = vpop.f32.mrb[0].mxu0
        %v4177 = vadd.f32 0.0, %v4176
        %v4178 = vpop.f32.mrb[0].mxu0
        %v4179 = vadd.f32 0.0, %v4178
        %v4180 = vpop.f32.mrb[0].mxu0
        %v4181 = vadd.f32 0.0, %v4180
        %v4182 = vpop.f32.mrb[0].mxu0
        %v4183 = vadd.f32 0.0, %v4182
        %4184 = vmatprep.mubr.bf16.mxu0 0
        %4185 = vmatmul.mubr.bf16.gmra.mrb[0].mxu0 %v4087
        %v4186 = vpop.f32.mrb[0].mxu0
        %v4187 = vadd.f32 0.0, %v4186
        %v4188 = vpop.f32.mrb[0].mxu0
        %v4189 = vadd.f32 0.0, %v4188
        %v4190 = vpop.f32.mrb[0].mxu0
        %v4191 = vadd.f32 0.0, %v4190
        %v4192 = vpop.f32.mrb[0].mxu0
        %v4193 = vadd.f32 0.0, %v4192
        %4194 = vmatprep.mubr.bf16.mxu0 0
        %4195 = vmatmul.mubr.bf16.gmra.mrb[0].mxu0 %v4090
        %v4196 = vpop.f32.mrb[0].mxu0
        %v4197 = vadd.f32 0.0, %v4196
        %v4198 = vpop.f32.mrb[0].mxu0
        %v4199 = vadd.f32 0.0, %v4198
        %v4200 = vpop.f32.mrb[0].mxu0
        %v4201 = vadd.f32 0.0, %v4200
        %v4202 = vpop.f32.mrb[0].mxu0
        %v4203 = vadd.f32 0.0, %v4202
        %4204 = vdwg.mxu0
        %v4205 = vmax.f32 %v4127, %v4129
        %4206 = vmax.xlane.f32.xlu0 %v4205
        %v4207 = vpop.xlane.xlu0 %4206
        %v4208 = vmax.f32 %v4131, %v4133
        %4209 = vmax.xlane.f32.xlu0 %v4208
        %v4210 = vpop.xlane.xlu0 %4209
        %v4211 = vmax.f32 %v4137, %v4139
        %4212 = vmax.xlane.f32.xlu0 %v4211
        %v4213 = vpop.xlane.xlu0 %4212
        %v4214 = vmax.f32 %v4141, %v4143
        %4215 = vmax.xlane.f32.xlu0 %v4214
        %v4216 = vpop.xlane.xlu0 %4215
        %v4217 = vmax.f32 %v4147, %v4149
        %4218 = vmax.xlane.f32.xlu0 %v4217
        %v4219 = vpop.xlane.xlu0 %4218
        %v4220 = vmax.f32 %v4151, %v4153
        %4221 = vmax.xlane.f32.xlu0 %v4220
        %v4222 = vpop.xlane.xlu0 %4221
        %v4223 = vmax.f32 %v4157, %v4159
        %4224 = vmax.xlane.f32.xlu0 %v4223
        %v4225 = vpop.xlane.xlu0 %4224
        %v4226 = vmax.f32 %v4161, %v4163
        %4227 = vmax.xlane.f32.xlu0 %v4226
        %v4228 = vpop.xlane.xlu0 %4227
        %v4229 = vmax.f32 %v4167, %v4169
        %4230 = vmax.xlane.f32.xlu0 %v4229
        %v4231 = vpop.xlane.xlu0 %4230
        %v4232 = vmax.f32 %v4171, %v4173
        %4233 = vmax.xlane.f32.xlu0 %v4232
        %v4234 = vpop.xlane.xlu0 %4233
        %v4235 = vmax.f32 %v4177, %v4179
        %4236 = vmax.xlane.f32.xlu0 %v4235
        %v4237 = vpop.xlane.xlu0 %4236
        %v4238 = vmax.f32 %v4181, %v4183
        %4239 = vmax.xlane.f32.xlu0 %v4238
        %v4240 = vpop.xlane.xlu0 %4239
        %v4241 = vmax.f32 %v4187, %v4189
        %4242 = vmax.xlane.f32.xlu0 %v4241
        %v4243 = vpop.xlane.xlu0 %4242
        %v4244 = vmax.f32 %v4191, %v4193
        %4245 = vmax.xlane.f32.xlu0 %v4244
        %v4246 = vpop.xlane.xlu0 %4245
        %v4247 = vmax.f32 %v4197, %v4199
        %4248 = vmax.xlane.f32.xlu0 %v4247
        %v4249 = vpop.xlane.xlu0 %4248
        %v4250 = vmax.f32 %v4201, %v4203
        %4251 = vmax.xlane.f32.xlu0 %v4250
        %v4252 = vpop.xlane.xlu0 %4251
        %v4253 = vsub.f32 %v4127, %v4207
        %v4254 = vsub.f32 %v4129, %v4207
        %v4255 = vsub.f32 %v4131, %v4210
        %v4256 = vsub.f32 %v4133, %v4210
        %v4257 = vsub.f32 %v4137, %v4213
        %v4258 = vsub.f32 %v4139, %v4213
        %v4259 = vsub.f32 %v4141, %v4216
        %v4260 = vsub.f32 %v4143, %v4216
        %v4261 = vsub.f32 %v4147, %v4219
        %v4262 = vsub.f32 %v4149, %v4219
        %v4263 = vsub.f32 %v4151, %v4222
        %v4264 = vsub.f32 %v4153, %v4222
        %v4265 = vsub.f32 %v4157, %v4225
        %v4266 = vsub.f32 %v4159, %v4225
        %v4267 = vsub.f32 %v4161, %v4228
        %v4268 = vsub.f32 %v4163, %v4228
        %v4269 = vsub.f32 %v4167, %v4231
        %v4270 = vsub.f32 %v4169, %v4231
        %v4271 = vsub.f32 %v4171, %v4234
        %v4272 = vsub.f32 %v4173, %v4234
        %v4273 = vsub.f32 %v4177, %v4237
        %v4274 = vsub.f32 %v4179, %v4237
        %v4275 = vsub.f32 %v4181, %v4240
        %v4276 = vsub.f32 %v4183, %v4240
        %v4277 = vsub.f32 %v4187, %v4243
        %v4278 = vsub.f32 %v4189, %v4243
        %v4279 = vsub.f32 %v4191, %v4246
        %v4280 = vsub.f32 %v4193, %v4246
        %v4281 = vsub.f32 %v4197, %v4249
        %v4282 = vsub.f32 %v4199, %v4249
        %v4283 = vsub.f32 %v4201, %v4252
        %v4284 = vsub.f32 %v4203, %v4252
        %v4285 = vmul.f32 %v4253, 1.442695
        %v4286 = vpow.pop %v4285
        %v4287 = vmul.f32 %v4254, 1.442695
        %v4288 = vpow.pop %v4287
        %v4289 = vmul.f32 %v4255, 1.442695
        %v4290 = vpow.pop %v4289
        %v4291 = vmul.f32 %v4256, 1.442695
        %v4292 = vpow.pop %v4291
        %v4293 = vmul.f32 %v4257, 1.442695
        %v4294 = vpow.pop %v4293
        %v4295 = vmul.f32 %v4258, 1.442695
        %v4296 = vpow.pop %v4295
        %v4297 = vmul.f32 %v4259, 1.442695
        %v4298 = vpow.pop %v4297
        %v4299 = vmul.f32 %v4260, 1.442695
        %v4300 = vpow.pop %v4299
        %v4301 = vmul.f32 %v4261, 1.442695
        %v4302 = vpow.pop %v4301
        %v4303 = vmul.f32 %v4262, 1.442695
        %v4304 = vpow.pop %v4303
        %v4305 = vmul.f32 %v4263, 1.442695
        %v4306 = vpow.pop %v4305
        %v4307 = vmul.f32 %v4264, 1.442695
        %v4308 = vpow.pop %v4307
        %v4309 = vmul.f32 %v4265, 1.442695
        %v4310 = vpow.pop %v4309
        %v4311 = vmul.f32 %v4266, 1.442695
        %v4312 = vpow.pop %v4311
        %v4313 = vmul.f32 %v4267, 1.442695
        %v4314 = vpow.pop %v4313
        %v4315 = vmul.f32 %v4268, 1.442695
        %v4316 = vpow.pop %v4315
        %v4317 = vmul.f32 %v4269, 1.442695
        %v4318 = vpow.pop %v4317
        %v4319 = vmul.f32 %v4270, 1.442695
        %v4320 = vpow.pop %v4319
        %v4321 = vmul.f32 %v4271, 1.442695
        %v4322 = vpow.pop %v4321
        %v4323 = vmul.f32 %v4272, 1.442695
        %v4324 = vpow.pop %v4323
        %v4325 = vmul.f32 %v4273, 1.442695
        %v4326 = vpow.pop %v4325
        %v4327 = vmul.f32 %v4274, 1.442695
        %v4328 = vpow.pop %v4327
        %v4329 = vmul.f32 %v4275, 1.442695
        %v4330 = vpow.pop %v4329
        %v4331 = vmul.f32 %v4276, 1.442695
        %v4332 = vpow.pop %v4331
        %v4333 = vmul.f32 %v4277, 1.442695
        %v4334 = vpow.pop %v4333
        %v4335 = vmul.f32 %v4278, 1.442695
        %v4336 = vpow.pop %v4335
        %v4337 = vmul.f32 %v4279, 1.442695
        %v4338 = vpow.pop %v4337
        %v4339 = vmul.f32 %v4280, 1.442695
        %v4340 = vpow.pop %v4339
        %v4341 = vmul.f32 %v4281, 1.442695
        %v4342 = vpow.pop %v4341
        %v4343 = vmul.f32 %v4282, 1.442695
        %v4344 = vpow.pop %v4343
        %v4345 = vmul.f32 %v4283, 1.442695
        %v4346 = vpow.pop %v4345
        %v4347 = vmul.f32 %v4284, 1.442695
        %v4348 = vpow.pop %v4347
        %v4349 = vpack.c.bf16 %v4290, %v4286
        %v4350 = vpack.c.bf16 %v4292, %v4288
        %v4351 = vpack.c.bf16 %v4298, %v4294
        %v4352 = vpack.c.bf16 %v4300, %v4296
        %v4353 = vpack.c.bf16 %v4306, %v4302
        %v4354 = vpack.c.bf16 %v4308, %v4304
        %v4355 = vpack.c.bf16 %v4314, %v4310
        %v4356 = vpack.c.bf16 %v4316, %v4312
        %v4357 = vpack.c.bf16 %v4322, %v4318
        %v4358 = vpack.c.bf16 %v4324, %v4320
        %v4359 = vpack.c.bf16 %v4330, %v4326
        %v4360 = vpack.c.bf16 %v4332, %v4328
        %v4361 = vpack.c.bf16 %v4338, %v4334
        %v4362 = vpack.c.bf16 %v4340, %v4336
        %v4363 = vpack.c.bf16 %v4346, %v4342
        %v4364 = vpack.c.bf16 %v4348, %v4344
        %4365 = vmatprep.subr.bf16.mxu0 %v4350
        %4366 = vmatpush1.bf16.xpose.msra.mxu0 %v4349
        %4367 = vmatprep.subr.bf16.mxu0 %v4352
        %4368 = vmatpush1.bf16.xpose.msra.mxu0 %v4351
        %4369 = vmatprep.subr.bf16.mxu0 %v4354
        %4370 = vmatpush1.bf16.xpose.msra.mxu0 %v4353
        %4371 = vmatprep.subr.bf16.mxu0 %v4356
        %4372 = vmatpush1.bf16.xpose.msra.mxu0 %v4355
        %4373 = vmatprep.subr.bf16.mxu0 %v4358
        %4374 = vmatpush1.bf16.xpose.msra.mxu0 %v4357
        %4375 = vmatprep.subr.bf16.mxu0 %v4360
        %4376 = vmatpush1.bf16.xpose.msra.mxu0 %v4359
        %4377 = vmatprep.subr.bf16.mxu0 %v4362
        %4378 = vmatpush1.bf16.xpose.msra.mxu0 %v4361
        %4379 = vmatprep.subr.bf16.mxu0 %v4364
        %4380 = vmatpush1.bf16.xpose.msra.mxu0 %v4363
        %4381 = vmatprep.subr.bf16.mxu0 0
        %4382 = vmatpush1.bf16.xpose.msra.mxu0 0
        %4383 = vmatprep.subr.bf16.mxu0 0
        %4384 = vmatpush1.bf16.xpose.msra.mxu0 0
        %4385 = vmatprep.subr.bf16.mxu0 0
        %4386 = vmatpush1.bf16.xpose.msra.mxu0 0
        %4387 = vmatprep.subr.bf16.mxu0 0
        %4388 = vmatpush1.bf16.xpose.msra.mxu0 0
        %4389 = vmatprep.subr.bf16.mxu0 0
        %4390 = vmatpush1.bf16.xpose.msra.mxu0 0
        %4391 = vmatprep.subr.bf16.mxu0 0
        %4392 = vmatpush1.bf16.xpose.msra.mxu0 0
        %4393 = vmatprep.subr.bf16.mxu0 0
        %4394 = vmatpush1.bf16.xpose.msra.mxu0 0
        %4395 = vmatprep.subr.bf16.mxu0 0
        %4396 = vmatpush1.bf16.xpose.msra.mxu0 0
        %4397 = vmatprep.mubr.bf16.mxu0 %v2342
        %4398 = vmatmul.mubr.bf16.gmra.mrb[0].mxu0 %v2341
        %v4399 = vpop.f32.mrb[0].mxu0
        %v4400 = vadd.f32 0.0, %v4399
        %v4401 = vpop.f32.mrb[0].mxu0
        %v4402 = vpop.f32.mrb[0].mxu0
        %v4403 = vadd.f32 0.0, %v4402
        %v4404 = vpop.f32.mrb[0].mxu0
        %4405 = vmatprep.mubr.bf16.mxu0 %v2344
        %4406 = vmatmul.mubr.bf16.gmra.mrb[0].mxu0 %v2343
        %v4407 = vpop.f32.mrb[0].mxu0
        %v4408 = vadd.f32 0.0, %v4407
        %v4409 = vpop.f32.mrb[0].mxu0
        %v4410 = vpop.f32.mrb[0].mxu0
        %v4411 = vadd.f32 0.0, %v4410
        %v4412 = vpop.f32.mrb[0].mxu0
        %4413 = vmatprep.mubr.bf16.mxu0 %v2346
        %4414 = vmatmul.mubr.bf16.gmra.mrb[0].mxu0 %v2345
        %v4415 = vpop.f32.mrb[0].mxu0
        %v4416 = vadd.f32 0.0, %v4415
        %v4417 = vpop.f32.mrb[0].mxu0
        %v4418 = vpop.f32.mrb[0].mxu0
        %v4419 = vpop.f32.mrb[0].mxu0
        %4420 = vdwg.mxu0
        %v4421 = vrcp.pop %v4416
        %v4422 = vlaneseq
        %v4423 = vshrl.u32 %v4422, 7
        %v4424 = vsub.s32 0, %v4423
        %v4425 = vrot.slane %v4421, %v4424
        %v4426 = vmul.f32 %v4400, %v4425
        %v4427 = vmul.f32 %v4403, %v4425
        %v4428 = vmul.f32 %v4408, %v4425
        %v4429 = vmul.f32 %v4411, %v4425
        %v4430 = vadd.f32 %v4044, %v4426
        %v4431 = vadd.f32 %v4045, %v4427
        %v4432 = vadd.f32 %v4046, %v4428
        %v4433 = vadd.f32 %v4047, %v4429
        %v4435 = vunpack.c.h.b16 %v599
        %v4436 = vpack.c.b16 %v4435, %v4435
        %4438 = vxpose.xlu0.c.b16.start [1/8] %v4436, 128
        %4439 = vxpose.xlu0.c.b16.cont [2/8] 0, 128
        %4440 = vxpose.xlu0.c.b16.cont [3/8] 0, 128
        %4441 = vxpose.xlu0.c.b16.cont [4/8] 0, 128
        %4442 = vxpose.xlu0.c.b16.cont [5/8] 0, 128
        %4443 = vxpose.xlu0.c.b16.cont [6/8] 0, 128
        %4444 = vxpose.xlu0.c.b16.cont [7/8] 0, 128
        %4445 = vxpose.xlu0.c.b16.end [8/8] 0, 128
        %v4446 = vpop.trf.xlu0
        %v4447 = vpop.trf.xlu0
        %v4448 = vpop.trf.xlu0
        %v4449 = vpop.trf.xlu0
        %v4450 = vpop.trf.xlu0
        %v4451 = vpop.trf.xlu0
        %v4452 = vpop.trf.xlu0
        %v4453 = vpop.trf.xlu0
        %v4455 = vsel %vm623, %v4446, 0
        %v4458 = vsel %vm623, %v4447, 0
        %v4461 = vsel %vm623, %v4448, 0
        %v4464 = vsel %vm623, %v4449, 0
        %v4467 = vsel %vm623, %v4450, 0
        %v4470 = vsel %vm623, %v4451, 0
        %v4473 = vsel %vm623, %v4452, 0
        %v4476 = vsel %vm623, %v4453, 0
        %4478 = vmatprep.subr.bf16.mxu0 %v2471
        %4479 = vmatpush1.bf16.msra.mxu0 %v2468
        %4480 = vmatprep.subr.bf16.mxu0 0
        %4481 = vmatpush1.bf16.msra.mxu0 0
        %4482 = vmatprep.subr.bf16.mxu0 0
        %4483 = vmatpush1.bf16.msra.mxu0 0
        %4484 = vmatprep.subr.bf16.mxu0 0
        %4485 = vmatpush1.bf16.msra.mxu0 0
        %4486 = vmatprep.subr.bf16.mxu0 0
        %4487 = vmatpush1.bf16.msra.mxu0 0
        %4488 = vmatprep.subr.bf16.mxu0 0
        %4489 = vmatpush1.bf16.msra.mxu0 0
        %4490 = vmatprep.subr.bf16.mxu0 0
        %4491 = vmatpush1.bf16.msra.mxu0 0
        %4492 = vmatprep.subr.bf16.mxu0 0
        %4493 = vmatpush1.bf16.msra.mxu0 0
        %4494 = vmatprep.subr.bf16.mxu0 0
        %4495 = vmatpush1.bf16.msra.mxu0 0
        %4496 = vmatprep.subr.bf16.mxu0 0
        %4497 = vmatpush1.bf16.msra.mxu0 0
        %4498 = vmatprep.subr.bf16.mxu0 0
        %4499 = vmatpush1.bf16.msra.mxu0 0
        %4500 = vmatprep.subr.bf16.mxu0 0
        %4501 = vmatpush1.bf16.msra.mxu0 0
        %4502 = vmatprep.subr.bf16.mxu0 0
        %4503 = vmatpush1.bf16.msra.mxu0 0
        %4504 = vmatprep.subr.bf16.mxu0 0
        %4505 = vmatpush1.bf16.msra.mxu0 0
        %4506 = vmatprep.subr.bf16.mxu0 0
        %4507 = vmatpush1.bf16.msra.mxu0 0
        %4508 = vmatprep.subr.bf16.mxu0 0
        %4509 = vmatpush1.bf16.msra.mxu0 0
        %4510 = vmatprep.mubr.bf16.mxu0 0
        %4511 = vmatmul.mubr.bf16.gmra.mrb[0].mxu0 %v4455
        %v4512 = vpop.f32.mrb[0].mxu0
        %v4513 = vadd.f32 0.0, %v4512
        %v4514 = vpop.f32.mrb[0].mxu0
        %v4515 = vadd.f32 0.0, %v4514
        %v4516 = vpop.f32.mrb[0].mxu0
        %v4517 = vadd.f32 0.0, %v4516
        %v4518 = vpop.f32.mrb[0].mxu0
        %v4519 = vadd.f32 0.0, %v4518
        %4520 = vmatprep.mubr.bf16.mxu0 0
        %4521 = vmatmul.mubr.bf16.gmra.mrb[0].mxu0 %v4458
        %v4522 = vpop.f32.mrb[0].mxu0
        %v4523 = vadd.f32 0.0, %v4522
        %v4524 = vpop.f32.mrb[0].mxu0
        %v4525 = vadd.f32 0.0, %v4524
        %v4526 = vpop.f32.mrb[0].mxu0
        %v4527 = vadd.f32 0.0, %v4526
        %v4528 = vpop.f32.mrb[0].mxu0
        %v4529 = vadd.f32 0.0, %v4528
        %4530 = vmatprep.mubr.bf16.mxu0 0
        %4531 = vmatmul.mubr.bf16.gmra.mrb[0].mxu0 %v4461
        %v4532 = vpop.f32.mrb[0].mxu0
        %v4533 = vadd.f32 0.0, %v4532
        %v4534 = vpop.f32.mrb[0].mxu0
        %v4535 = vadd.f32 0.0, %v4534
        %v4536 = vpop.f32.mrb[0].mxu0
        %v4537 = vadd.f32 0.0, %v4536
        %v4538 = vpop.f32.mrb[0].mxu0
        %v4539 = vadd.f32 0.0, %v4538
        %4540 = vmatprep.mubr.bf16.mxu0 0
        %4541 = vmatmul.mubr.bf16.gmra.mrb[0].mxu0 %v4464
        %v4542 = vpop.f32.mrb[0].mxu0
        %v4543 = vadd.f32 0.0, %v4542
        %v4544 = vpop.f32.mrb[0].mxu0
        %v4545 = vadd.f32 0.0, %v4544
        %v4546 = vpop.f32.mrb[0].mxu0
        %v4547 = vadd.f32 0.0, %v4546
        %v4548 = vpop.f32.mrb[0].mxu0
        %v4549 = vadd.f32 0.0, %v4548
        %4550 = vmatprep.mubr.bf16.mxu0 0
        %4551 = vmatmul.mubr.bf16.gmra.mrb[0].mxu0 %v4467
        %v4552 = vpop.f32.mrb[0].mxu0
        %v4553 = vadd.f32 0.0, %v4552
        %v4554 = vpop.f32.mrb[0].mxu0
        %v4555 = vadd.f32 0.0, %v4554
        %v4556 = vpop.f32.mrb[0].mxu0
        %v4557 = vadd.f32 0.0, %v4556
        %v4558 = vpop.f32.mrb[0].mxu0
        %v4559 = vadd.f32 0.0, %v4558
        %4560 = vmatprep.mubr.bf16.mxu0 0
        %4561 = vmatmul.mubr.bf16.gmra.mrb[0].mxu0 %v4470
        %v4562 = vpop.f32.mrb[0].mxu0
        %v4563 = vadd.f32 0.0, %v4562
        %v4564 = vpop.f32.mrb[0].mxu0
        %v4565 = vadd.f32 0.0, %v4564
        %v4566 = vpop.f32.mrb[0].mxu0
        %v4567 = vadd.f32 0.0, %v4566
        %v4568 = vpop.f32.mrb[0].mxu0
        %v4569 = vadd.f32 0.0, %v4568
        %4570 = vmatprep.mubr.bf16.mxu0 0
        %4571 = vmatmul.mubr.bf16.gmra.mrb[0].mxu0 %v4473
        %v4572 = vpop.f32.mrb[0].mxu0
        %v4573 = vadd.f32 0.0, %v4572
        %v4574 = vpop.f32.mrb[0].mxu0
        %v4575 = vadd.f32 0.0, %v4574
        %v4576 = vpop.f32.mrb[0].mxu0
        %v4577 = vadd.f32 0.0, %v4576
        %v4578 = vpop.f32.mrb[0].mxu0
        %v4579 = vadd.f32 0.0, %v4578
        %4580 = vmatprep.mubr.bf16.mxu0 0
        %4581 = vmatmul.mubr.bf16.gmra.mrb[0].mxu0 %v4476
        %v4582 = vpop.f32.mrb[0].mxu0
        %v4583 = vadd.f32 0.0, %v4582
        %v4584 = vpop.f32.mrb[0].mxu0
        %v4585 = vadd.f32 0.0, %v4584
        %v4586 = vpop.f32.mrb[0].mxu0
        %v4587 = vadd.f32 0.0, %v4586
        %v4588 = vpop.f32.mrb[0].mxu0
        %v4589 = vadd.f32 0.0, %v4588
        %4590 = vdwg.mxu0
        %v4591 = vmax.f32 %v4513, %v4515
        %4592 = vmax.xlane.f32.xlu0 %v4591
        %v4593 = vpop.xlane.xlu0 %4592
        %v4594 = vmax.f32 %v4517, %v4519
        %4595 = vmax.xlane.f32.xlu0 %v4594
        %v4596 = vpop.xlane.xlu0 %4595
        %v4597 = vmax.f32 %v4523, %v4525
        %4598 = vmax.xlane.f32.xlu0 %v4597
        %v4599 = vpop.xlane.xlu0 %4598
        %v4600 = vmax.f32 %v4527, %v4529
        %4601 = vmax.xlane.f32.xlu0 %v4600
        %v4602 = vpop.xlane.xlu0 %4601
        %v4603 = vmax.f32 %v4533, %v4535
        %4604 = vmax.xlane.f32.xlu0 %v4603
        %v4605 = vpop.xlane.xlu0 %4604
        %v4606 = vmax.f32 %v4537, %v4539
        %4607 = vmax.xlane.f32.xlu0 %v4606
        %v4608 = vpop.xlane.xlu0 %4607
        %v4609 = vmax.f32 %v4543, %v4545
        %4610 = vmax.xlane.f32.xlu0 %v4609
        %v4611 = vpop.xlane.xlu0 %4610
        %v4612 = vmax.f32 %v4547, %v4549
        %4613 = vmax.xlane.f32.xlu0 %v4612
        %v4614 = vpop.xlane.xlu0 %4613
        %v4615 = vmax.f32 %v4553, %v4555
        %4616 = vmax.xlane.f32.xlu0 %v4615
        %v4617 = vpop.xlane.xlu0 %4616
        %v4618 = vmax.f32 %v4557, %v4559
        %4619 = vmax.xlane.f32.xlu0 %v4618
        %v4620 = vpop.xlane.xlu0 %4619
        %v4621 = vmax.f32 %v4563, %v4565
        %4622 = vmax.xlane.f32.xlu0 %v4621
        %v4623 = vpop.xlane.xlu0 %4622
        %v4624 = vmax.f32 %v4567, %v4569
        %4625 = vmax.xlane.f32.xlu0 %v4624
        %v4626 = vpop.xlane.xlu0 %4625
        %v4627 = vmax.f32 %v4573, %v4575
        %4628 = vmax.xlane.f32.xlu0 %v4627
        %v4629 = vpop.xlane.xlu0 %4628
        %v4630 = vmax.f32 %v4577, %v4579
        %4631 = vmax.xlane.f32.xlu0 %v4630
        %v4632 = vpop.xlane.xlu0 %4631
        %v4633 = vmax.f32 %v4583, %v4585
        %4634 = vmax.xlane.f32.xlu0 %v4633
        %v4635 = vpop.xlane.xlu0 %4634
        %v4636 = vmax.f32 %v4587, %v4589
        %4637 = vmax.xlane.f32.xlu0 %v4636
        %v4638 = vpop.xlane.xlu0 %4637
        %v4639 = vsub.f32 %v4513, %v4593
        %v4640 = vsub.f32 %v4515, %v4593
        %v4641 = vsub.f32 %v4517, %v4596
        %v4642 = vsub.f32 %v4519, %v4596
        %v4643 = vsub.f32 %v4523, %v4599
        %v4644 = vsub.f32 %v4525, %v4599
        %v4645 = vsub.f32 %v4527, %v4602
        %v4646 = vsub.f32 %v4529, %v4602
        %v4647 = vsub.f32 %v4533, %v4605
        %v4648 = vsub.f32 %v4535, %v4605
        %v4649 = vsub.f32 %v4537, %v4608
        %v4650 = vsub.f32 %v4539, %v4608
        %v4651 = vsub.f32 %v4543, %v4611
        %v4652 = vsub.f32 %v4545, %v4611
        %v4653 = vsub.f32 %v4547, %v4614
        %v4654 = vsub.f32 %v4549, %v4614
        %v4655 = vsub.f32 %v4553, %v4617
        %v4656 = vsub.f32 %v4555, %v4617
        %v4657 = vsub.f32 %v4557, %v4620
        %v4658 = vsub.f32 %v4559, %v4620
        %v4659 = vsub.f32 %v4563, %v4623
        %v4660 = vsub.f32 %v4565, %v4623
        %v4661 = vsub.f32 %v4567, %v4626
        %v4662 = vsub.f32 %v4569, %v4626
        %v4663 = vsub.f32 %v4573, %v4629
        %v4664 = vsub.f32 %v4575, %v4629
        %v4665 = vsub.f32 %v4577, %v4632
        %v4666 = vsub.f32 %v4579, %v4632
        %v4667 = vsub.f32 %v4583, %v4635
        %v4668 = vsub.f32 %v4585, %v4635
        %v4669 = vsub.f32 %v4587, %v4638
        %v4670 = vsub.f32 %v4589, %v4638
        %v4671 = vmul.f32 %v4639, 1.442695
        %v4672 = vpow.pop %v4671
        %v4673 = vmul.f32 %v4640, 1.442695
        %v4674 = vpow.pop %v4673
        %v4675 = vmul.f32 %v4641, 1.442695
        %v4676 = vpow.pop %v4675
        %v4677 = vmul.f32 %v4642, 1.442695
        %v4678 = vpow.pop %v4677
        %v4679 = vmul.f32 %v4643, 1.442695
        %v4680 = vpow.pop %v4679
        %v4681 = vmul.f32 %v4644, 1.442695
        %v4682 = vpow.pop %v4681
        %v4683 = vmul.f32 %v4645, 1.442695
        %v4684 = vpow.pop %v4683
        %v4685 = vmul.f32 %v4646, 1.442695
        %v4686 = vpow.pop %v4685
        %v4687 = vmul.f32 %v4647, 1.442695
        %v4688 = vpow.pop %v4687
        %v4689 = vmul.f32 %v4648, 1.442695
        %v4690 = vpow.pop %v4689
        %v4691 = vmul.f32 %v4649, 1.442695
        %v4692 = vpow.pop %v4691
        %v4693 = vmul.f32 %v4650, 1.442695
        %v4694 = vpow.pop %v4693
        %v4695 = vmul.f32 %v4651, 1.442695
        %v4696 = vpow.pop %v4695
        %v4697 = vmul.f32 %v4652, 1.442695
        %v4698 = vpow.pop %v4697
        %v4699 = vmul.f32 %v4653, 1.442695
        %v4700 = vpow.pop %v4699
        %v4701 = vmul.f32 %v4654, 1.442695
        %v4702 = vpow.pop %v4701
        %v4703 = vmul.f32 %v4655, 1.442695
        %v4704 = vpow.pop %v4703
        %v4705 = vmul.f32 %v4656, 1.442695
        %v4706 = vpow.pop %v4705
        %v4707 = vmul.f32 %v4657, 1.442695
        %v4708 = vpow.pop %v4707
        %v4709 = vmul.f32 %v4658, 1.442695
        %v4710 = vpow.pop %v4709
        %v4711 = vmul.f32 %v4659, 1.442695
        %v4712 = vpow.pop %v4711
        %v4713 = vmul.f32 %v4660, 1.442695
        %v4714 = vpow.pop %v4713
        %v4715 = vmul.f32 %v4661, 1.442695
        %v4716 = vpow.pop %v4715
        %v4717 = vmul.f32 %v4662, 1.442695
        %v4718 = vpow.pop %v4717
        %v4719 = vmul.f32 %v4663, 1.442695
        %v4720 = vpow.pop %v4719
        %v4721 = vmul.f32 %v4664, 1.442695
        %v4722 = vpow.pop %v4721
        %v4723 = vmul.f32 %v4665, 1.442695
        %v4724 = vpow.pop %v4723
        %v4725 = vmul.f32 %v4666, 1.442695
        %v4726 = vpow.pop %v4725
        %v4727 = vmul.f32 %v4667, 1.442695
        %v4728 = vpow.pop %v4727
        %v4729 = vmul.f32 %v4668, 1.442695
        %v4730 = vpow.pop %v4729
        %v4731 = vmul.f32 %v4669, 1.442695
        %v4732 = vpow.pop %v4731
        %v4733 = vmul.f32 %v4670, 1.442695
        %v4734 = vpow.pop %v4733
        %v4735 = vpack.c.bf16 %v4676, %v4672
        %v4736 = vpack.c.bf16 %v4678, %v4674
        %v4737 = vpack.c.bf16 %v4684, %v4680
        %v4738 = vpack.c.bf16 %v4686, %v4682
        %v4739 = vpack.c.bf16 %v4692, %v4688
        %v4740 = vpack.c.bf16 %v4694, %v4690
        %v4741 = vpack.c.bf16 %v4700, %v4696
        %v4742 = vpack.c.bf16 %v4702, %v4698
        %v4743 = vpack.c.bf16 %v4708, %v4704
        %v4744 = vpack.c.bf16 %v4710, %v4706
        %v4745 = vpack.c.bf16 %v4716, %v4712
        %v4746 = vpack.c.bf16 %v4718, %v4714
        %v4747 = vpack.c.bf16 %v4724, %v4720
        %v4748 = vpack.c.bf16 %v4726, %v4722
        %v4749 = vpack.c.bf16 %v4732, %v4728
        %v4750 = vpack.c.bf16 %v4734, %v4730
        %4751 = vmatprep.subr.bf16.mxu0 %v4736
        %4752 = vmatpush1.bf16.xpose.msra.mxu0 %v4735
        %4753 = vmatprep.subr.bf16.mxu0 %v4738
        %4754 = vmatpush1.bf16.xpose.msra.mxu0 %v4737
        %4755 = vmatprep.subr.bf16.mxu0 %v4740
        %4756 = vmatpush1.bf16.xpose.msra.mxu0 %v4739
        %4757 = vmatprep.subr.bf16.mxu0 %v4742
        %4758 = vmatpush1.bf16.xpose.msra.mxu0 %v4741
        %4759 = vmatprep.subr.bf16.mxu0 %v4744
        %4760 = vmatpush1.bf16.xpose.msra.mxu0 %v4743
        %4761 = vmatprep.subr.bf16.mxu0 %v4746
        %4762 = vmatpush1.bf16.xpose.msra.mxu0 %v4745
        %4763 = vmatprep.subr.bf16.mxu0 %v4748
        %4764 = vmatpush1.bf16.xpose.msra.mxu0 %v4747
        %4765 = vmatprep.subr.bf16.mxu0 %v4750
        %4766 = vmatpush1.bf16.xpose.msra.mxu0 %v4749
        %4767 = vmatprep.subr.bf16.mxu0 0
        %4768 = vmatpush1.bf16.xpose.msra.mxu0 0
        %4769 = vmatprep.subr.bf16.mxu0 0
        %4770 = vmatpush1.bf16.xpose.msra.mxu0 0
        %4771 = vmatprep.subr.bf16.mxu0 0
        %4772 = vmatpush1.bf16.xpose.msra.mxu0 0
        %4773 = vmatprep.subr.bf16.mxu0 0
        %4774 = vmatpush1.bf16.xpose.msra.mxu0 0
        %4775 = vmatprep.subr.bf16.mxu0 0
        %4776 = vmatpush1.bf16.xpose.msra.mxu0 0
        %4777 = vmatprep.subr.bf16.mxu0 0
        %4778 = vmatpush1.bf16.xpose.msra.mxu0 0
        %4779 = vmatprep.subr.bf16.mxu0 0
        %4780 = vmatpush1.bf16.xpose.msra.mxu0 0
        %4781 = vmatprep.subr.bf16.mxu0 0
        %4782 = vmatpush1.bf16.xpose.msra.mxu0 0
        %4783 = vmatprep.mubr.bf16.mxu0 %v2767
        %4784 = vmatmul.mubr.bf16.gmra.mrb[0].mxu0 %v2766
        %v4785 = vpop.f32.mrb[0].mxu0
        %v4786 = vadd.f32 0.0, %v4785
        %v4787 = vpop.f32.mrb[0].mxu0
        %v4788 = vpop.f32.mrb[0].mxu0
        %v4789 = vadd.f32 0.0, %v4788
        %v4790 = vpop.f32.mrb[0].mxu0
        %4791 = vmatprep.mubr.bf16.mxu0 %v2769
        %4792 = vmatmul.mubr.bf16.gmra.mrb[0].mxu0 %v2768
        %v4793 = vpop.f32.mrb[0].mxu0
        %v4794 = vadd.f32 0.0, %v4793
        %v4795 = vpop.f32.mrb[0].mxu0
        %v4796 = vpop.f32.mrb[0].mxu0
        %v4797 = vadd.f32 0.0, %v4796
        %v4798 = vpop.f32.mrb[0].mxu0
        %4799 = vmatprep.mubr.bf16.mxu0 %v2771
        %4800 = vmatmul.mubr.bf16.gmra.mrb[0].mxu0 %v2770
        %v4801 = vpop.f32.mrb[0].mxu0
        %v4802 = vadd.f32 0.0, %v4801
        %v4803 = vpop.f32.mrb[0].mxu0
        %v4804 = vpop.f32.mrb[0].mxu0
        %v4805 = vpop.f32.mrb[0].mxu0
        %4806 = vdwg.mxu0
        %v4807 = vrcp.pop %v4802
        %v4808 = vlaneseq
        %v4809 = vshrl.u32 %v4808, 7
        %v4810 = vsub.s32 0, %v4809
        %v4811 = vrot.slane %v4807, %v4810
        %v4812 = vmul.f32 %v4786, %v4811
        %v4813 = vmul.f32 %v4789, %v4811
        %v4814 = vmul.f32 %v4794, %v4811
        %v4815 = vmul.f32 %v4797, %v4811
        %v4816 = vadd.f32 %v4430, %v4812
        %v4817 = vadd.f32 %v4431, %v4813
        %v4818 = vadd.f32 %v4432, %v4814
        %v4819 = vadd.f32 %v4433, %v4815
        %v4820 = vadd.f32 %v4816, %v614
        %v4821 = vadd.f32 %v4817, %v616
        %v4822 = vadd.f32 %v4818, %v618
        %v4823 = vadd.f32 %v4819, %v620
        %v4824 = vadd.f32 %v4820, %v4821
        %v4825 = vadd.f32 %v4824, %v4822
        %v4826 = vadd.f32 %v4825, %v4823
        %v4827 = vrot.slane %v4826, 4
        %v4828 = vadd.f32 %v4826, %v4827
        %v4829 = vrot.slane %v4828, 2
        %v4830 = vadd.f32 %v4828, %v4829
        %v4831 = vrot.slane %v4830, 1
        %v4832 = vadd.f32 %v4830, %v4831
        %v4833 = vmul.f32 %v4832, %v2860
        %v4834 = vsub.f32 %v4820, %v4833
        %v4835 = vsub.f32 %v4821, %v4833
        %v4836 = vsub.f32 %v4822, %v4833
        %v4837 = vsub.f32 %v4823, %v4833
        %v4838 = vmul.f32 %v4834, %v4834
        %v4839 = vmul.f32 %v4835, %v4835
        %v4840 = vmul.f32 %v4836, %v4836
        %v4841 = vmul.f32 %v4837, %v4837
        %v4842 = vadd.f32 %v4838, %v4839
        %v4843 = vadd.f32 %v4842, %v4840
        %v4844 = vadd.f32 %v4843, %v4841
        %v4845 = vrot.slane %v4844, 4
        %v4846 = vadd.f32 %v4844, %v4845
        %v4847 = vrot.slane %v4846, 2
        %v4848 = vadd.f32 %v4846, %v4847
        %v4849 = vrot.slane %v4848, 1
        %v4850 = vadd.f32 %v4848, %v4849
        %v4851 = vmul.f32 %v4850, %v2860
        %v4852 = vadd.f32 %v4851, 1e-05
        %v4853 = vrsqrt.pop %v4852
        %v4854 = vmul.f32 %v4834, %v4853
        %v4855 = vmul.f32 %v4835, %v4853
        %v4856 = vmul.f32 %v4836, %v4853
        %v4857 = vmul.f32 %v4837, %v4853
        %v4858 = vmul.f32 %v4854, %v2889
        %v4859 = vmul.f32 %v4855, %v2894
        %v4860 = vmul.f32 %v4856, %v2899
        %v4861 = vmul.f32 %v4857, %v2904
        %v4862 = vadd.f32 %v4858, %v2913
        %v4863 = vadd.f32 %v4859, %v2918
        %v4864 = vadd.f32 %v4860, %v2923
        %v4865 = vadd.f32 %v4861, %v2928
        %4866 = vmatprep.subr.mxu0 0.0
        %4867 = vmatpush1.msra.mxu0 %v4862
        %4868 = vmatprep.subr.mxu0 0.0
        %4869 = vmatpush1.msra.mxu0 %v4863
        %4870 = vmatprep.subr.mxu0 0.0
        %4871 = vmatpush1.msra.mxu0 %v4864
        %4872 = vmatprep.subr.mxu0 0.0
        %4873 = vmatpush1.msra.mxu0 %v4865
        %4874 = vmatprep.subr.mxu0 0.0
        %4875 = vmatpush1.msra.mxu0 0.0
        %4876 = vmatprep.subr.mxu0 0.0
        %4877 = vmatpush1.msra.mxu0 0.0
        %4878 = vmatprep.subr.mxu0 0.0
        %4879 = vmatpush1.msra.mxu0 0.0
        %4880 = vmatprep.subr.mxu0 0.0
        %4881 = vmatpush1.msra.mxu0 0.0
        %4882 = vmatprep.subr.mxu0 0.0
        %4883 = vmatpush1.msra.mxu0 0.0
        %4884 = vmatprep.subr.mxu0 0.0
        %4885 = vmatpush1.msra.mxu0 0.0
        %4886 = vmatprep.subr.mxu0 0.0
        %4887 = vmatpush1.msra.mxu0 0.0
        %4888 = vmatprep.subr.mxu0 0.0
        %4889 = vmatpush1.msra.mxu0 0.0
        %4890 = vmatprep.subr.mxu0 0.0
        %4891 = vmatpush1.msra.mxu0 0.0
        %4892 = vmatprep.subr.mxu0 0.0
        %4893 = vmatpush1.msra.mxu0 0.0
        %4894 = vmatprep.subr.mxu0 0.0
        %4895 = vmatpush1.msra.mxu0 0.0
        %4896 = vmatprep.subr.mxu0 0.0
        %4897 = vmatpush1.msra.mxu0 0.0
        %4898 = vmatprep.subr.mxu0 0.0
        %4899 = vmatpush1.msra.mxu0 0.0
        %4900 = vmatprep.subr.mxu0 0.0
        %4901 = vmatpush1.msra.mxu0 0.0
        %4902 = vmatprep.subr.mxu0 0.0
        %4903 = vmatpush1.msra.mxu0 0.0
        %4904 = vmatprep.subr.mxu0 0.0
        %4905 = vmatpush1.msra.mxu0 0.0
        %4906 = vmatprep.subr.mxu0 0.0
        %4907 = vmatpush1.msra.mxu0 0.0
        %4908 = vmatprep.subr.mxu0 0.0
        %4909 = vmatpush1.msra.mxu0 0.0
        %4910 = vmatprep.subr.mxu0 0.0
        %4911 = vmatpush1.msra.mxu0 0.0
        %4912 = vmatprep.subr.mxu0 0.0
        %4913 = vmatpush1.msra.mxu0 0.0
        %4914 = vmatprep.subr.mxu0 0.0
        %4915 = vmatpush1.msra.mxu0 0.0
        %4916 = vmatprep.subr.mxu0 0.0
        %4917 = vmatpush1.msra.mxu0 0.0
        %4918 = vmatprep.subr.mxu0 0.0
        %4919 = vmatpush1.msra.mxu0 0.0
        %4920 = vmatprep.subr.mxu0 0.0
        %4921 = vmatpush1.msra.mxu0 0.0
        %4922 = vmatprep.subr.mxu0 0.0
        %4923 = vmatpush1.msra.mxu0 0.0
        %4924 = vmatprep.subr.mxu0 0.0
        %4925 = vmatpush1.msra.mxu0 0.0
        %4926 = vmatprep.subr.mxu0 0.0
        %4927 = vmatpush1.msra.mxu0 0.0
        %4928 = vmatprep.subr.mxu0 0.0
        %4929 = vmatpush1.msra.mxu0 0.0
        %4930 = vmatprep.mubr.f32.mxu0 0.0
        %4931 = vmatmul.mubr.f32.gmra.mrb[0].mxu0 %v2976
        %v4932 = vpop.f32.mrb[0].mxu0
        %v4933 = vadd.f32 %v2937, %v4932
        %v4934 = vpop.f32.mrb[0].mxu0
        %4935 = vmatprep.mubr.f32.mxu0 0.0
        %4936 = vmatmul.mubr.f32.gmra.mrb[0].mxu0 %v2979
        %v4937 = vpop.f32.mrb[0].mxu0
        %v4938 = vadd.f32 %v2942, %v4937
        %v4939 = vpop.f32.mrb[0].mxu0
        %4940 = vmatprep.mubr.f32.mxu0 0.0
        %4941 = vmatmul.mubr.f32.gmra.mrb[0].mxu0 %v2982
        %v4942 = vpop.f32.mrb[0].mxu0
        %v4943 = vadd.f32 %v2947, %v4942
        %v4944 = vpop.f32.mrb[0].mxu0
        %4945 = vmatprep.mubr.f32.mxu0 0.0
        %4946 = vmatmul.mubr.f32.gmra.mrb[0].mxu0 %v2985
        %v4947 = vpop.f32.mrb[0].mxu0
        %v4948 = vadd.f32 %v2952, %v4947
        %v4949 = vpop.f32.mrb[0].mxu0
        %4950 = vmatprep.mubr.f32.mxu0 0.0
        %4951 = vmatmul.mubr.f32.gmra.mrb[0].mxu0 %v2988
        %v4952 = vpop.f32.mrb[0].mxu0
        %v4953 = vadd.f32 %v2957, %v4952
        %v4954 = vpop.f32.mrb[0].mxu0
        %4955 = vmatprep.mubr.f32.mxu0 0.0
        %4956 = vmatmul.mubr.f32.gmra.mrb[0].mxu0 %v2991
        %v4957 = vpop.f32.mrb[0].mxu0
        %v4958 = vadd.f32 %v2962, %v4957
        %v4959 = vpop.f32.mrb[0].mxu0
        %4960 = vmatprep.mubr.f32.mxu0 0.0
        %4961 = vmatmul.mubr.f32.gmra.mrb[0].mxu0 %v2994
        %v4962 = vpop.f32.mrb[0].mxu0
        %v4963 = vadd.f32 %v2967, %v4962
        %v4964 = vpop.f32.mrb[0].mxu0
        %4965 = vmatprep.mubr.f32.mxu0 0.0
        %4966 = vmatmul.mubr.f32.gmra.mrb[0].mxu0 %v2997
        %v4967 = vpop.f32.mrb[0].mxu0
        %v4968 = vadd.f32 %v2972, %v4967
        %v4969 = vpop.f32.mrb[0].mxu0
        %4970 = vdwg.mxu0
        %v4971 = vmax.f32 %v4933, 0.0
        %v4972 = vmax.f32 %v4938, 0.0
        %v4973 = vmax.f32 %v4943, 0.0
        %v4974 = vmax.f32 %v4948, 0.0
        %v4975 = vmax.f32 %v4953, 0.0
        %v4976 = vmax.f32 %v4958, 0.0
        %v4977 = vmax.f32 %v4963, 0.0
        %v4978 = vmax.f32 %v4968, 0.0
        %4979 = vmatprep.subr.mxu0 0.0
        %4980 = vmatpush1.msra.mxu0 %v4971
        %4981 = vmatprep.subr.mxu0 0.0
        %4982 = vmatpush1.msra.mxu0 %v4972
        %4983 = vmatprep.subr.mxu0 0.0
        %4984 = vmatpush1.msra.mxu0 %v4973
        %4985 = vmatprep.subr.mxu0 0.0
        %4986 = vmatpush1.msra.mxu0 %v4974
        %4987 = vmatprep.subr.mxu0 0.0
        %4988 = vmatpush1.msra.mxu0 %v4975
        %4989 = vmatprep.subr.mxu0 0.0
        %4990 = vmatpush1.msra.mxu0 %v4976
        %4991 = vmatprep.subr.mxu0 0.0
        %4992 = vmatpush1.msra.mxu0 %v4977
        %4993 = vmatprep.subr.mxu0 0.0
        %4994 = vmatpush1.msra.mxu0 %v4978
        %4995 = vmatprep.subr.mxu0 0.0
        %4996 = vmatpush1.msra.mxu0 0.0
        %4997 = vmatprep.subr.mxu0 0.0
        %4998 = vmatpush1.msra.mxu0 0.0
        %4999 = vmatprep.subr.mxu0 0.0
        %5000 = vmatpush1.msra.mxu0 0.0
        %5001 = vmatprep.subr.mxu0 0.0
        %5002 = vmatpush1.msra.mxu0 0.0
        %5003 = vmatprep.subr.mxu0 0.0
        %5004 = vmatpush1.msra.mxu0 0.0
        %5005 = vmatprep.subr.mxu0 0.0
        %5006 = vmatpush1.msra.mxu0 0.0
        %5007 = vmatprep.subr.mxu0 0.0
        %5008 = vmatpush1.msra.mxu0 0.0
        %5009 = vmatprep.subr.mxu0 0.0
        %5010 = vmatpush1.msra.mxu0 0.0
        %5011 = vmatprep.subr.mxu0 0.0
        %5012 = vmatpush1.msra.mxu0 0.0
        %5013 = vmatprep.subr.mxu0 0.0
        %5014 = vmatpush1.msra.mxu0 0.0
        %5015 = vmatprep.subr.mxu0 0.0
        %5016 = vmatpush1.msra.mxu0 0.0
        %5017 = vmatprep.subr.mxu0 0.0
        %5018 = vmatpush1.msra.mxu0 0.0
        %5019 = vmatprep.subr.mxu0 0.0
        %5020 = vmatpush1.msra.mxu0 0.0
        %5021 = vmatprep.subr.mxu0 0.0
        %5022 = vmatpush1.msra.mxu0 0.0
        %5023 = vmatprep.subr.mxu0 0.0
        %5024 = vmatpush1.msra.mxu0 0.0
        %5025 = vmatprep.subr.mxu0 0.0
        %5026 = vmatpush1.msra.mxu0 0.0
        %5027 = vmatprep.subr.mxu0 0.0
        %5028 = vmatpush1.msra.mxu0 0.0
        %5029 = vmatprep.subr.mxu0 0.0
        %5030 = vmatpush1.msra.mxu0 0.0
        %5031 = vmatprep.subr.mxu0 0.0
        %5032 = vmatpush1.msra.mxu0 0.0
        %5033 = vmatprep.subr.mxu0 0.0
        %5034 = vmatpush1.msra.mxu0 0.0
        %5035 = vmatprep.subr.mxu0 0.0
        %5036 = vmatpush1.msra.mxu0 0.0
        %5037 = vmatprep.subr.mxu0 0.0
        %5038 = vmatpush1.msra.mxu0 0.0
        %5039 = vmatprep.subr.mxu0 0.0
        %5040 = vmatpush1.msra.mxu0 0.0
        %5041 = vmatprep.subr.mxu0 0.0
        %5042 = vmatpush1.msra.mxu0 0.0
        %5043 = vmatprep.mubr.f32.mxu0 0.0
        %5044 = vmatmul.mubr.f32.gmra.mrb[0].mxu0 %v3134
        %v5045 = vpop.f32.mrb[0].mxu0
        %v5046 = vadd.f32 %v3115, %v5045
        %v5047 = vpop.f32.mrb[0].mxu0
        %5048 = vmatprep.mubr.f32.mxu0 0.0
        %5049 = vmatmul.mubr.f32.gmra.mrb[0].mxu0 %v3137
        %v5050 = vpop.f32.mrb[0].mxu0
        %v5051 = vadd.f32 %v3120, %v5050
        %v5052 = vpop.f32.mrb[0].mxu0
        %5053 = vmatprep.mubr.f32.mxu0 0.0
        %5054 = vmatmul.mubr.f32.gmra.mrb[0].mxu0 %v3140
        %v5055 = vpop.f32.mrb[0].mxu0
        %v5056 = vadd.f32 %v3125, %v5055
        %v5057 = vpop.f32.mrb[0].mxu0
        %5058 = vmatprep.mubr.f32.mxu0 0.0
        %5059 = vmatmul.mubr.f32.gmra.mrb[0].mxu0 %v3143
        %v5060 = vpop.f32.mrb[0].mxu0
        %v5061 = vadd.f32 %v3130, %v5060
        %v5062 = vpop.f32.mrb[0].mxu0
        %5063 = vdwg.mxu0
        %v5064 = vadd.f32 %v5046, %v4820
        %v5065 = vadd.f32 %v5051, %v4821
        %v5066 = vadd.f32 %v5056, %v4822
        %v5067 = vadd.f32 %v5061, %v4823
        %v5068 = vadd.f32 %v5064, %v5065
        %v5069 = vadd.f32 %v5068, %v5066
        %v5070 = vadd.f32 %v5069, %v5067
        %v5071 = vrot.slane %v5070, 4
        %v5072 = vadd.f32 %v5070, %v5071
        %v5073 = vrot.slane %v5072, 2
        %v5074 = vadd.f32 %v5072, %v5073
        %v5075 = vrot.slane %v5074, 1
        %v5076 = vadd.f32 %v5074, %v5075
        %v5077 = vmul.f32 %v5076, %v2860
        %v5078 = vsub.f32 %v5064, %v5077
        %v5079 = vsub.f32 %v5065, %v5077
        %v5080 = vsub.f32 %v5066, %v5077
        %v5081 = vsub.f32 %v5067, %v5077
        %v5082 = vmul.f32 %v5078, %v5078
        %v5083 = vmul.f32 %v5079, %v5079
        %v5084 = vmul.f32 %v5080, %v5080
        %v5085 = vmul.f32 %v5081, %v5081
        %v5086 = vadd.f32 %v5082, %v5083
        %v5087 = vadd.f32 %v5086, %v5084
        %v5088 = vadd.f32 %v5087, %v5085
        %v5089 = vrot.slane %v5088, 4
        %v5090 = vadd.f32 %v5088, %v5089
        %v5091 = vrot.slane %v5090, 2
        %v5092 = vadd.f32 %v5090, %v5091
        %v5093 = vrot.slane %v5092, 1
        %v5094 = vadd.f32 %v5092, %v5093
        %v5095 = vmul.f32 %v5094, %v2860
        %v5096 = vadd.f32 %v5095, 1e-05
        %v5097 = vrsqrt.pop %v5096
        %v5098 = vmul.f32 %v5078, %v5097
        %v5099 = vmul.f32 %v5079, %v5097
        %v5100 = vmul.f32 %v5080, %v5097
        %v5101 = vmul.f32 %v5081, %v5097
        %v5102 = vmul.f32 %v5098, %v2889
        %v5103 = vmul.f32 %v5099, %v2894
        %v5104 = vmul.f32 %v5100, %v2899
        %v5105 = vmul.f32 %v5101, %v2904
        %v5106 = vadd.f32 %v5102, %v2913
        %v5107 = vadd.f32 %v5103, %v2918
        %v5108 = vadd.f32 %v5104, %v2923
        %v5109 = vadd.f32 %v5105, %v2928
        %s5110 = smul.addr %s593, 8
        %s5111 = scalar_lea.vmem %s513, %s5110
        %5112 = vst [vmem:[%s5111] sm:$0xff] %v3272
        %5113 = vst [vmem:[%s5111 + $0x8] sm:$0xff] %v5106
        %5114 = vst [vmem:[%s5111 + $0x10] sm:$0xff] %v3273
        %5115 = vst [vmem:[%s5111 + $0x18] sm:$0xff] %v5107
        %5116 = vst [vmem:[%s5111 + $0x20] sm:$0xff] %v3274
        %5117 = vst [vmem:[%s5111 + $0x28] sm:$0xff] %v5108
        %5118 = vst [vmem:[%s5111 + $0x30] sm:$0xff] %v3275
        %5119 = vst [vmem:[%s5111 + $0x38] sm:$0xff] %v5109
      $region65: #{self_cross_attention_forward.1} parent=59 // loop_footer
        %s592 = sadd.s32 1, %s588
      $region66: #{self_cross_attention_forward.1} parent=59 // loop_footer_branch
        %587 = sbr.rel target = $region62
      $region67: #{self_cross_attention_forward.1} parent=59 // loop_exit
        _
      %s5120 = smul.u32 4, %s37
      %p5121 = scmp.lt.s32.totalorder %s38, 8
      %s5122 = scalar_select %p5121, %s38, 8
      %p5123 = scmp.lt.s32.totalorder %s5120, 3
      %s5124 = scalar_select %p5123, %s5120, 3
      %s5125 = smul.addr %s5124, 8
      %s5126 = smul.addr %s5122, 32
      %s5127 = sadd.s32 %s5125, %s5126
      %s5128 = smul.addr %s5127, 8
      %s5129 = scalar_lea.vmem %s12, %s5128
      // Predicated region
      $region68: #{self_cross_attention_forward.1} parent=59 // pred_check
        %p5130 = pneg %p302
      $region69: #{self_cross_attention_forward.1} parent=59 // pred_check_branch
        %5132 = sbr.rel (%p5130) target = $region71
      $region70: #{self_cross_attention_forward.1} parent=59 // pred_region
        %s5133 = smul.u32 4, %s37
      $region71: #{self_cross_attention_forward.1} parent=59 // pred_fallthru
        _
    $region60: #{self_cross_attention_forward.1} parent=5 // pred_fallthru
      _
    %p5134 = scmp.le.s32.totalorder 2, %s28
    // Predicated region
    $region72: #{self_cross_attention_forward.1} parent=5 // pred_check
      %p5135 = pneg %p5134
    $region73: #{self_cross_attention_forward.1} parent=5 // pred_check_branch
      %5137 = sbr.rel (%p5135) target = $region75
    $region74: #{self_cross_attention_forward.1} parent=5 // pred_region
      %s5138 = ssub.s32 %s28, 2
      // Predicated region
      $region76: #{self_cross_attention_forward.1} parent=74 // pred_check
        %p5139 = pneg %p308
      $region77: #{self_cross_attention_forward.1} parent=74 // pred_check_branch
        %5141 = sbr.rel (%p5139) target = $region79
      $region78: #{self_cross_attention_forward.1} parent=74 // pred_region
        %s5142 = smul.u32 4, %s39
        %p5143 = scmp.lt.s32.totalorder %s40, 8
        %s5144 = scalar_select %p5143, %s40, 8
        %p5145 = scmp.lt.s32.totalorder %s5142, 3
        %s5146 = scalar_select %p5145, %s5142, 3
        %s5147 = smul.addr %s5146, 8
        %s5148 = smul.addr %s5144, 32
        %s5149 = sadd.s32 %s5147, %s5148
        %s5150 = smul.addr %s5149, 8
        %s5151 = scalar_lea.vmem %s12, %s5150
      $region79: #{self_cross_attention_forward.1} parent=74 // pred_fallthru
        _
    $region75: #{self_cross_attention_forward.1} parent=5 // pred_fallthru
      _
  $region6: #{self_cross_attention_forward.1} parent=0 // loop_footer
    %s32 = sadd.s32 1, %s28
  $region7: #{self_cross_attention_forward.1} parent=0 // loop_footer_branch
    %27 = sbr.rel target = $region3
  $region8: #{self_cross_attention_forward.1} parent=0 // loop_exit
    _

</llo_original>
